<compile_context>
chip_gen: v7x
topology: tpu7x:2x2x1
jax: 0.10.0
libtpu: 0.0.40
codegen_flags: <defaults>
</compile_context>

<pallas_src>
import functools

import jax
import jax.numpy as jnp
from jax.experimental import pallas as pl
from jax.experimental.pallas import tpu as pltpu

KH = 5          # kernel height
KW = 5          # kernel width
PAD = 2
COUT = 64       # Conv2d out_channels (fixed by the module)


def _largest_divisor(n, cap, multiple_of=1):
    """Largest divisor of n that is <= cap and a multiple of `multiple_of`.
    Falls back to n (full extent is always a legal block)."""
    cap = max(1, min(n, cap))
    for d in range(cap, 0, -1):
        if n % d == 0 and d % multiple_of == 0:
            return d
    return n


# --------------------------------------------------------------------------
# Kernel 1: fused conv (5 shifted matmuls) + bias + per-tile BN partial stats
# --------------------------------------------------------------------------
def _conv_bn_stats_kernel(x_ref, w_ref, b_ref, out_ref, sum_ref, sq_ref,
                          *, th, w_out):
    # x_ref  : (Hp*W, KW*C)  width-im2col rows of ONE padded image (resident,
    #                        DMA'd once per image since its block index only
    #                        depends on the image grid axis)
    # w_ref  : (KH, KW*C, 64) reshaped conv weight (resident)
    # b_ref  : (1, 64)        conv bias
    # out_ref: (th*W, 64)     conv output rows for this tile
    # sum_ref/sq_ref: (8, 64) per-tile partial sum / sum-of-squares (row 0 used)
    h = pl.program_id(1)
    rows = th * w_out

    out_ref[...] = jnp.broadcast_to(b_ref[...], (rows, COUT))
    for ky in range(KH):                       # 5 accumulated MXU matmuls
        start = (h * th + ky) * w_out
        if w_out % 8 == 0:
            start = pl.multiple_of(start, 8)
        out_ref[...] += jnp.dot(
            x_ref[pl.ds(start, rows), :], w_ref[ky],
            preferred_element_type=jnp.float32)

    acc = out_ref[...]
    sum_ref[...] = jnp.broadcast_to(
        jnp.sum(acc, axis=0, keepdims=True), (8, COUT))
    sq_ref[...] = jnp.broadcast_to(
        jnp.sum(acc * acc, axis=0, keepdims=True), (8, COUT))


def conv_bn_stats(xcol2, w_k, bias, *, n, h, w_out, th):
    nh = h // th
    rows = th * w_out
    hp = h + 2 * PAD
    m_out = n * h * w_out
    kc = xcol2.shape[1]                        # KW * C

    kernel = functools.partial(_conv_bn_stats_kernel, th=th, w_out=w_out)
    return pl.pallas_call(
        kernel,
        out_shape=(
            jax.ShapeDtypeStruct((m_out, COUT), jnp.float32),       # conv out
            jax.ShapeDtypeStruct((n * nh * 8, COUT), jnp.float32),  # partial sums
            jax.ShapeDtypeStruct((n * nh * 8, COUT), jnp.float32),  # partial sumsq
        ),
        grid=(n, nh),
        in_specs=[
            pl.BlockSpec((hp * w_out, kc), lambda i, j: (i, 0)),
            pl.BlockSpec(w_k.shape, lambda i, j: (0, 0, 0)),
            pl.BlockSpec((1, COUT), lambda i, j: (0, 0)),
        ],
        out_specs=(
            pl.BlockSpec((rows, COUT), lambda i, j: (i * nh + j, 0)),
            pl.BlockSpec((8, COUT), lambda i, j: (i * nh + j, 0)),
            pl.BlockSpec((8, COUT), lambda i, j: (i * nh + j, 0)),
        ),
        compiler_params=pltpu.CompilerParams(
            dimension_semantics=("parallel", "parallel")),
    )(xcol2, w_k, bias)


# --------------------------------------------------------------------------
# Kernel 2: fused BN affine + ReLU, in place (aliased) over the conv output
# --------------------------------------------------------------------------
def _bn_relu_kernel(x_ref, scale_ref, shift_ref, o_ref):
    o_ref[...] = jnp.maximum(x_ref[...] * scale_ref[...] + shift_ref[...], 0.0)


def bn_relu_inplace(x, scale, shift, *, tm):
    m, nc = x.shape
    return pl.pallas_call(
        _bn_relu_kernel,
        out_shape=jax.ShapeDtypeStruct((m, nc), jnp.float32),
        grid=(m // tm,),
        in_specs=[
            pl.BlockSpec((tm, nc), lambda i: (i, 0)),
            pl.BlockSpec((1, nc), lambda i: (0, 0)),
            pl.BlockSpec((1, nc), lambda i: (0, 0)),
        ],
        out_specs=pl.BlockSpec((tm, nc), lambda i: (i, 0)),
        input_output_aliases={0: 0},           # normalize conv_out in place
        compiler_params=pltpu.CompilerParams(
            dimension_semantics=("parallel",)),
    )(x, scale, shift)


# --------------------------------------------------------------------------
# Parameter init matching the PyTorch module
# --------------------------------------------------------------------------
def init_params(key, in_channels, out_channels=COUT, k=KH):
    kw_key, kb_key = jax.random.split(key)
    # kaiming_normal_(mode='fan_out', nonlinearity='relu')
    fan_out = out_channels * k * k
    std = (2.0 / fan_out) ** 0.5
    w = std * jax.random.normal(kw_key, (out_channels, in_channels, k, k),
                                jnp.float32)
    # PyTorch Conv2d default bias init: U(-1/sqrt(fan_in), 1/sqrt(fan_in))
    fan_in = in_channels * k * k
    bound = 1.0 / (fan_in ** 0.5)
    b = jax.random.uniform(kb_key, (out_channels,), jnp.float32, -bound, bound)
    gamma = jnp.ones((out_channels,), jnp.float32)   # BatchNorm2d defaults
    beta = jnp.zeros((out_channels,), jnp.float32)
    return w, b, gamma, beta


# --------------------------------------------------------------------------
# Forward pass
# --------------------------------------------------------------------------
@jax.jit
def layer0_forward(x_nchw, w, b, gamma, beta):
    N, C, H, W = x_nchw.shape
    Cout = w.shape[0]
    eps = 1e-5
    assert W % 8 == 0, "tiling assumes W is a multiple of 8"

    x_nhwc = jnp.transpose(x_nchw, (0, 2, 3, 1))               # NCHW -> NHWC
    Hp = H + 2 * PAD
    xp = jnp.pad(x_nhwc, ((0, 0), (PAD, PAD), (PAD, PAD), (0, 0)))
    # Width-only im2col (5x on the small C-channel input, NOT 25x):
    # xcol2[n*Hp*W + y*W + x, kx*C + c] = xp[n, y, x + kx, c]
    cols = [xp[:, :, kx:kx + W, :] for kx in range(KW)]
    xcol2 = jnp.stack(cols, axis=3).reshape(N * Hp * W, KW * C)
    # weight (Cout, C, KH, KW) -> (KH, KW, C, Cout) -> (KH, KW*C, Cout)
    w_k = jnp.transpose(w, (2, 3, 1, 0)).reshape(KH, KW * C, Cout)

    th = _largest_divisor(H, max(1, 2048 // W))                # output rows/tile
    nh = H // th

    conv_out, sums, sqs = conv_bn_stats(
        xcol2, w_k, b.reshape(1, Cout), n=N, h=H, w_out=W, th=th)

    # Tiny (N*nh, 64) reductions of the fused per-tile partial stats.
    s = jnp.sum(sums.reshape(N * nh, 8, Cout)[:, 0, :], axis=0)
    sq = jnp.sum(sqs.reshape(N * nh, 8, Cout)[:, 0, :], axis=0)
    m = jnp.float32(N * H * W)
    mean = s / m
    var = jnp.maximum(sq / m - mean * mean, 0.0)               # clamp (numerics)
    inv_std = jax.lax.rsqrt(var + eps)
    scale = (gamma * inv_std).reshape(1, Cout)
    shift = (beta - mean * gamma * inv_std).reshape(1, Cout)

    tm = _largest_divisor(N * H * W, 1024, multiple_of=8)
    out2d = bn_relu_inplace(conv_out, scale, shift, tm=tm)     # in-place pass

    out_nhwc = out2d.reshape(N, H, W, Cout)
    return jnp.transpose(out_nhwc, (0, 3, 1, 2))               # NHWC -> NCHW


# --------------------------------------------------------------------------
# Pure-JAX reference (for a self-check)
# --------------------------------------------------------------------------
def _reference(x, w, b, gamma, beta, eps=1e-5):
    conv = jax.lax.conv_general_dilated(
        x, w, window_strides=(1, 1), padding=((PAD, PAD), (PAD, PAD)),
        dimension_numbers=("NCHW", "OIHW", "NCHW"),
        precision=jax.lax.Precision.HIGHEST)
    conv = conv + b.reshape(1, -1, 1, 1)
    mean = conv.mean(axis=(0, 2, 3), keepdims=True)
    var = ((conv - mean) ** 2).mean(axis=(0, 2, 3), keepdims=True)
    xhat = (conv - mean) * jax.lax.rsqrt(var + eps)
    out = gamma.reshape(1, -1, 1, 1) * xhat + beta.reshape(1, -1, 1, 1)
    return jnp.maximum(out, 0.0)


if __name__ == "__main__":
    key = jax.random.PRNGKey(0)
    k_x, k_p = jax.random.split(key)

    N, C, H, W = 2, 4, 16, 16
    x = jax.random.normal(k_x, (N, C, H, W), jnp.float32)
    w, b, gamma, beta = init_params(k_p, in_channels=C)

    out = layer0_forward(x, w, b, gamma, beta)
    out = jax.block_until_ready(out)
    assert out.shape == (N, COUT, H, W), out.shape

    ref = jax.block_until_ready(_reference(x, w, b, gamma, beta))
    max_err = float(jnp.max(jnp.abs(out - ref)))
    assert max_err < 5e-2, f"max abs error vs reference: {max_err}"

    print("KERNEL_OK")
</pallas_src>

<mosaic_0001>
module attributes {stable_mosaic.version = 11 : i64} {
  func.func @_conv_bn_stats_kernel(%arg0: i32, %arg1: i32, %arg2: memref<320x20xf32, #tpu.memory_space<vmem>>, %arg3: memref<5x20x64xf32, #tpu.memory_space<vmem>>, %arg4: memref<1x64xf32, #tpu.memory_space<vmem>>, %arg5: memref<256x64xf32, #tpu.memory_space<vmem>>, %arg6: memref<8x64xf32, #tpu.memory_space<vmem>>, %arg7: memref<8x64xf32, #tpu.memory_space<vmem>>) attributes {dimension_semantics = [#tpu.dimension_semantics<parallel>, #tpu.dimension_semantics<parallel>], iteration_bounds = array<i64: 2, 1>, scalar_prefetch = 0 : i64, scratch_operands = 0 : i64, tpu.core_type = #tpu.core_type<tc>, window_params = [{transform_indices = @transform_0, window_bounds = array<i64: 320, 20>}, {pipeline_mode = #tpu.pipeline_mode<synchronous>, transform_indices = @transform_1, window_bounds = array<i64: 5, 20, 64>}, {pipeline_mode = #tpu.pipeline_mode<synchronous>, transform_indices = @transform_2, window_bounds = array<i64: 1, 64>}, {transform_indices = @transform_3, window_bounds = array<i64: 256, 64>}, {transform_indices = @transform_4, window_bounds = array<i64: 8, 64>}, {transform_indices = @transform_5, window_bounds = array<i64: 8, 64>}]} {
    %c0 = arith.constant 0 : index
    %c0_0 = arith.constant 0 : index
    %0 = vector.load %arg4[%c0, %c0_0] : memref<1x64xf32, #tpu.memory_space<vmem>>, vector<1x64xf32>
    %1 = vector.shape_cast %0 : vector<1x64xf32> to vector<1x64xf32>
    %2 = vector.broadcast %1 : vector<1x64xf32> to vector<256x64xf32>
    %c0_1 = arith.constant 0 : index
    %c0_2 = arith.constant 0 : index
    %3 = vector.load %arg5[%c0_1, %c0_2] : memref<256x64xf32, #tpu.memory_space<vmem>>, vector<256x64xf32>
    tpu.vector_store %arg5[%c0_1, %c0_2], %2 {strides = array<i32>} : memref<256x64xf32, #tpu.memory_space<vmem>>, vector<256x64xf32>,
    %c16_i32 = arith.constant 16 : i32
    %4 = arith.muli %arg1, %c16_i32 : i32
    %c0_i32 = arith.constant 0 : i32
    %5 = arith.addi %4, %c0_i32 : i32
    %c16_i32_3 = arith.constant 16 : i32
    %6 = arith.muli %5, %c16_i32_3 : i32
    %7 = tpu.assume_multiple %6, 8 : i32
    %c0_4 = arith.constant 0 : index
    %c0_5 = arith.constant 0 : index
    %8 = vector.load %arg5[%c0_4, %c0_5] : memref<256x64xf32, #tpu.memory_space<vmem>>, vector<256x64xf32>
    %9 = arith.index_cast %7 : i32 to index
    %c0_6 = arith.constant 0 : index
    %10 = vector.load %arg2[%9, %c0_6] : memref<320x20xf32, #tpu.memory_space<vmem>>, vector<256x20xf32>
    %c0_7 = arith.constant 0 : index
    %c0_8 = arith.constant 0 : index
    %c0_9 = arith.constant 0 : index
    %11 = vector.load %arg3[%c0_7, %c0_8, %c0_9] : memref<5x20x64xf32, #tpu.memory_space<vmem>>, vector<1x20x64xf32>
    %12 = vector.shape_cast %11 : vector<1x20x64xf32> to vector<20x64xf32>
    %cst = arith.constant dense<0.000000e+00> : vector<256x64xf32>
    %13 = tpu.matmul %10, %12, %cst {dimension_numbers = #tpu.dot_dimension_numbers<[1], [0], [0], [1], [0, 0, 1, 1], [], []>} : vector<256x20xf32>, vector<20x64xf32>, vector<256x64xf32> -> vector<256x64xf32>
    %14 = arith.addf %8, %13 : vector<256x64xf32>
    %c0_10 = arith.constant 0 : index
    %c0_11 = arith.constant 0 : index
    %15 = vector.load %arg5[%c0_10, %c0_11] : memref<256x64xf32, #tpu.memory_space<vmem>>, vector<256x64xf32>
    tpu.vector_store %arg5[%c0_10, %c0_11], %14 {strides = array<i32>} : memref<256x64xf32, #tpu.memory_space<vmem>>, vector<256x64xf32>,
    %c16_i32_12 = arith.constant 16 : i32
    %16 = arith.muli %arg1, %c16_i32_12 : i32
    %c1_i32 = arith.constant 1 : i32
    %17 = arith.addi %16, %c1_i32 : i32
    %c16_i32_13 = arith.constant 16 : i32
    %18 = arith.muli %17, %c16_i32_13 : i32
    %19 = tpu.assume_multiple %18, 8 : i32
    %c0_14 = arith.constant 0 : index
    %c0_15 = arith.constant 0 : index
    %20 = vector.load %arg5[%c0_14, %c0_15] : memref<256x64xf32, #tpu.memory_space<vmem>>, vector<256x64xf32>
    %21 = arith.index_cast %19 : i32 to index
    %c0_16 = arith.constant 0 : index
    %22 = vector.load %arg2[%21, %c0_16] : memref<320x20xf32, #tpu.memory_space<vmem>>, vector<256x20xf32>
    %c1 = arith.constant 1 : index
    %c0_17 = arith.constant 0 : index
    %c0_18 = arith.constant 0 : index
    %23 = vector.load %arg3[%c1, %c0_17, %c0_18] : memref<5x20x64xf32, #tpu.memory_space<vmem>>, vector<1x20x64xf32>
    %24 = vector.shape_cast %23 : vector<1x20x64xf32> to vector<20x64xf32>
    %cst_19 = arith.constant dense<0.000000e+00> : vector<256x64xf32>
    %25 = tpu.matmul %22, %24, %cst_19 {dimension_numbers = #tpu.dot_dimension_numbers<[1], [0], [0], [1], [0, 0, 1, 1], [], []>} : vector<256x20xf32>, vector<20x64xf32>, vector<256x64xf32> -> vector<256x64xf32>
    %26 = arith.addf %20, %25 : vector<256x64xf32>
    %c0_20 = arith.constant 0 : index
    %c0_21 = arith.constant 0 : index
    %27 = vector.load %arg5[%c0_20, %c0_21] : memref<256x64xf32, #tpu.memory_space<vmem>>, vector<256x64xf32>
    tpu.vector_store %arg5[%c0_20, %c0_21], %26 {strides = array<i32>} : memref<256x64xf32, #tpu.memory_space<vmem>>, vector<256x64xf32>,
    %c16_i32_22 = arith.constant 16 : i32
    %28 = arith.muli %arg1, %c16_i32_22 : i32
    %c2_i32 = arith.constant 2 : i32
    %29 = arith.addi %28, %c2_i32 : i32
    %c16_i32_23 = arith.constant 16 : i32
    %30 = arith.muli %29, %c16_i32_23 : i32
    %31 = tpu.assume_multiple %30, 8 : i32
    %c0_24 = arith.constant 0 : index
    %c0_25 = arith.constant 0 : index
    %32 = vector.load %arg5[%c0_24, %c0_25] : memref<256x64xf32, #tpu.memory_space<vmem>>, vector<256x64xf32>
    %33 = arith.index_cast %31 : i32 to index
    %c0_26 = arith.constant 0 : index
    %34 = vector.load %arg2[%33, %c0_26] : memref<320x20xf32, #tpu.memory_space<vmem>>, vector<256x20xf32>
    %c2 = arith.constant 2 : index
    %c0_27 = arith.constant 0 : index
    %c0_28 = arith.constant 0 : index
    %35 = vector.load %arg3[%c2, %c0_27, %c0_28] : memref<5x20x64xf32, #tpu.memory_space<vmem>>, vector<1x20x64xf32>
    %36 = vector.shape_cast %35 : vector<1x20x64xf32> to vector<20x64xf32>
    %cst_29 = arith.constant dense<0.000000e+00> : vector<256x64xf32>
    %37 = tpu.matmul %34, %36, %cst_29 {dimension_numbers = #tpu.dot_dimension_numbers<[1], [0], [0], [1], [0, 0, 1, 1], [], []>} : vector<256x20xf32>, vector<20x64xf32>, vector<256x64xf32> -> vector<256x64xf32>
    %38 = arith.addf %32, %37 : vector<256x64xf32>
    %c0_30 = arith.constant 0 : index
    %c0_31 = arith.constant 0 : index
    %39 = vector.load %arg5[%c0_30, %c0_31] : memref<256x64xf32, #tpu.memory_space<vmem>>, vector<256x64xf32>
    tpu.vector_store %arg5[%c0_30, %c0_31], %38 {strides = array<i32>} : memref<256x64xf32, #tpu.memory_space<vmem>>, vector<256x64xf32>,
    %c16_i32_32 = arith.constant 16 : i32
    %40 = arith.muli %arg1, %c16_i32_32 : i32
    %c3_i32 = arith.constant 3 : i32
    %41 = arith.addi %40, %c3_i32 : i32
    %c16_i32_33 = arith.constant 16 : i32
    %42 = arith.muli %41, %c16_i32_33 : i32
    %43 = tpu.assume_multiple %42, 8 : i32
    %c0_34 = arith.constant 0 : index
    %c0_35 = arith.constant 0 : index
    %44 = vector.load %arg5[%c0_34, %c0_35] : memref<256x64xf32, #tpu.memory_space<vmem>>, vector<256x64xf32>
    %45 = arith.index_cast %43 : i32 to index
    %c0_36 = arith.constant 0 : index
    %46 = vector.load %arg2[%45, %c0_36] : memref<320x20xf32, #tpu.memory_space<vmem>>, vector<256x20xf32>
    %c3 = arith.constant 3 : index
    %c0_37 = arith.constant 0 : index
    %c0_38 = arith.constant 0 : index
    %47 = vector.load %arg3[%c3, %c0_37, %c0_38] : memref<5x20x64xf32, #tpu.memory_space<vmem>>, vector<1x20x64xf32>
    %48 = vector.shape_cast %47 : vector<1x20x64xf32> to vector<20x64xf32>
    %cst_39 = arith.constant dense<0.000000e+00> : vector<256x64xf32>
    %49 = tpu.matmul %46, %48, %cst_39 {dimension_numbers = #tpu.dot_dimension_numbers<[1], [0], [0], [1], [0, 0, 1, 1], [], []>} : vector<256x20xf32>, vector<20x64xf32>, vector<256x64xf32> -> vector<256x64xf32>
    %50 = arith.addf %44, %49 : vector<256x64xf32>
    %c0_40 = arith.constant 0 : index
    %c0_41 = arith.constant 0 : index
    %51 = vector.load %arg5[%c0_40, %c0_41] : memref<256x64xf32, #tpu.memory_space<vmem>>, vector<256x64xf32>
    tpu.vector_store %arg5[%c0_40, %c0_41], %50 {strides = array<i32>} : memref<256x64xf32, #tpu.memory_space<vmem>>, vector<256x64xf32>,
    %c16_i32_42 = arith.constant 16 : i32
    %52 = arith.muli %arg1, %c16_i32_42 : i32
    %c4_i32 = arith.constant 4 : i32
    %53 = arith.addi %52, %c4_i32 : i32
    %c16_i32_43 = arith.constant 16 : i32
    %54 = arith.muli %53, %c16_i32_43 : i32
    %55 = tpu.assume_multiple %54, 8 : i32
    %c0_44 = arith.constant 0 : index
    %c0_45 = arith.constant 0 : index
    %56 = vector.load %arg5[%c0_44, %c0_45] : memref<256x64xf32, #tpu.memory_space<vmem>>, vector<256x64xf32>
    %57 = arith.index_cast %55 : i32 to index
    %c0_46 = arith.constant 0 : index
    %58 = vector.load %arg2[%57, %c0_46] : memref<320x20xf32, #tpu.memory_space<vmem>>, vector<256x20xf32>
    %c4 = arith.constant 4 : index
    %c0_47 = arith.constant 0 : index
    %c0_48 = arith.constant 0 : index
    %59 = vector.load %arg3[%c4, %c0_47, %c0_48] : memref<5x20x64xf32, #tpu.memory_space<vmem>>, vector<1x20x64xf32>
    %60 = vector.shape_cast %59 : vector<1x20x64xf32> to vector<20x64xf32>
    %cst_49 = arith.constant dense<0.000000e+00> : vector<256x64xf32>
    %61 = tpu.matmul %58, %60, %cst_49 {dimension_numbers = #tpu.dot_dimension_numbers<[1], [0], [0], [1], [0, 0, 1, 1], [], []>} : vector<256x20xf32>, vector<20x64xf32>, vector<256x64xf32> -> vector<256x64xf32>
    %62 = arith.addf %56, %61 : vector<256x64xf32>
    %c0_50 = arith.constant 0 : index
    %c0_51 = arith.constant 0 : index
    %63 = vector.load %arg5[%c0_50, %c0_51] : memref<256x64xf32, #tpu.memory_space<vmem>>, vector<256x64xf32>
    tpu.vector_store %arg5[%c0_50, %c0_51], %62 {strides = array<i32>} : memref<256x64xf32, #tpu.memory_space<vmem>>, vector<256x64xf32>,
    %c0_52 = arith.constant 0 : index
    %c0_53 = arith.constant 0 : index
    %64 = vector.load %arg5[%c0_52, %c0_53] : memref<256x64xf32, #tpu.memory_space<vmem>>, vector<256x64xf32>
    %cst_54 = arith.constant dense<0.000000e+00> : vector<64xf32>
    %65 = vector.multi_reduction <add>, %64, %cst_54 [0] : vector<256x64xf32> to vector<64xf32>
    %66 = vector.shape_cast %65 : vector<64xf32> to vector<1x64xf32>
    %67 = vector.shape_cast %66 : vector<1x64xf32> to vector<1x64xf32>
    %68 = vector.broadcast %67 : vector<1x64xf32> to vector<8x64xf32>
    %c0_55 = arith.constant 0 : index
    %c0_56 = arith.constant 0 : index
    %69 = vector.load %arg6[%c0_55, %c0_56] : memref<8x64xf32, #tpu.memory_space<vmem>>, vector<8x64xf32>
    tpu.vector_store %arg6[%c0_55, %c0_56], %68 {strides = array<i32>} : memref<8x64xf32, #tpu.memory_space<vmem>>, vector<8x64xf32>,
    %70 = arith.mulf %64, %64 : vector<256x64xf32>
    %cst_57 = arith.constant dense<0.000000e+00> : vector<64xf32>
    %71 = vector.multi_reduction <add>, %70, %cst_57 [0] : vector<256x64xf32> to vector<64xf32>
    %72 = vector.shape_cast %71 : vector<64xf32> to vector<1x64xf32>
    %73 = vector.shape_cast %72 : vector<1x64xf32> to vector<1x64xf32>
    %74 = vector.broadcast %73 : vector<1x64xf32> to vector<8x64xf32>
    %c0_58 = arith.constant 0 : index
    %c0_59 = arith.constant 0 : index
    %75 = vector.load %arg7[%c0_58, %c0_59] : memref<8x64xf32, #tpu.memory_space<vmem>>, vector<8x64xf32>
    tpu.vector_store %arg7[%c0_58, %c0_59], %74 {strides = array<i32>} : memref<8x64xf32, #tpu.memory_space<vmem>>, vector<8x64xf32>,
    return
  }
  func.func @transform_0(%arg0: i32, %arg1: i32) -> (i32, i32) {
    %c0_i32 = arith.constant 0 : i32
    %c0_i32_0 = arith.constant 0 : i32
    return %arg0, %c0_i32 : i32, i32
  }
  func.func @transform_1(%arg0: i32, %arg1: i32) -> (i32, i32, i32) {
    %c0_i32 = arith.constant 0 : i32
    %c0_i32_0 = arith.constant 0 : i32
    %c0_i32_1 = arith.constant 0 : i32
    %c0_i32_2 = arith.constant 0 : i32
    return %c0_i32, %c0_i32_0, %c0_i32_1 : i32, i32, i32
  }
  func.func @transform_2(%arg0: i32, %arg1: i32) -> (i32, i32) {
    %c0_i32 = arith.constant 0 : i32
    %c0_i32_0 = arith.constant 0 : i32
    %c0_i32_1 = arith.constant 0 : i32
    return %c0_i32, %c0_i32_0 : i32, i32
  }
  func.func @transform_3(%arg0: i32, %arg1: i32) -> (i32, i32) {
    %c1_i32 = arith.constant 1 : i32
    %0 = arith.muli %arg0, %c1_i32 : i32
    %1 = arith.addi %0, %arg1 : i32
    %c0_i32 = arith.constant 0 : i32
    %c0_i32_0 = arith.constant 0 : i32
    return %1, %c0_i32 : i32, i32
  }
  func.func @transform_4(%arg0: i32, %arg1: i32) -> (i32, i32) {
    %c1_i32 = arith.constant 1 : i32
    %0 = arith.muli %arg0, %c1_i32 : i32
    %1 = arith.addi %0, %arg1 : i32
    %c0_i32 = arith.constant 0 : i32
    %c0_i32_0 = arith.constant 0 : i32
    return %1, %c0_i32 : i32, i32
  }
  func.func @transform_5(%arg0: i32, %arg1: i32) -> (i32, i32) {
    %c1_i32 = arith.constant 1 : i32
    %0 = arith.muli %arg0, %c1_i32 : i32
    %1 = arith.addi %0, %arg1 : i32
    %c0_i32 = arith.constant 0 : i32
    %c0_i32_0 = arith.constant 0 : i32
    return %1, %c0_i32 : i32, i32
  }
}

module attributes {stable_mosaic.version = 11 : i64} {
  func.func @_bn_relu_kernel(%arg0: i32, %arg1: memref<512x64xf32, #tpu.memory_space<vmem>>, %arg2: memref<1x64xf32, #tpu.memory_space<vmem>>, %arg3: memref<1x64xf32, #tpu.memory_space<vmem>>, %arg4: memref<512x64xf32, #tpu.memory_space<vmem>>) attributes {dimension_semantics = [#tpu.dimension_semantics<parallel>], iteration_bounds = array<i64: 1>, scalar_prefetch = 0 : i64, scratch_operands = 0 : i64, tpu.core_type = #tpu.core_type<tc>, window_params = [{transform_indices = @transform_0, window_bounds = array<i64: 512, 64>}, {pipeline_mode = #tpu.pipeline_mode<synchronous>, transform_indices = @transform_1, window_bounds = array<i64: 1, 64>}, {pipeline_mode = #tpu.pipeline_mode<synchronous>, transform_indices = @transform_2, window_bounds = array<i64: 1, 64>}, {transform_indices = @transform_3, window_bounds = array<i64: 512, 64>}]} {
    %c0 = arith.constant 0 : index
    %c0_0 = arith.constant 0 : index
    %0 = vector.load %arg1[%c0, %c0_0] : memref<512x64xf32, #tpu.memory_space<vmem>>, vector<512x64xf32>
    %c0_1 = arith.constant 0 : index
    %c0_2 = arith.constant 0 : index
    %1 = vector.load %arg2[%c0_1, %c0_2] : memref<1x64xf32, #tpu.memory_space<vmem>>, vector<1x64xf32>
    %2 = vector.broadcast %1 : vector<1x64xf32> to vector<512x64xf32>
    %3 = arith.mulf %0, %2 : vector<512x64xf32>
    %c0_3 = arith.constant 0 : index
    %c0_4 = arith.constant 0 : index
    %4 = vector.load %arg3[%c0_3, %c0_4] : memref<1x64xf32, #tpu.memory_space<vmem>>, vector<1x64xf32>
    %5 = vector.broadcast %4 : vector<1x64xf32> to vector<512x64xf32>
    %6 = arith.addf %3, %5 : vector<512x64xf32>
    %cst = arith.constant 0.000000e+00 : f32
    %7 = vector.broadcast %cst : f32 to vector<512x64xf32>
    %8 = arith.maximumf %6, %7 : vector<512x64xf32>
    %c0_5 = arith.constant 0 : index
    %c0_6 = arith.constant 0 : index
    %9 = vector.load %arg4[%c0_5, %c0_6] : memref<512x64xf32, #tpu.memory_space<vmem>>, vector<512x64xf32>
    tpu.vector_store %arg4[%c0_5, %c0_6], %8 {strides = array<i32>} : memref<512x64xf32, #tpu.memory_space<vmem>>, vector<512x64xf32>,
    return
  }
  func.func @transform_0(%arg0: i32) -> (i32, i32) {
    %c0_i32 = arith.constant 0 : i32
    %c0_i32_0 = arith.constant 0 : i32
    return %arg0, %c0_i32 : i32, i32
  }
  func.func @transform_1(%arg0: i32) -> (i32, i32) {
    %c0_i32 = arith.constant 0 : i32
    %c0_i32_0 = arith.constant 0 : i32
    %c0_i32_1 = arith.constant 0 : i32
    return %c0_i32, %c0_i32_0 : i32, i32
  }
  func.func @transform_2(%arg0: i32) -> (i32, i32) {
    %c0_i32 = arith.constant 0 : i32
    %c0_i32_0 = arith.constant 0 : i32
    %c0_i32_1 = arith.constant 0 : i32
    return %c0_i32, %c0_i32_0 : i32, i32
  }
  func.func @transform_3(%arg0: i32) -> (i32, i32) {
    %c0_i32 = arith.constant 0 : i32
    %c0_i32_0 = arith.constant 0 : i32
    return %arg0, %c0_i32 : i32, i32
  }
}

</mosaic_0001>

<llo_original>
// kernel: layer0_forward.3
$region0: #{layer0_forward.3}
  #allocation0 [shape = 'u32[]', space=smem, size = 0x4, offset = 0x4, fixed_abs, tag = 'smem constant byte address 0x4 - core index']
  #allocation1 [shape = 'u32[144,128]{1,0:T(1,128)}', space=vmem, size = 0x12000, scoped, tag = 'internal scratch']
  %s0 = inlined_call_operand.vmem [shape: f32[512,64], index: 0, kind: input, shape index: {}, may-alias: {0,3}]
  %s1 = inlined_call_operand.vmem [shape: f32[1,64], index: 1, kind: input, shape index: {}]
  %s2 = inlined_call_operand.vmem [shape: f32[1,64], index: 2, kind: input, shape index: {}]
  %s3 = inlined_call_operand.vmem [shape: f32[512,64], index: 3, kind: output, shape index: {}, may-alias: {0,3}]
  %s4 = sld [smem:[#allocation0]]
  $region22: #{layer0_forward.3} parent=0
    _
  %s6 = ssub.s32 1, %s4
  %s7 = scalar_select 0, %s6, %s4
  // Predicated region
  $region2: #{layer0_forward.3} parent=0 // pred_check
    _
  $region3: #{layer0_forward.3} parent=0 // pred_check_branch
    %9 = sbr.rel (0) target = $region5
  $region4: #{layer0_forward.3} parent=0 // pred_region
    _
  $region5: #{layer0_forward.3} parent=0 // pred_fallthru
    _
  // Predicated region
  $region6: #{layer0_forward.3} parent=0 // pred_check
    _
  $region7: #{layer0_forward.3} parent=0 // pred_check_branch
    %11 = sbr.rel (0) target = $region9
  $region8: #{layer0_forward.3} parent=0 // pred_region
    _
  $region9: #{layer0_forward.3} parent=0 // pred_fallthru
    _
  // Predicated region
  $region10: #{layer0_forward.3} parent=0 // pred_check
    _
  $region11: #{layer0_forward.3} parent=0 // pred_check_branch
    %13 = sbr.rel (0) target = $region13
  $region12: #{layer0_forward.3} parent=0 // pred_region
    _
  $region13: #{layer0_forward.3} parent=0 // pred_fallthru
    _
  %v14 = vld [vmem:[%s0] sm:$0xff]
  %v15 = vld [vmem:[%s0 + $0x8] sm:$0xff]
  %v16 = vld [vmem:[%s0 + $0x10] sm:$0xff]
  %v17 = vld [vmem:[%s0 + $0x18] sm:$0xff]
  %v18 = vld [vmem:[%s0 + $0x20] sm:$0xff]
  %v19 = vld [vmem:[%s0 + $0x28] sm:$0xff]
  %v20 = vld [vmem:[%s0 + $0x30] sm:$0xff]
  %v21 = vld [vmem:[%s0 + $0x38] sm:$0xff]
  %v22 = vld [vmem:[%s0 + $0x40] sm:$0xff]
  %v23 = vld [vmem:[%s0 + $0x48] sm:$0xff]
  %v24 = vld [vmem:[%s0 + $0x50] sm:$0xff]
  %v25 = vld [vmem:[%s0 + $0x58] sm:$0xff]
  %v26 = vld [vmem:[%s0 + $0x60] sm:$0xff]
  %v27 = vld [vmem:[%s0 + $0x68] sm:$0xff]
  %v28 = vld [vmem:[%s0 + $0x70] sm:$0xff]
  %v29 = vld [vmem:[%s0 + $0x78] sm:$0xff]
  %v30 = vld [vmem:[%s0 + $0x80] sm:$0xff]
  %v31 = vld [vmem:[%s0 + $0x88] sm:$0xff]
  %v32 = vld [vmem:[%s0 + $0x90] sm:$0xff]
  %v33 = vld [vmem:[%s0 + $0x98] sm:$0xff]
  %v34 = vld [vmem:[%s0 + $0xa0] sm:$0xff]
  %v35 = vld [vmem:[%s0 + $0xa8] sm:$0xff]
  %v36 = vld [vmem:[%s0 + $0xb0] sm:$0xff]
  %v37 = vld [vmem:[%s0 + $0xb8] sm:$0xff]
  %v38 = vld [vmem:[%s0 + $0xc0] sm:$0xff]
  %v39 = vld [vmem:[%s0 + $0xc8] sm:$0xff]
  %v40 = vld [vmem:[%s0 + $0xd0] sm:$0xff]
  %v41 = vld [vmem:[%s0 + $0xd8] sm:$0xff]
  %v42 = vld [vmem:[%s0 + $0xe0] sm:$0xff]
  %v43 = vld [vmem:[%s0 + $0xe8] sm:$0xff]
  %v44 = vld [vmem:[%s0 + $0xf0] sm:$0xff]
  %v45 = vld [vmem:[%s0 + $0xf8] sm:$0xff]
  %v46 = vld [vmem:[%s0 + $0x100] sm:$0xff]
  %v47 = vld [vmem:[%s0 + $0x108] sm:$0xff]
  %v48 = vld [vmem:[%s0 + $0x110] sm:$0xff]
  %v49 = vld [vmem:[%s0 + $0x118] sm:$0xff]
  %v50 = vld [vmem:[%s0 + $0x120] sm:$0xff]
  %v51 = vld [vmem:[%s0 + $0x128] sm:$0xff]
  %v52 = vld [vmem:[%s0 + $0x130] sm:$0xff]
  %v53 = vld [vmem:[%s0 + $0x138] sm:$0xff]
  %v54 = vld [vmem:[%s0 + $0x140] sm:$0xff]
  %v55 = vld [vmem:[%s0 + $0x148] sm:$0xff]
  %v56 = vld [vmem:[%s0 + $0x150] sm:$0xff]
  %v57 = vld [vmem:[%s0 + $0x158] sm:$0xff]
  %v58 = vld [vmem:[%s0 + $0x160] sm:$0xff]
  %v59 = vld [vmem:[%s0 + $0x168] sm:$0xff]
  %v60 = vld [vmem:[%s0 + $0x170] sm:$0xff]
  %v61 = vld [vmem:[%s0 + $0x178] sm:$0xff]
  %v62 = vld [vmem:[%s0 + $0x180] sm:$0xff]
  %v63 = vld [vmem:[%s0 + $0x188] sm:$0xff]
  %v64 = vld [vmem:[%s0 + $0x190] sm:$0xff]
  %v65 = vld [vmem:[%s0 + $0x198] sm:$0xff]
  %v66 = vld [vmem:[%s0 + $0x1a0] sm:$0xff]
  %v67 = vld [vmem:[%s0 + $0x1a8] sm:$0xff]
  %v68 = vld [vmem:[%s0 + $0x1b0] sm:$0xff]
  %v69 = vld [vmem:[%s0 + $0x1b8] sm:$0xff]
  %v70 = vld [vmem:[%s0 + $0x1c0] sm:$0xff]
  %v71 = vld [vmem:[%s0 + $0x1c8] sm:$0xff]
  %v72 = vld [vmem:[%s0 + $0x1d0] sm:$0xff]
  %v73 = vld [vmem:[%s0 + $0x1d8] sm:$0xff]
  %v74 = vld [vmem:[%s0 + $0x1e0] sm:$0xff]
  %v75 = vld [vmem:[%s0 + $0x1e8] sm:$0xff]
  %v76 = vld [vmem:[%s0 + $0x1f0] sm:$0xff]
  %v77 = vld [vmem:[%s0 + $0x1f8] sm:$0xff]
  %v78 = vld [vmem:[%s1] sm:$0x1]
  %v80 = vlaneseq
  %v81 = vshrl.u32 %v80, 7
  %v82 = vsub.s32 0, %v81
  %v83 = vrot.slane %v78, %v82
  %v85 = vmul.f32 %v14, %v83
  %v86 = vmul.f32 %v15, %v83
  %v87 = vmul.f32 %v16, %v83
  %v88 = vmul.f32 %v17, %v83
  %v89 = vmul.f32 %v18, %v83
  %v90 = vmul.f32 %v19, %v83
  %v91 = vmul.f32 %v20, %v83
  %v92 = vmul.f32 %v21, %v83
  %v93 = vmul.f32 %v22, %v83
  %v94 = vmul.f32 %v23, %v83
  %v95 = vmul.f32 %v24, %v83
  %v96 = vmul.f32 %v25, %v83
  %v97 = vmul.f32 %v26, %v83
  %v98 = vmul.f32 %v27, %v83
  %v99 = vmul.f32 %v28, %v83
  %v100 = vmul.f32 %v29, %v83
  %v101 = vmul.f32 %v30, %v83
  %v102 = vmul.f32 %v31, %v83
  %v103 = vmul.f32 %v32, %v83
  %v104 = vmul.f32 %v33, %v83
  %v105 = vmul.f32 %v34, %v83
  %v106 = vmul.f32 %v35, %v83
  %v107 = vmul.f32 %v36, %v83
  %v108 = vmul.f32 %v37, %v83
  %v109 = vmul.f32 %v38, %v83
  %v110 = vmul.f32 %v39, %v83
  %v111 = vmul.f32 %v40, %v83
  %v112 = vmul.f32 %v41, %v83
  %v113 = vmul.f32 %v42, %v83
  %v114 = vmul.f32 %v43, %v83
  %v115 = vmul.f32 %v44, %v83
  %v116 = vmul.f32 %v45, %v83
  %v117 = vmul.f32 %v46, %v83
  %v118 = vmul.f32 %v47, %v83
  %v119 = vmul.f32 %v48, %v83
  %v120 = vmul.f32 %v49, %v83
  %v121 = vmul.f32 %v50, %v83
  %v122 = vmul.f32 %v51, %v83
  %v123 = vmul.f32 %v52, %v83
  %v124 = vmul.f32 %v53, %v83
  %v125 = vmul.f32 %v54, %v83
  %v126 = vmul.f32 %v55, %v83
  %v127 = vmul.f32 %v56, %v83
  %v128 = vmul.f32 %v57, %v83
  %v129 = vmul.f32 %v58, %v83
  %v130 = vmul.f32 %v59, %v83
  %v131 = vmul.f32 %v60, %v83
  %v132 = vmul.f32 %v61, %v83
  %v133 = vmul.f32 %v62, %v83
  %v134 = vmul.f32 %v63, %v83
  %v135 = vmul.f32 %v64, %v83
  %v136 = vmul.f32 %v65, %v83
  %v137 = vmul.f32 %v66, %v83
  %v138 = vmul.f32 %v67, %v83
  %v139 = vmul.f32 %v68, %v83
  %v140 = vmul.f32 %v69, %v83
  %v141 = vmul.f32 %v70, %v83
  %v142 = vmul.f32 %v71, %v83
  %v143 = vmul.f32 %v72, %v83
  %v144 = vmul.f32 %v73, %v83
  %v145 = vmul.f32 %v74, %v83
  %v146 = vmul.f32 %v75, %v83
  %v147 = vmul.f32 %v76, %v83
  %v148 = vmul.f32 %v77, %v83
  %v149 = vld [vmem:[%s2] sm:$0x1]
  %v151 = vlaneseq
  %v152 = vshrl.u32 %v151, 7
  %v153 = vsub.s32 0, %v152
  %v154 = vrot.slane %v149, %v153
  %v156 = vadd.f32 %v85, %v154
  %v157 = vadd.f32 %v86, %v154
  %v158 = vadd.f32 %v87, %v154
  %v159 = vadd.f32 %v88, %v154
  %v160 = vadd.f32 %v89, %v154
  %v161 = vadd.f32 %v90, %v154
  %v162 = vadd.f32 %v91, %v154
  %v163 = vadd.f32 %v92, %v154
  %v164 = vadd.f32 %v93, %v154
  %v165 = vadd.f32 %v94, %v154
  %v166 = vadd.f32 %v95, %v154
  %v167 = vadd.f32 %v96, %v154
  %v168 = vadd.f32 %v97, %v154
  %v169 = vadd.f32 %v98, %v154
  %v170 = vadd.f32 %v99, %v154
  %v171 = vadd.f32 %v100, %v154
  %v172 = vadd.f32 %v101, %v154
  %v173 = vadd.f32 %v102, %v154
  %v174 = vadd.f32 %v103, %v154
  %v175 = vadd.f32 %v104, %v154
  %v176 = vadd.f32 %v105, %v154
  %v177 = vadd.f32 %v106, %v154
  %v178 = vadd.f32 %v107, %v154
  %v179 = vadd.f32 %v108, %v154
  %v180 = vadd.f32 %v109, %v154
  %v181 = vadd.f32 %v110, %v154
  %v182 = vadd.f32 %v111, %v154
  %v183 = vadd.f32 %v112, %v154
  %v184 = vadd.f32 %v113, %v154
  %v185 = vadd.f32 %v114, %v154
  %v186 = vadd.f32 %v115, %v154
  %v187 = vadd.f32 %v116, %v154
  %v188 = vadd.f32 %v117, %v154
  %v189 = vadd.f32 %v118, %v154
  %v190 = vadd.f32 %v119, %v154
  %v191 = vadd.f32 %v120, %v154
  %v192 = vadd.f32 %v121, %v154
  %v193 = vadd.f32 %v122, %v154
  %v194 = vadd.f32 %v123, %v154
  %v195 = vadd.f32 %v124, %v154
  %v196 = vadd.f32 %v125, %v154
  %v197 = vadd.f32 %v126, %v154
  %v198 = vadd.f32 %v127, %v154
  %v199 = vadd.f32 %v128, %v154
  %v200 = vadd.f32 %v129, %v154
  %v201 = vadd.f32 %v130, %v154
  %v202 = vadd.f32 %v131, %v154
  %v203 = vadd.f32 %v132, %v154
  %v204 = vadd.f32 %v133, %v154
  %v205 = vadd.f32 %v134, %v154
  %v206 = vadd.f32 %v135, %v154
  %v207 = vadd.f32 %v136, %v154
  %v208 = vadd.f32 %v137, %v154
  %v209 = vadd.f32 %v138, %v154
  %v210 = vadd.f32 %v139, %v154
  %v211 = vadd.f32 %v140, %v154
  %v212 = vadd.f32 %v141, %v154
  %v213 = vadd.f32 %v142, %v154
  %v214 = vadd.f32 %v143, %v154
  %v215 = vadd.f32 %v144, %v154
  %v216 = vadd.f32 %v145, %v154
  %v217 = vadd.f32 %v146, %v154
  %v218 = vadd.f32 %v147, %v154
  %v219 = vadd.f32 %v148, %v154
  %v220 = vmax.f32 %v156, 0.0
  %v221 = vmax.f32 %v157, 0.0
  %v222 = vmax.f32 %v158, 0.0
  %v223 = vmax.f32 %v159, 0.0
  %v224 = vmax.f32 %v160, 0.0
  %v225 = vmax.f32 %v161, 0.0
  %v226 = vmax.f32 %v162, 0.0
  %v227 = vmax.f32 %v163, 0.0
  %v228 = vmax.f32 %v164, 0.0
  %v229 = vmax.f32 %v165, 0.0
  %v230 = vmax.f32 %v166, 0.0
  %v231 = vmax.f32 %v167, 0.0
  %v232 = vmax.f32 %v168, 0.0
  %v233 = vmax.f32 %v169, 0.0
  %v234 = vmax.f32 %v170, 0.0
  %v235 = vmax.f32 %v171, 0.0
  %v236 = vmax.f32 %v172, 0.0
  %v237 = vmax.f32 %v173, 0.0
  %v238 = vmax.f32 %v174, 0.0
  %v239 = vmax.f32 %v175, 0.0
  %v240 = vmax.f32 %v176, 0.0
  %v241 = vmax.f32 %v177, 0.0
  %v242 = vmax.f32 %v178, 0.0
  %v243 = vmax.f32 %v179, 0.0
  %v244 = vmax.f32 %v180, 0.0
  %v245 = vmax.f32 %v181, 0.0
  %v246 = vmax.f32 %v182, 0.0
  %v247 = vmax.f32 %v183, 0.0
  %v248 = vmax.f32 %v184, 0.0
  %v249 = vmax.f32 %v185, 0.0
  %v250 = vmax.f32 %v186, 0.0
  %v251 = vmax.f32 %v187, 0.0
  %v252 = vmax.f32 %v188, 0.0
  %v253 = vmax.f32 %v189, 0.0
  %v254 = vmax.f32 %v190, 0.0
  %v255 = vmax.f32 %v191, 0.0
  %v256 = vmax.f32 %v192, 0.0
  %v257 = vmax.f32 %v193, 0.0
  %v258 = vmax.f32 %v194, 0.0
  %v259 = vmax.f32 %v195, 0.0
  %v260 = vmax.f32 %v196, 0.0
  %v261 = vmax.f32 %v197, 0.0
  %v262 = vmax.f32 %v198, 0.0
  %v263 = vmax.f32 %v199, 0.0
  %v264 = vmax.f32 %v200, 0.0
  %v265 = vmax.f32 %v201, 0.0
  %v266 = vmax.f32 %v202, 0.0
  %v267 = vmax.f32 %v203, 0.0
  %v268 = vmax.f32 %v204, 0.0
  %v269 = vmax.f32 %v205, 0.0
  %v270 = vmax.f32 %v206, 0.0
  %v271 = vmax.f32 %v207, 0.0
  %v272 = vmax.f32 %v208, 0.0
  %v273 = vmax.f32 %v209, 0.0
  %v274 = vmax.f32 %v210, 0.0
  %v275 = vmax.f32 %v211, 0.0
  %v276 = vmax.f32 %v212, 0.0
  %v277 = vmax.f32 %v213, 0.0
  %v278 = vmax.f32 %v214, 0.0
  %v279 = vmax.f32 %v215, 0.0
  %v280 = vmax.f32 %v216, 0.0
  %v281 = vmax.f32 %v217, 0.0
  %v282 = vmax.f32 %v218, 0.0
  %v283 = vmax.f32 %v219, 0.0
  %vm284 = vcmask 523264
  %285 = vst.msk [vmem:[%s3] sm:$0xff] %vm284, %v220
  %286 = vst.msk [vmem:[%s3 + $0x8] sm:$0xff] %vm284, %v221
  %287 = vst.msk [vmem:[%s3 + $0x10] sm:$0xff] %vm284, %v222
  %288 = vst.msk [vmem:[%s3 + $0x18] sm:$0xff] %vm284, %v223
  %289 = vst.msk [vmem:[%s3 + $0x20] sm:$0xff] %vm284, %v224
  %290 = vst.msk [vmem:[%s3 + $0x28] sm:$0xff] %vm284, %v225
  %291 = vst.msk [vmem:[%s3 + $0x30] sm:$0xff] %vm284, %v226
  %292 = vst.msk [vmem:[%s3 + $0x38] sm:$0xff] %vm284, %v227
  %293 = vst.msk [vmem:[%s3 + $0x40] sm:$0xff] %vm284, %v228
  %294 = vst.msk [vmem:[%s3 + $0x48] sm:$0xff] %vm284, %v229
  %295 = vst.msk [vmem:[%s3 + $0x50] sm:$0xff] %vm284, %v230
  %296 = vst.msk [vmem:[%s3 + $0x58] sm:$0xff] %vm284, %v231
  %297 = vst.msk [vmem:[%s3 + $0x60] sm:$0xff] %vm284, %v232
  %298 = vst.msk [vmem:[%s3 + $0x68] sm:$0xff] %vm284, %v233
  %299 = vst.msk [vmem:[%s3 + $0x70] sm:$0xff] %vm284, %v234
  %300 = vst.msk [vmem:[%s3 + $0x78] sm:$0xff] %vm284, %v235
  %301 = vst.msk [vmem:[%s3 + $0x80] sm:$0xff] %vm284, %v236
  %302 = vst.msk [vmem:[%s3 + $0x88] sm:$0xff] %vm284, %v237
  %303 = vst.msk [vmem:[%s3 + $0x90] sm:$0xff] %vm284, %v238
  %304 = vst.msk [vmem:[%s3 + $0x98] sm:$0xff] %vm284, %v239
  %305 = vst.msk [vmem:[%s3 + $0xa0] sm:$0xff] %vm284, %v240
  %306 = vst.msk [vmem:[%s3 + $0xa8] sm:$0xff] %vm284, %v241
  %307 = vst.msk [vmem:[%s3 + $0xb0] sm:$0xff] %vm284, %v242
  %308 = vst.msk [vmem:[%s3 + $0xb8] sm:$0xff] %vm284, %v243
  %309 = vst.msk [vmem:[%s3 + $0xc0] sm:$0xff] %vm284, %v244
  %310 = vst.msk [vmem:[%s3 + $0xc8] sm:$0xff] %vm284, %v245
  %311 = vst.msk [vmem:[%s3 + $0xd0] sm:$0xff] %vm284, %v246
  %312 = vst.msk [vmem:[%s3 + $0xd8] sm:$0xff] %vm284, %v247
  %313 = vst.msk [vmem:[%s3 + $0xe0] sm:$0xff] %vm284, %v248
  %314 = vst.msk [vmem:[%s3 + $0xe8] sm:$0xff] %vm284, %v249
  %315 = vst.msk [vmem:[%s3 + $0xf0] sm:$0xff] %vm284, %v250
  %316 = vst.msk [vmem:[%s3 + $0xf8] sm:$0xff] %vm284, %v251
  %317 = vst.msk [vmem:[%s3 + $0x100] sm:$0xff] %vm284, %v252
  %318 = vst.msk [vmem:[%s3 + $0x108] sm:$0xff] %vm284, %v253
  %319 = vst.msk [vmem:[%s3 + $0x110] sm:$0xff] %vm284, %v254
  %320 = vst.msk [vmem:[%s3 + $0x118] sm:$0xff] %vm284, %v255
  %321 = vst.msk [vmem:[%s3 + $0x120] sm:$0xff] %vm284, %v256
  %322 = vst.msk [vmem:[%s3 + $0x128] sm:$0xff] %vm284, %v257
  %323 = vst.msk [vmem:[%s3 + $0x130] sm:$0xff] %vm284, %v258
  %324 = vst.msk [vmem:[%s3 + $0x138] sm:$0xff] %vm284, %v259
  %325 = vst.msk [vmem:[%s3 + $0x140] sm:$0xff] %vm284, %v260
  %326 = vst.msk [vmem:[%s3 + $0x148] sm:$0xff] %vm284, %v261
  %327 = vst.msk [vmem:[%s3 + $0x150] sm:$0xff] %vm284, %v262
  %328 = vst.msk [vmem:[%s3 + $0x158] sm:$0xff] %vm284, %v263
  %329 = vst.msk [vmem:[%s3 + $0x160] sm:$0xff] %vm284, %v264
  %330 = vst.msk [vmem:[%s3 + $0x168] sm:$0xff] %vm284, %v265
  %331 = vst.msk [vmem:[%s3 + $0x170] sm:$0xff] %vm284, %v266
  %332 = vst.msk [vmem:[%s3 + $0x178] sm:$0xff] %vm284, %v267
  %333 = vst.msk [vmem:[%s3 + $0x180] sm:$0xff] %vm284, %v268
  %334 = vst.msk [vmem:[%s3 + $0x188] sm:$0xff] %vm284, %v269
  %335 = vst.msk [vmem:[%s3 + $0x190] sm:$0xff] %vm284, %v270
  %336 = vst.msk [vmem:[%s3 + $0x198] sm:$0xff] %vm284, %v271
  %337 = vst.msk [vmem:[%s3 + $0x1a0] sm:$0xff] %vm284, %v272
  %338 = vst.msk [vmem:[%s3 + $0x1a8] sm:$0xff] %vm284, %v273
  %339 = vst.msk [vmem:[%s3 + $0x1b0] sm:$0xff] %vm284, %v274
  %340 = vst.msk [vmem:[%s3 + $0x1b8] sm:$0xff] %vm284, %v275
  %341 = vst.msk [vmem:[%s3 + $0x1c0] sm:$0xff] %vm284, %v276
  %342 = vst.msk [vmem:[%s3 + $0x1c8] sm:$0xff] %vm284, %v277
  %343 = vst.msk [vmem:[%s3 + $0x1d0] sm:$0xff] %vm284, %v278
  %344 = vst.msk [vmem:[%s3 + $0x1d8] sm:$0xff] %vm284, %v279
  %345 = vst.msk [vmem:[%s3 + $0x1e0] sm:$0xff] %vm284, %v280
  %346 = vst.msk [vmem:[%s3 + $0x1e8] sm:$0xff] %vm284, %v281
  %347 = vst.msk [vmem:[%s3 + $0x1f0] sm:$0xff] %vm284, %v282
  %348 = vst.msk [vmem:[%s3 + $0x1f8] sm:$0xff] %vm284, %v283
  // Predicated region
  $region14: #{layer0_forward.3} parent=0 // pred_check
    _
  $region15: #{layer0_forward.3} parent=0 // pred_check_branch
    %350 = sbr.rel (0) target = $region17
  $region16: #{layer0_forward.3} parent=0 // pred_region
    _
  $region17: #{layer0_forward.3} parent=0 // pred_fallthru
    _
  // Predicated region
  $region18: #{layer0_forward.3} parent=0 // pred_check
    _
  $region19: #{layer0_forward.3} parent=0 // pred_check_branch
    %352 = sbr.rel (0) target = $region21
  $region20: #{layer0_forward.3} parent=0 // pred_region
    _
  $region21: #{layer0_forward.3} parent=0 // pred_fallthru
    _

// kernel: layer0_forward.2
$region0: #{layer0_forward.2}
  #allocation0 [shape = 'u32[]', space=smem, size = 0x4, offset = 0x4, fixed_abs, tag = 'smem constant byte address 0x4 - core index']
  #allocation1 [shape = 'u32[144,128]{1,0:T(1,128)}', space=vmem, size = 0x12000, scoped, tag = 'internal scratch']
  %s0 = inlined_call_operand.vmem [shape: f32[640,20], index: 0, kind: input, shape index: {}]
  %s1 = inlined_call_operand.vmem [shape: f32[5,20,64], index: 1, kind: input, shape index: {}]
  %s2 = inlined_call_operand.vmem [shape: f32[1,64], index: 2, kind: input, shape index: {}]
  %s3 = inlined_call_operand.vmem [shape: f32[512,64], index: 3, kind: output, shape index: {0}]
  %s4 = inlined_call_operand.vmem [shape: f32[16,64], index: 4, kind: output, shape index: {1}]
  %s5 = inlined_call_operand.vmem [shape: f32[16,64], index: 5, kind: output, shape index: {2}]
  %6 = xla_tuple %s3, %s4, %s5
  %s7 = sld [smem:[#allocation0]]
  $region61: #{layer0_forward.2} parent=0
    _
  %s9 = ssub.s32 1, %s7
  %s10 = scalar_select 0, %s9, %s7
  loop: start=0, step=1, limit=4
  $region2: #{layer0_forward.2} parent=0 // loop_pre_header
    _
  $region3: #{layer0_forward.2} parent=0 // loop_header
    %s12 = sphi 0, %s16
    %p13 = scmp.ge.s32.totalorder %s12, 4
    %s19 = sphi 0, %s31
    %s20 = sphi 0, %s27
    %s21 = sphi 0, %s19
    %s22 = sphi 0, %s20
    %s23 = sphi 0, %s21
    %s24 = sphi 0, %s22
    %s34 = sphi 0, %s36
    %s37 = sphi 0, %s34
    %s38 = sphi 0, %s37
    %s54 = sphi 0, %s38
    %s58 = sphi 0, %s58
    %s60 = sphi 0, %s58
    %s61 = sphi 0, %s60
    %s75 = sphi 0, %s61
    %s79 = sphi 0, %s79
    %s81 = sphi 0, %s79
    %s82 = sphi 0, %s81
    %s96 = sphi 0, %s82
    %s104 = sphi 0, %s106
    %s107 = sphi 0, %s104
    %s108 = sphi 0, %s107
    %s124 = sphi 0, %s108
    %s132 = sphi 0, %s134
    %s135 = sphi 0, %s132
    %s136 = sphi 0, %s135
    %s152 = sphi 0, %s136
    %s160 = sphi 0, %s162
    %s163 = sphi 0, %s160
    %s164 = sphi 0, %s163
    %s180 = sphi 0, %s164
  $region4: #{layer0_forward.2} parent=0 // loop_header_branch
    %15 = sbr.rel (%p13) target = $region8
  $region5: #{layer0_forward.2} parent=0 // loop_body
    %s17 = ssub.s32 %s12, 1
    %s18 = ssub.s32 %s12, 2
    %s25 = sadd.s32 1, %s20
    %p26 = scmp.ge.s32.totalorder %s25, 1
    %s27 = scalar_select %p26, 0, %s25
    %s28 = sadd.s32 1, %s19
    %s29 = scalar_select %p26, %s28, %s19
    %p30 = scmp.ge.s32.totalorder %s29, 2
    %s31 = scalar_select %p30, 0, %s29
    %s32 = ssub.s32 %s19, %s31
    %p33 = scmp.eq.s32.totalorder %s32, 0
    %s35 = sadd.s32 %s34, 1
    %s36 = scalar_select %p33, %s34, %s35
    %p39 = pneg %p33
    %p40 = scmp.eq.s32.totalorder %s12, 1
    %p41 = por %p39, %p40
    %p42 = scmp.ne.s32.totalorder %s34, %s37
    %p43 = scmp.eq.s32.totalorder %s12, 0
    %p44 = por %p42, %p43
    %p45 = scmp.ne.s32.totalorder %s34, %s37
    %p46 = scmp.eq.s32.totalorder %s17, 1
    %p47 = por %p45, %p46
    %p48 = scmp.ne.s32.totalorder %s37, %s38
    %p49 = scmp.eq.s32.totalorder %s17, 0
    %p50 = por %p48, %p49
    %p51 = scmp.ne.s32.totalorder %s37, %s38
    %p52 = scmp.eq.s32.totalorder %s18, 1
    %p53 = por %p51, %p52
    %p55 = scmp.ne.s32.totalorder %s38, %s54
    %p56 = scmp.eq.s32.totalorder %s18, 0
    %p57 = por %p55, %p56
    %s59 = sadd.s32 %s58, 1
    %p62 = scmp.eq.s32.totalorder %s12, 1
    %p63 = scmp.ne.s32.totalorder %s58, %s60
    %p64 = scmp.eq.s32.totalorder %s12, 0
    %p65 = por %p63, %p64
    %p66 = scmp.ne.s32.totalorder %s58, %s60
    %p67 = scmp.eq.s32.totalorder %s17, 1
    %p68 = por %p66, %p67
    %p69 = scmp.ne.s32.totalorder %s60, %s61
    %p70 = scmp.eq.s32.totalorder %s17, 0
    %p71 = por %p69, %p70
    %p72 = scmp.ne.s32.totalorder %s60, %s61
    %p73 = scmp.eq.s32.totalorder %s18, 1
    %p74 = por %p72, %p73
    %p76 = scmp.ne.s32.totalorder %s61, %s75
    %p77 = scmp.eq.s32.totalorder %s18, 0
    %p78 = por %p76, %p77
    %s80 = sadd.s32 %s79, 1
    %p83 = scmp.eq.s32.totalorder %s12, 1
    %p84 = scmp.ne.s32.totalorder %s79, %s81
    %p85 = scmp.eq.s32.totalorder %s12, 0
    %p86 = por %p84, %p85
    %p87 = scmp.ne.s32.totalorder %s79, %s81
    %p88 = scmp.eq.s32.totalorder %s17, 1
    %p89 = por %p87, %p88
    %p90 = scmp.ne.s32.totalorder %s81, %s82
    %p91 = scmp.eq.s32.totalorder %s17, 0
    %p92 = por %p90, %p91
    %p93 = scmp.ne.s32.totalorder %s81, %s82
    %p94 = scmp.eq.s32.totalorder %s18, 1
    %p95 = por %p93, %p94
    %p97 = scmp.ne.s32.totalorder %s82, %s96
    %p98 = scmp.eq.s32.totalorder %s18, 0
    %p99 = por %p97, %p98
    %s100 = sadd.s32 %s19, %s20
    %s101 = sadd.s32 %s31, %s27
    %s102 = ssub.s32 %s100, %s101
    %p103 = scmp.eq.s32.totalorder %s102, 0
    %s105 = sadd.s32 %s104, 1
    %s106 = scalar_select %p103, %s104, %s105
    %p109 = pneg %p103
    %p110 = scmp.eq.s32.totalorder %s12, 1
    %p111 = por %p109, %p110
    %p112 = scmp.ne.s32.totalorder %s104, %s107
    %p113 = scmp.eq.s32.totalorder %s12, 0
    %p114 = por %p112, %p113
    %p115 = scmp.ne.s32.totalorder %s104, %s107
    %p116 = scmp.eq.s32.totalorder %s17, 1
    %p117 = por %p115, %p116
    %p118 = scmp.ne.s32.totalorder %s107, %s108
    %p119 = scmp.eq.s32.totalorder %s17, 0
    %p120 = por %p118, %p119
    %p121 = scmp.ne.s32.totalorder %s107, %s108
    %p122 = scmp.eq.s32.totalorder %s18, 1
    %p123 = por %p121, %p122
    %p125 = scmp.ne.s32.totalorder %s108, %s124
    %p126 = scmp.eq.s32.totalorder %s18, 0
    %p127 = por %p125, %p126
    %s128 = sadd.s32 %s19, %s20
    %s129 = sadd.s32 %s31, %s27
    %s130 = ssub.s32 %s128, %s129
    %p131 = scmp.eq.s32.totalorder %s130, 0
    %s133 = sadd.s32 %s132, 1
    %s134 = scalar_select %p131, %s132, %s133
    %p137 = pneg %p131
    %p138 = scmp.eq.s32.totalorder %s12, 1
    %p139 = por %p137, %p138
    %p140 = scmp.ne.s32.totalorder %s132, %s135
    %p141 = scmp.eq.s32.totalorder %s12, 0
    %p142 = por %p140, %p141
    %p143 = scmp.ne.s32.totalorder %s132, %s135
    %p144 = scmp.eq.s32.totalorder %s17, 1
    %p145 = por %p143, %p144
    %p146 = scmp.ne.s32.totalorder %s135, %s136
    %p147 = scmp.eq.s32.totalorder %s17, 0
    %p148 = por %p146, %p147
    %p149 = scmp.ne.s32.totalorder %s135, %s136
    %p150 = scmp.eq.s32.totalorder %s18, 1
    %p151 = por %p149, %p150
    %p153 = scmp.ne.s32.totalorder %s136, %s152
    %p154 = scmp.eq.s32.totalorder %s18, 0
    %p155 = por %p153, %p154
    %s156 = sadd.s32 %s19, %s20
    %s157 = sadd.s32 %s31, %s27
    %s158 = ssub.s32 %s156, %s157
    %p159 = scmp.eq.s32.totalorder %s158, 0
    %s161 = sadd.s32 %s160, 1
    %s162 = scalar_select %p159, %s160, %s161
    %p165 = pneg %p159
    %p166 = scmp.eq.s32.totalorder %s12, 1
    %p167 = por %p165, %p166
    %p168 = scmp.ne.s32.totalorder %s160, %s163
    %p169 = scmp.eq.s32.totalorder %s12, 0
    %p170 = por %p168, %p169
    %p171 = scmp.ne.s32.totalorder %s160, %s163
    %p172 = scmp.eq.s32.totalorder %s17, 1
    %p173 = por %p171, %p172
    %p174 = scmp.ne.s32.totalorder %s163, %s164
    %p175 = scmp.eq.s32.totalorder %s17, 0
    %p176 = por %p174, %p175
    %p177 = scmp.ne.s32.totalorder %s163, %s164
    %p178 = scmp.eq.s32.totalorder %s18, 1
    %p179 = por %p177, %p178
    %p181 = scmp.ne.s32.totalorder %s164, %s180
    %p182 = scmp.eq.s32.totalorder %s18, 0
    %p183 = por %p181, %p182
    %p184 = scmp.le.s32.totalorder 1, %s12
    %p185 = scmp.lt.s32.totalorder %s12, 3
    %p186 = pnand %p184, %p185
    %p187 = pneg %p186
    // Predicated region
    $region9: #{layer0_forward.2} parent=5 // pred_check
      _
    $region10: #{layer0_forward.2} parent=5 // pred_check_branch
      %189 = sbr.rel (%p186) target = $region12
    $region11: #{layer0_forward.2} parent=5 // pred_region
      %s190 = ssub.s32 %s12, 1
      // Predicated region
      $region13: #{layer0_forward.2} parent=11 // pred_check
        %p191 = pneg %p71
      $region14: #{layer0_forward.2} parent=11 // pred_check_branch
        %193 = sbr.rel (%p191) target = $region16
      $region15: #{layer0_forward.2} parent=11 // pred_region
        _
      $region16: #{layer0_forward.2} parent=11 // pred_fallthru
        _
      // Predicated region
      $region17: #{layer0_forward.2} parent=11 // pred_check
        %p194 = pneg %p92
      $region18: #{layer0_forward.2} parent=11 // pred_check_branch
        %196 = sbr.rel (%p194) target = $region20
      $region19: #{layer0_forward.2} parent=11 // pred_region
        _
      $region20: #{layer0_forward.2} parent=11 // pred_fallthru
        _
    $region12: #{layer0_forward.2} parent=5 // pred_fallthru
      _
    %p197 = scmp.lt.s32.totalorder %s12, 2
    // Predicated region
    $region21: #{layer0_forward.2} parent=5 // pred_check
      %p198 = pneg %p197
    $region22: #{layer0_forward.2} parent=5 // pred_check_branch
      %200 = sbr.rel (%p198) target = $region24
    $region23: #{layer0_forward.2} parent=5 // pred_region
      // Predicated region
      $region25: #{layer0_forward.2} parent=23 // pred_check
        %p201 = pneg %p44
      $region26: #{layer0_forward.2} parent=23 // pred_check_branch
        %203 = sbr.rel (%p201) target = $region28
      $region27: #{layer0_forward.2} parent=23 // pred_region
        %s204 = smul.u32 40, %s19
        %p205 = scmp.lt.s32.totalorder %s204, 79
        %s206 = scalar_select %p205, %s204, 79
        %s207 = smul.addr %s206, 8
        %s208 = scalar_lea.vmem %s0, %s207
        %s209 = smul.u32 40, %s19
      $region28: #{layer0_forward.2} parent=23 // pred_fallthru
        _
    $region24: #{layer0_forward.2} parent=5 // pred_fallthru
      _
    %p210 = scmp.le.s32.totalorder 1, %s12
    %p211 = scmp.lt.s32.totalorder %s12, 3
    %p212 = pnand %p210, %p211
    %p213 = pneg %p212
    // Predicated region
    $region29: #{layer0_forward.2} parent=5 // pred_check
      _
    $region30: #{layer0_forward.2} parent=5 // pred_check_branch
      %215 = sbr.rel (%p212) target = $region32
    $region31: #{layer0_forward.2} parent=5 // pred_region
      %s216 = ssub.s32 %s12, 1
      %s217 = smul.u32 40, %s21
      %p218 = scmp.lt.s32.totalorder %s217, 79
      %s219 = scalar_select %p218, %s217, 79
      %s220 = smul.addr %s219, 8
      %s221 = scalar_lea.vmem %s0, %s220
      %p222 = pneg %p50
      %p223 = pneg %p47
      %p224 = pneg %p71
      %p225 = pneg %p68
      %p226 = pneg %p92
      %p227 = pneg %p89
      %p228 = pneg %p120
      %p229 = pneg %p117
      %s230 = sadd.s32 %s21, %s22
      %s231 = smul.u32 32, %s230
      %p232 = scmp.lt.s32.totalorder %s231, 63
      %s233 = scalar_select %p232, %s231, 63
      %s234 = smul.addr %s233, 8
      %s235 = scalar_lea.vmem %s3, %s234
      %p236 = pneg %p148
      %p237 = pneg %p145
      %s238 = sadd.s32 %s21, %s22
      %p239 = scmp.lt.s32.totalorder %s238, 1
      %s240 = scalar_select %p239, %s238, 1
      %s241 = smul.addr %s240, 8
      %s242 = scalar_lea.vmem %s4, %s241
      %p243 = pneg %p176
      %p244 = pneg %p173
      %s245 = sadd.s32 %s21, %s22
      %p246 = scmp.lt.s32.totalorder %s245, 1
      %s247 = scalar_select %p246, %s245, 1
      %s248 = smul.addr %s247, 8
      %s249 = scalar_lea.vmem %s5, %s248
      %s250 = smul.u32 40, %s21
      %p251 = scmp.lt.s32.totalorder %s250, 79
      %s252 = scalar_select %p251, %s250, 79
      %s253 = smul.addr %s252, 8
      %s254 = scalar_lea.vmem %s0, %s253
      %s255 = smul.u32 40, %s21
      %s256 = sadd.s32 %s21, %s22
      %s257 = smul.u32 32, %s256
      %p258 = scmp.lt.s32.totalorder %s257, 63
      %s259 = scalar_select %p258, %s257, 63
      %s260 = smul.addr %s259, 8
      %s261 = scalar_lea.vmem %s3, %s260
      %s262 = sadd.s32 %s21, %s22
      %s263 = smul.u32 32, %s262
      %s264 = sadd.s32 %s21, %s22
      %p265 = scmp.lt.s32.totalorder %s264, 1
      %s266 = scalar_select %p265, %s264, 1
      %s267 = smul.addr %s266, 8
      %s268 = scalar_lea.vmem %s4, %s267
      %s269 = sadd.s32 %s21, %s22
      %s270 = sadd.s32 %s21, %s22
      %p271 = scmp.lt.s32.totalorder %s270, 1
      %s272 = scalar_select %p271, %s270, 1
      %s273 = smul.addr %s272, 8
      %s274 = scalar_lea.vmem %s5, %s273
      %s275 = sadd.s32 %s21, %s22
      %v276 = vld [vmem:[%s2] sm:$0x1]
      %v278 = vlaneseq
      %v279 = vshrl.u32 %v278, 7
      %v280 = vsub.s32 0, %v279
      %v281 = vrot.slane %v276, %v280
      %vm283 = vcmask 523264
      %284 = vst.msk [vmem:[%s261] sm:$0xff] %vm283, %v281
      %285 = vst.msk [vmem:[%s261 + $0x8] sm:$0xff] %vm283, %v281
      %286 = vst.msk [vmem:[%s261 + $0x10] sm:$0xff] %vm283, %v281
      %287 = vst.msk [vmem:[%s261 + $0x18] sm:$0xff] %vm283, %v281
      %288 = vst.msk [vmem:[%s261 + $0x20] sm:$0xff] %vm283, %v281
      %289 = vst.msk [vmem:[%s261 + $0x28] sm:$0xff] %vm283, %v281
      %290 = vst.msk [vmem:[%s261 + $0x30] sm:$0xff] %vm283, %v281
      %291 = vst.msk [vmem:[%s261 + $0x38] sm:$0xff] %vm283, %v281
      %292 = vst.msk [vmem:[%s261 + $0x40] sm:$0xff] %vm283, %v281
      %293 = vst.msk [vmem:[%s261 + $0x48] sm:$0xff] %vm283, %v281
      %294 = vst.msk [vmem:[%s261 + $0x50] sm:$0xff] %vm283, %v281
      %295 = vst.msk [vmem:[%s261 + $0x58] sm:$0xff] %vm283, %v281
      %296 = vst.msk [vmem:[%s261 + $0x60] sm:$0xff] %vm283, %v281
      %297 = vst.msk [vmem:[%s261 + $0x68] sm:$0xff] %vm283, %v281
      %298 = vst.msk [vmem:[%s261 + $0x70] sm:$0xff] %vm283, %v281
      %299 = vst.msk [vmem:[%s261 + $0x78] sm:$0xff] %vm283, %v281
      %300 = vst.msk [vmem:[%s261 + $0x80] sm:$0xff] %vm283, %v281
      %301 = vst.msk [vmem:[%s261 + $0x88] sm:$0xff] %vm283, %v281
      %302 = vst.msk [vmem:[%s261 + $0x90] sm:$0xff] %vm283, %v281
      %303 = vst.msk [vmem:[%s261 + $0x98] sm:$0xff] %vm283, %v281
      %304 = vst.msk [vmem:[%s261 + $0xa0] sm:$0xff] %vm283, %v281
      %305 = vst.msk [vmem:[%s261 + $0xa8] sm:$0xff] %vm283, %v281
      %306 = vst.msk [vmem:[%s261 + $0xb0] sm:$0xff] %vm283, %v281
      %307 = vst.msk [vmem:[%s261 + $0xb8] sm:$0xff] %vm283, %v281
      %308 = vst.msk [vmem:[%s261 + $0xc0] sm:$0xff] %vm283, %v281
      %309 = vst.msk [vmem:[%s261 + $0xc8] sm:$0xff] %vm283, %v281
      %310 = vst.msk [vmem:[%s261 + $0xd0] sm:$0xff] %vm283, %v281
      %311 = vst.msk [vmem:[%s261 + $0xd8] sm:$0xff] %vm283, %v281
      %312 = vst.msk [vmem:[%s261 + $0xe0] sm:$0xff] %vm283, %v281
      %313 = vst.msk [vmem:[%s261 + $0xe8] sm:$0xff] %vm283, %v281
      %314 = vst.msk [vmem:[%s261 + $0xf0] sm:$0xff] %vm283, %v281
      %315 = vst.msk [vmem:[%s261 + $0xf8] sm:$0xff] %vm283, %v281
      %s316 = smul.u32 %s22, 256
      %v317 = vld [vmem:[%s261] sm:$0xff]
      %v318 = vld [vmem:[%s261 + $0x8] sm:$0xff]
      %v319 = vld [vmem:[%s261 + $0x10] sm:$0xff]
      %v320 = vld [vmem:[%s261 + $0x18] sm:$0xff]
      %v321 = vld [vmem:[%s261 + $0x20] sm:$0xff]
      %v322 = vld [vmem:[%s261 + $0x28] sm:$0xff]
      %v323 = vld [vmem:[%s261 + $0x30] sm:$0xff]
      %v324 = vld [vmem:[%s261 + $0x38] sm:$0xff]
      %v325 = vld [vmem:[%s261 + $0x40] sm:$0xff]
      %v326 = vld [vmem:[%s261 + $0x48] sm:$0xff]
      %v327 = vld [vmem:[%s261 + $0x50] sm:$0xff]
      %v328 = vld [vmem:[%s261 + $0x58] sm:$0xff]
      %v329 = vld [vmem:[%s261 + $0x60] sm:$0xff]
      %v330 = vld [vmem:[%s261 + $0x68] sm:$0xff]
      %v331 = vld [vmem:[%s261 + $0x70] sm:$0xff]
      %v332 = vld [vmem:[%s261 + $0x78] sm:$0xff]
      %v333 = vld [vmem:[%s261 + $0x80] sm:$0xff]
      %v334 = vld [vmem:[%s261 + $0x88] sm:$0xff]
      %v335 = vld [vmem:[%s261 + $0x90] sm:$0xff]
      %v336 = vld [vmem:[%s261 + $0x98] sm:$0xff]
      %v337 = vld [vmem:[%s261 + $0xa0] sm:$0xff]
      %v338 = vld [vmem:[%s261 + $0xa8] sm:$0xff]
      %v339 = vld [vmem:[%s261 + $0xb0] sm:$0xff]
      %v340 = vld [vmem:[%s261 + $0xb8] sm:$0xff]
      %v341 = vld [vmem:[%s261 + $0xc0] sm:$0xff]
      %v342 = vld [vmem:[%s261 + $0xc8] sm:$0xff]
      %v343 = vld [vmem:[%s261 + $0xd0] sm:$0xff]
      %v344 = vld [vmem:[%s261 + $0xd8] sm:$0xff]
      %v345 = vld [vmem:[%s261 + $0xe0] sm:$0xff]
      %v346 = vld [vmem:[%s261 + $0xe8] sm:$0xff]
      %v347 = vld [vmem:[%s261 + $0xf0] sm:$0xff]
      %v348 = vld [vmem:[%s261 + $0xf8] sm:$0xff]
      %s349 = scalar_lea.vmem %s254, %s316
      %v350 = vld [vmem:[%s349] sm:$0xff]
      %v351 = vld [vmem:[%s349 + $0x8] sm:$0xff]
      %v352 = vld [vmem:[%s349 + $0x10] sm:$0xff]
      %v353 = vld [vmem:[%s349 + $0x18] sm:$0xff]
      %v354 = vld [vmem:[%s349 + $0x20] sm:$0xff]
      %v355 = vld [vmem:[%s349 + $0x28] sm:$0xff]
      %v356 = vld [vmem:[%s349 + $0x30] sm:$0xff]
      %v357 = vld [vmem:[%s349 + $0x38] sm:$0xff]
      %v358 = vld [vmem:[%s349 + $0x40] sm:$0xff]
      %v359 = vld [vmem:[%s349 + $0x48] sm:$0xff]
      %v360 = vld [vmem:[%s349 + $0x50] sm:$0xff]
      %v361 = vld [vmem:[%s349 + $0x58] sm:$0xff]
      %v362 = vld [vmem:[%s349 + $0x60] sm:$0xff]
      %v363 = vld [vmem:[%s349 + $0x68] sm:$0xff]
      %v364 = vld [vmem:[%s349 + $0x70] sm:$0xff]
      %v365 = vld [vmem:[%s349 + $0x78] sm:$0xff]
      %v366 = vld [vmem:[%s349 + $0x80] sm:$0xff]
      %v367 = vld [vmem:[%s349 + $0x88] sm:$0xff]
      %v368 = vld [vmem:[%s349 + $0x90] sm:$0xff]
      %v369 = vld [vmem:[%s349 + $0x98] sm:$0xff]
      %v370 = vld [vmem:[%s349 + $0xa0] sm:$0xff]
      %v371 = vld [vmem:[%s349 + $0xa8] sm:$0xff]
      %v372 = vld [vmem:[%s349 + $0xb0] sm:$0xff]
      %v373 = vld [vmem:[%s349 + $0xb8] sm:$0xff]
      %v374 = vld [vmem:[%s349 + $0xc0] sm:$0xff]
      %v375 = vld [vmem:[%s349 + $0xc8] sm:$0xff]
      %v376 = vld [vmem:[%s349 + $0xd0] sm:$0xff]
      %v377 = vld [vmem:[%s349 + $0xd8] sm:$0xff]
      %v378 = vld [vmem:[%s349 + $0xe0] sm:$0xff]
      %v379 = vld [vmem:[%s349 + $0xe8] sm:$0xff]
      %v380 = vld [vmem:[%s349 + $0xf0] sm:$0xff]
      %v381 = vld [vmem:[%s349 + $0xf8] sm:$0xff]
      %v382 = vld [vmem:[%s1] sm:$0xff]
      %v383 = vld [vmem:[%s1 + $0x8] sm:$0xff]
      %v384 = vld [vmem:[%s1 + $0x10] sm:$0xf]
      %vm385 = vcmask 162816
      %v387 = vsel %vm385, %v350, 0
      %v390 = vsel %vm385, %v351, 0
      %v393 = vsel %vm385, %v352, 0
      %v396 = vsel %vm385, %v353, 0
      %v399 = vsel %vm385, %v354, 0
      %v402 = vsel %vm385, %v355, 0
      %v405 = vsel %vm385, %v356, 0
      %v408 = vsel %vm385, %v357, 0
      %v411 = vsel %vm385, %v358, 0
      %v414 = vsel %vm385, %v359, 0
      %v417 = vsel %vm385, %v360, 0
      %v420 = vsel %vm385, %v361, 0
      %v423 = vsel %vm385, %v362, 0
      %v426 = vsel %vm385, %v363, 0
      %v429 = vsel %vm385, %v364, 0
      %v432 = vsel %vm385, %v365, 0
      %v435 = vsel %vm385, %v366, 0
      %v438 = vsel %vm385, %v367, 0
      %v441 = vsel %vm385, %v368, 0
      %v444 = vsel %vm385, %v369, 0
      %v447 = vsel %vm385, %v370, 0
      %v450 = vsel %vm385, %v371, 0
      %v453 = vsel %vm385, %v372, 0
      %v456 = vsel %vm385, %v373, 0
      %v459 = vsel %vm385, %v374, 0
      %v462 = vsel %vm385, %v375, 0
      %v465 = vsel %vm385, %v376, 0
      %v468 = vsel %vm385, %v377, 0
      %v471 = vsel %vm385, %v378, 0
      %v474 = vsel %vm385, %v379, 0
      %v477 = vsel %vm385, %v380, 0
      %v480 = vsel %vm385, %v381, 0
      %vm482 = vcmask 1043456
      %v484 = vsel %vm482, %v384, 0
      %486 = vmatprep.subr.mxu0 0.0
      %487 = vmatpush1.msra.mxu0 %v382
      %488 = vmatprep.subr.mxu0 0.0
      %489 = vmatpush1.msra.mxu0 %v383
      %490 = vmatprep.subr.mxu0 0.0
      %491 = vmatpush1.msra.mxu0 %v484
      %492 = vmatprep.subr.mxu0 0.0
      %493 = vmatpush1.msra.mxu0 0.0
      %494 = vmatprep.subr.mxu0 0.0
      %495 = vmatpush1.msra.mxu0 0.0
      %496 = vmatprep.subr.mxu0 0.0
      %497 = vmatpush1.msra.mxu0 0.0
      %498 = vmatprep.subr.mxu0 0.0
      %499 = vmatpush1.msra.mxu0 0.0
      %500 = vmatprep.subr.mxu0 0.0
      %501 = vmatpush1.msra.mxu0 0.0
      %502 = vmatprep.subr.mxu0 0.0
      %503 = vmatpush1.msra.mxu0 0.0
      %504 = vmatprep.subr.mxu0 0.0
      %505 = vmatpush1.msra.mxu0 0.0
      %506 = vmatprep.subr.mxu0 0.0
      %507 = vmatpush1.msra.mxu0 0.0
      %508 = vmatprep.subr.mxu0 0.0
      %509 = vmatpush1.msra.mxu0 0.0
      %510 = vmatprep.subr.mxu0 0.0
      %511 = vmatpush1.msra.mxu0 0.0
      %512 = vmatprep.subr.mxu0 0.0
      %513 = vmatpush1.msra.mxu0 0.0
      %514 = vmatprep.subr.mxu0 0.0
      %515 = vmatpush1.msra.mxu0 0.0
      %516 = vmatprep.subr.mxu0 0.0
      %517 = vmatpush1.msra.mxu0 0.0
      %518 = vmatprep.subr.mxu0 0.0
      %519 = vmatpush1.msra.mxu0 0.0
      %520 = vmatprep.subr.mxu0 0.0
      %521 = vmatpush1.msra.mxu0 0.0
      %522 = vmatprep.subr.mxu0 0.0
      %523 = vmatpush1.msra.mxu0 0.0
      %524 = vmatprep.subr.mxu0 0.0
      %525 = vmatpush1.msra.mxu0 0.0
      %526 = vmatprep.subr.mxu0 0.0
      %527 = vmatpush1.msra.mxu0 0.0
      %528 = vmatprep.subr.mxu0 0.0
      %529 = vmatpush1.msra.mxu0 0.0
      %530 = vmatprep.subr.mxu0 0.0
      %531 = vmatpush1.msra.mxu0 0.0
      %532 = vmatprep.subr.mxu0 0.0
      %533 = vmatpush1.msra.mxu0 0.0
      %534 = vmatprep.subr.mxu0 0.0
      %535 = vmatpush1.msra.mxu0 0.0
      %536 = vmatprep.subr.mxu0 0.0
      %537 = vmatpush1.msra.mxu0 0.0
      %538 = vmatprep.subr.mxu0 0.0
      %539 = vmatpush1.msra.mxu0 0.0
      %540 = vmatprep.subr.mxu0 0.0
      %541 = vmatpush1.msra.mxu0 0.0
      %542 = vmatprep.subr.mxu0 0.0
      %543 = vmatpush1.msra.mxu0 0.0
      %544 = vmatprep.subr.mxu0 0.0
      %545 = vmatpush1.msra.mxu0 0.0
      %546 = vmatprep.subr.mxu0 0.0
      %547 = vmatpush1.msra.mxu0 0.0
      %548 = vmatprep.subr.mxu0 0.0
      %549 = vmatpush1.msra.mxu0 0.0
      %550 = vmatprep.mubr.f32.mxu0 0.0
      %551 = vmatmul.mubr.f32.gmra.mrb[0].mxu0 %v387
      %v552 = vpop.f32.mrb[0].mxu0
      %v553 = vadd.f32 0.0, %v552
      %v554 = vpop.f32.mrb[0].mxu0
      %555 = vmatprep.mubr.f32.mxu0 0.0
      %556 = vmatmul.mubr.f32.gmra.mrb[0].mxu0 %v390
      %v557 = vpop.f32.mrb[0].mxu0
      %v558 = vadd.f32 0.0, %v557
      %v559 = vpop.f32.mrb[0].mxu0
      %560 = vmatprep.mubr.f32.mxu0 0.0
      %561 = vmatmul.mubr.f32.gmra.mrb[0].mxu0 %v393
      %v562 = vpop.f32.mrb[0].mxu0
      %v563 = vadd.f32 0.0, %v562
      %v564 = vpop.f32.mrb[0].mxu0
      %565 = vmatprep.mubr.f32.mxu0 0.0
      %566 = vmatmul.mubr.f32.gmra.mrb[0].mxu0 %v396
      %v567 = vpop.f32.mrb[0].mxu0
      %v568 = vadd.f32 0.0, %v567
      %v569 = vpop.f32.mrb[0].mxu0
      %570 = vmatprep.mubr.f32.mxu0 0.0
      %571 = vmatmul.mubr.f32.gmra.mrb[0].mxu0 %v399
      %v572 = vpop.f32.mrb[0].mxu0
      %v573 = vadd.f32 0.0, %v572
      %v574 = vpop.f32.mrb[0].mxu0
      %575 = vmatprep.mubr.f32.mxu0 0.0
      %576 = vmatmul.mubr.f32.gmra.mrb[0].mxu0 %v402
      %v577 = vpop.f32.mrb[0].mxu0
      %v578 = vadd.f32 0.0, %v577
      %v579 = vpop.f32.mrb[0].mxu0
      %580 = vmatprep.mubr.f32.mxu0 0.0
      %581 = vmatmul.mubr.f32.gmra.mrb[0].mxu0 %v405
      %v582 = vpop.f32.mrb[0].mxu0
      %v583 = vadd.f32 0.0, %v582
      %v584 = vpop.f32.mrb[0].mxu0
      %585 = vmatprep.mubr.f32.mxu0 0.0
      %586 = vmatmul.mubr.f32.gmra.mrb[0].mxu0 %v408
      %v587 = vpop.f32.mrb[0].mxu0
      %v588 = vadd.f32 0.0, %v587
      %v589 = vpop.f32.mrb[0].mxu0
      %590 = vmatprep.mubr.f32.mxu0 0.0
      %591 = vmatmul.mubr.f32.gmra.mrb[0].mxu0 %v411
      %v592 = vpop.f32.mrb[0].mxu0
      %v593 = vadd.f32 0.0, %v592
      %v594 = vpop.f32.mrb[0].mxu0
      %595 = vmatprep.mubr.f32.mxu0 0.0
      %596 = vmatmul.mubr.f32.gmra.mrb[0].mxu0 %v414
      %v597 = vpop.f32.mrb[0].mxu0
      %v598 = vadd.f32 0.0, %v597
      %v599 = vpop.f32.mrb[0].mxu0
      %600 = vmatprep.mubr.f32.mxu0 0.0
      %601 = vmatmul.mubr.f32.gmra.mrb[0].mxu0 %v417
      %v602 = vpop.f32.mrb[0].mxu0
      %v603 = vadd.f32 0.0, %v602
      %v604 = vpop.f32.mrb[0].mxu0
      %605 = vmatprep.mubr.f32.mxu0 0.0
      %606 = vmatmul.mubr.f32.gmra.mrb[0].mxu0 %v420
      %v607 = vpop.f32.mrb[0].mxu0
      %v608 = vadd.f32 0.0, %v607
      %v609 = vpop.f32.mrb[0].mxu0
      %610 = vmatprep.mubr.f32.mxu0 0.0
      %611 = vmatmul.mubr.f32.gmra.mrb[0].mxu0 %v423
      %v612 = vpop.f32.mrb[0].mxu0
      %v613 = vadd.f32 0.0, %v612
      %v614 = vpop.f32.mrb[0].mxu0
      %615 = vmatprep.mubr.f32.mxu0 0.0
      %616 = vmatmul.mubr.f32.gmra.mrb[0].mxu0 %v426
      %v617 = vpop.f32.mrb[0].mxu0
      %v618 = vadd.f32 0.0, %v617
      %v619 = vpop.f32.mrb[0].mxu0
      %620 = vmatprep.mubr.f32.mxu0 0.0
      %621 = vmatmul.mubr.f32.gmra.mrb[0].mxu0 %v429
      %v622 = vpop.f32.mrb[0].mxu0
      %v623 = vadd.f32 0.0, %v622
      %v624 = vpop.f32.mrb[0].mxu0
      %625 = vmatprep.mubr.f32.mxu0 0.0
      %626 = vmatmul.mubr.f32.gmra.mrb[0].mxu0 %v432
      %v627 = vpop.f32.mrb[0].mxu0
      %v628 = vadd.f32 0.0, %v627
      %v629 = vpop.f32.mrb[0].mxu0
      %630 = vmatprep.mubr.f32.mxu0 0.0
      %631 = vmatmul.mubr.f32.gmra.mrb[0].mxu0 %v435
      %v632 = vpop.f32.mrb[0].mxu0
      %v633 = vadd.f32 0.0, %v632
      %v634 = vpop.f32.mrb[0].mxu0
      %635 = vmatprep.mubr.f32.mxu0 0.0
      %636 = vmatmul.mubr.f32.gmra.mrb[0].mxu0 %v438
      %v637 = vpop.f32.mrb[0].mxu0
      %v638 = vadd.f32 0.0, %v637
      %v639 = vpop.f32.mrb[0].mxu0
      %640 = vmatprep.mubr.f32.mxu0 0.0
      %641 = vmatmul.mubr.f32.gmra.mrb[0].mxu0 %v441
      %v642 = vpop.f32.mrb[0].mxu0
      %v643 = vadd.f32 0.0, %v642
      %v644 = vpop.f32.mrb[0].mxu0
      %645 = vmatprep.mubr.f32.mxu0 0.0
      %646 = vmatmul.mubr.f32.gmra.mrb[0].mxu0 %v444
      %v647 = vpop.f32.mrb[0].mxu0
      %v648 = vadd.f32 0.0, %v647
      %v649 = vpop.f32.mrb[0].mxu0
      %650 = vmatprep.mubr.f32.mxu0 0.0
      %651 = vmatmul.mubr.f32.gmra.mrb[0].mxu0 %v447
      %v652 = vpop.f32.mrb[0].mxu0
      %v653 = vadd.f32 0.0, %v652
      %v654 = vpop.f32.mrb[0].mxu0
      %655 = vmatprep.mubr.f32.mxu0 0.0
      %656 = vmatmul.mubr.f32.gmra.mrb[0].mxu0 %v450
      %v657 = vpop.f32.mrb[0].mxu0
      %v658 = vadd.f32 0.0, %v657
      %v659 = vpop.f32.mrb[0].mxu0
      %660 = vmatprep.mubr.f32.mxu0 0.0
      %661 = vmatmul.mubr.f32.gmra.mrb[0].mxu0 %v453
      %v662 = vpop.f32.mrb[0].mxu0
      %v663 = vadd.f32 0.0, %v662
      %v664 = vpop.f32.mrb[0].mxu0
      %665 = vmatprep.mubr.f32.mxu0 0.0
      %666 = vmatmul.mubr.f32.gmra.mrb[0].mxu0 %v456
      %v667 = vpop.f32.mrb[0].mxu0
      %v668 = vadd.f32 0.0, %v667
      %v669 = vpop.f32.mrb[0].mxu0
      %670 = vmatprep.mubr.f32.mxu0 0.0
      %671 = vmatmul.mubr.f32.gmra.mrb[0].mxu0 %v459
      %v672 = vpop.f32.mrb[0].mxu0
      %v673 = vadd.f32 0.0, %v672
      %v674 = vpop.f32.mrb[0].mxu0
      %675 = vmatprep.mubr.f32.mxu0 0.0
      %676 = vmatmul.mubr.f32.gmra.mrb[0].mxu0 %v462
      %v677 = vpop.f32.mrb[0].mxu0
      %v678 = vadd.f32 0.0, %v677
      %v679 = vpop.f32.mrb[0].mxu0
      %680 = vmatprep.mubr.f32.mxu0 0.0
      %681 = vmatmul.mubr.f32.gmra.mrb[0].mxu0 %v465
      %v682 = vpop.f32.mrb[0].mxu0
      %v683 = vadd.f32 0.0, %v682
      %v684 = vpop.f32.mrb[0].mxu0
      %685 = vmatprep.mubr.f32.mxu0 0.0
      %686 = vmatmul.mubr.f32.gmra.mrb[0].mxu0 %v468
      %v687 = vpop.f32.mrb[0].mxu0
      %v688 = vadd.f32 0.0, %v687
      %v689 = vpop.f32.mrb[0].mxu0
      %690 = vmatprep.mubr.f32.mxu0 0.0
      %691 = vmatmul.mubr.f32.gmra.mrb[0].mxu0 %v471
      %v692 = vpop.f32.mrb[0].mxu0
      %v693 = vadd.f32 0.0, %v692
      %v694 = vpop.f32.mrb[0].mxu0
      %695 = vmatprep.mubr.f32.mxu0 0.0
      %696 = vmatmul.mubr.f32.gmra.mrb[0].mxu0 %v474
      %v697 = vpop.f32.mrb[0].mxu0
      %v698 = vadd.f32 0.0, %v697
      %v699 = vpop.f32.mrb[0].mxu0
      %700 = vmatprep.mubr.f32.mxu0 0.0
      %701 = vmatmul.mubr.f32.gmra.mrb[0].mxu0 %v477
      %v702 = vpop.f32.mrb[0].mxu0
      %v703 = vadd.f32 0.0, %v702
      %v704 = vpop.f32.mrb[0].mxu0
      %705 = vmatprep.mubr.f32.mxu0 0.0
      %706 = vmatmul.mubr.f32.gmra.mrb[0].mxu0 %v480
      %v707 = vpop.f32.mrb[0].mxu0
      %v708 = vadd.f32 0.0, %v707
      %v709 = vpop.f32.mrb[0].mxu0
      %710 = vdwg.mxu0
      %v711 = vadd.f32 %v317, %v553
      %v712 = vadd.f32 %v318, %v558
      %v713 = vadd.f32 %v319, %v563
      %v714 = vadd.f32 %v320, %v568
      %v715 = vadd.f32 %v321, %v573
      %v716 = vadd.f32 %v322, %v578
      %v717 = vadd.f32 %v323, %v583
      %v718 = vadd.f32 %v324, %v588
      %v719 = vadd.f32 %v325, %v593
      %v720 = vadd.f32 %v326, %v598
      %v721 = vadd.f32 %v327, %v603
      %v722 = vadd.f32 %v328, %v608
      %v723 = vadd.f32 %v329, %v613
      %v724 = vadd.f32 %v330, %v618
      %v725 = vadd.f32 %v331, %v623
      %v726 = vadd.f32 %v332, %v628
      %v727 = vadd.f32 %v333, %v633
      %v728 = vadd.f32 %v334, %v638
      %v729 = vadd.f32 %v335, %v643
      %v730 = vadd.f32 %v336, %v648
      %v731 = vadd.f32 %v337, %v653
      %v732 = vadd.f32 %v338, %v658
      %v733 = vadd.f32 %v339, %v663
      %v734 = vadd.f32 %v340, %v668
      %v735 = vadd.f32 %v341, %v673
      %v736 = vadd.f32 %v342, %v678
      %v737 = vadd.f32 %v343, %v683
      %v738 = vadd.f32 %v344, %v688
      %v739 = vadd.f32 %v345, %v693
      %v740 = vadd.f32 %v346, %v698
      %v741 = vadd.f32 %v347, %v703
      %v742 = vadd.f32 %v348, %v708
      %743 = vst.msk [vmem:[%s261] sm:$0xff] %vm283, %v711
      %744 = vst.msk [vmem:[%s261 + $0x8] sm:$0xff] %vm283, %v712
      %745 = vst.msk [vmem:[%s261 + $0x10] sm:$0xff] %vm283, %v713
      %746 = vst.msk [vmem:[%s261 + $0x18] sm:$0xff] %vm283, %v714
      %747 = vst.msk [vmem:[%s261 + $0x20] sm:$0xff] %vm283, %v715
      %748 = vst.msk [vmem:[%s261 + $0x28] sm:$0xff] %vm283, %v716
      %749 = vst.msk [vmem:[%s261 + $0x30] sm:$0xff] %vm283, %v717
      %750 = vst.msk [vmem:[%s261 + $0x38] sm:$0xff] %vm283, %v718
      %751 = vst.msk [vmem:[%s261 + $0x40] sm:$0xff] %vm283, %v719
      %752 = vst.msk [vmem:[%s261 + $0x48] sm:$0xff] %vm283, %v720
      %753 = vst.msk [vmem:[%s261 + $0x50] sm:$0xff] %vm283, %v721
      %754 = vst.msk [vmem:[%s261 + $0x58] sm:$0xff] %vm283, %v722
      %755 = vst.msk [vmem:[%s261 + $0x60] sm:$0xff] %vm283, %v723
      %756 = vst.msk [vmem:[%s261 + $0x68] sm:$0xff] %vm283, %v724
      %757 = vst.msk [vmem:[%s261 + $0x70] sm:$0xff] %vm283, %v725
      %758 = vst.msk [vmem:[%s261 + $0x78] sm:$0xff] %vm283, %v726
      %759 = vst.msk [vmem:[%s261 + $0x80] sm:$0xff] %vm283, %v727
      %760 = vst.msk [vmem:[%s261 + $0x88] sm:$0xff] %vm283, %v728
      %761 = vst.msk [vmem:[%s261 + $0x90] sm:$0xff] %vm283, %v729
      %762 = vst.msk [vmem:[%s261 + $0x98] sm:$0xff] %vm283, %v730
      %763 = vst.msk [vmem:[%s261 + $0xa0] sm:$0xff] %vm283, %v731
      %764 = vst.msk [vmem:[%s261 + $0xa8] sm:$0xff] %vm283, %v732
      %765 = vst.msk [vmem:[%s261 + $0xb0] sm:$0xff] %vm283, %v733
      %766 = vst.msk [vmem:[%s261 + $0xb8] sm:$0xff] %vm283, %v734
      %767 = vst.msk [vmem:[%s261 + $0xc0] sm:$0xff] %vm283, %v735
      %768 = vst.msk [vmem:[%s261 + $0xc8] sm:$0xff] %vm283, %v736
      %769 = vst.msk [vmem:[%s261 + $0xd0] sm:$0xff] %vm283, %v737
      %770 = vst.msk [vmem:[%s261 + $0xd8] sm:$0xff] %vm283, %v738
      %771 = vst.msk [vmem:[%s261 + $0xe0] sm:$0xff] %vm283, %v739
      %772 = vst.msk [vmem:[%s261 + $0xe8] sm:$0xff] %vm283, %v740
      %773 = vst.msk [vmem:[%s261 + $0xf0] sm:$0xff] %vm283, %v741
      %774 = vst.msk [vmem:[%s261 + $0xf8] sm:$0xff] %vm283, %v742
      %s775 = smul.u32 %s22, 16
      %s776 = sadd.s32 %s775, 1
      %s777 = smul.u32 %s776, 16
      %v778 = vld [vmem:[%s261] sm:$0xff]
      %v779 = vld [vmem:[%s261 + $0x8] sm:$0xff]
      %v780 = vld [vmem:[%s261 + $0x10] sm:$0xff]
      %v781 = vld [vmem:[%s261 + $0x18] sm:$0xff]
      %v782 = vld [vmem:[%s261 + $0x20] sm:$0xff]
      %v783 = vld [vmem:[%s261 + $0x28] sm:$0xff]
      %v784 = vld [vmem:[%s261 + $0x30] sm:$0xff]
      %v785 = vld [vmem:[%s261 + $0x38] sm:$0xff]
      %v786 = vld [vmem:[%s261 + $0x40] sm:$0xff]
      %v787 = vld [vmem:[%s261 + $0x48] sm:$0xff]
      %v788 = vld [vmem:[%s261 + $0x50] sm:$0xff]
      %v789 = vld [vmem:[%s261 + $0x58] sm:$0xff]
      %v790 = vld [vmem:[%s261 + $0x60] sm:$0xff]
      %v791 = vld [vmem:[%s261 + $0x68] sm:$0xff]
      %v792 = vld [vmem:[%s261 + $0x70] sm:$0xff]
      %v793 = vld [vmem:[%s261 + $0x78] sm:$0xff]
      %v794 = vld [vmem:[%s261 + $0x80] sm:$0xff]
      %v795 = vld [vmem:[%s261 + $0x88] sm:$0xff]
      %v796 = vld [vmem:[%s261 + $0x90] sm:$0xff]
      %v797 = vld [vmem:[%s261 + $0x98] sm:$0xff]
      %v798 = vld [vmem:[%s261 + $0xa0] sm:$0xff]
      %v799 = vld [vmem:[%s261 + $0xa8] sm:$0xff]
      %v800 = vld [vmem:[%s261 + $0xb0] sm:$0xff]
      %v801 = vld [vmem:[%s261 + $0xb8] sm:$0xff]
      %v802 = vld [vmem:[%s261 + $0xc0] sm:$0xff]
      %v803 = vld [vmem:[%s261 + $0xc8] sm:$0xff]
      %v804 = vld [vmem:[%s261 + $0xd0] sm:$0xff]
      %v805 = vld [vmem:[%s261 + $0xd8] sm:$0xff]
      %v806 = vld [vmem:[%s261 + $0xe0] sm:$0xff]
      %v807 = vld [vmem:[%s261 + $0xe8] sm:$0xff]
      %v808 = vld [vmem:[%s261 + $0xf0] sm:$0xff]
      %v809 = vld [vmem:[%s261 + $0xf8] sm:$0xff]
      %s810 = scalar_lea.vmem %s254, %s777
      %v811 = vld [vmem:[%s810] sm:$0xff]
      %v812 = vld [vmem:[%s810 + $0x8] sm:$0xff]
      %v813 = vld [vmem:[%s810 + $0x10] sm:$0xff]
      %v814 = vld [vmem:[%s810 + $0x18] sm:$0xff]
      %v815 = vld [vmem:[%s810 + $0x20] sm:$0xff]
      %v816 = vld [vmem:[%s810 + $0x28] sm:$0xff]
      %v817 = vld [vmem:[%s810 + $0x30] sm:$0xff]
      %v818 = vld [vmem:[%s810 + $0x38] sm:$0xff]
      %v819 = vld [vmem:[%s810 + $0x40] sm:$0xff]
      %v820 = vld [vmem:[%s810 + $0x48] sm:$0xff]
      %v821 = vld [vmem:[%s810 + $0x50] sm:$0xff]
      %v822 = vld [vmem:[%s810 + $0x58] sm:$0xff]
      %v823 = vld [vmem:[%s810 + $0x60] sm:$0xff]
      %v824 = vld [vmem:[%s810 + $0x68] sm:$0xff]
      %v825 = vld [vmem:[%s810 + $0x70] sm:$0xff]
      %v826 = vld [vmem:[%s810 + $0x78] sm:$0xff]
      %v827 = vld [vmem:[%s810 + $0x80] sm:$0xff]
      %v828 = vld [vmem:[%s810 + $0x88] sm:$0xff]
      %v829 = vld [vmem:[%s810 + $0x90] sm:$0xff]
      %v830 = vld [vmem:[%s810 + $0x98] sm:$0xff]
      %v831 = vld [vmem:[%s810 + $0xa0] sm:$0xff]
      %v832 = vld [vmem:[%s810 + $0xa8] sm:$0xff]
      %v833 = vld [vmem:[%s810 + $0xb0] sm:$0xff]
      %v834 = vld [vmem:[%s810 + $0xb8] sm:$0xff]
      %v835 = vld [vmem:[%s810 + $0xc0] sm:$0xff]
      %v836 = vld [vmem:[%s810 + $0xc8] sm:$0xff]
      %v837 = vld [vmem:[%s810 + $0xd0] sm:$0xff]
      %v838 = vld [vmem:[%s810 + $0xd8] sm:$0xff]
      %v839 = vld [vmem:[%s810 + $0xe0] sm:$0xff]
      %v840 = vld [vmem:[%s810 + $0xe8] sm:$0xff]
      %v841 = vld [vmem:[%s810 + $0xf0] sm:$0xff]
      %v842 = vld [vmem:[%s810 + $0xf8] sm:$0xff]
      %s843 = scalar_lea.vmem %s1, 24
      %v844 = vld [vmem:[%s843] sm:$0xff]
      %v845 = vld [vmem:[%s843 + $0x8] sm:$0xff]
      %v846 = vld [vmem:[%s843 + $0x10] sm:$0xf]
      %v848 = vsel %vm385, %v811, 0
      %v851 = vsel %vm385, %v812, 0
      %v854 = vsel %vm385, %v813, 0
      %v857 = vsel %vm385, %v814, 0
      %v860 = vsel %vm385, %v815, 0
      %v863 = vsel %vm385, %v816, 0
      %v866 = vsel %vm385, %v817, 0
      %v869 = vsel %vm385, %v818, 0
      %v872 = vsel %vm385, %v819, 0
      %v875 = vsel %vm385, %v820, 0
      %v878 = vsel %vm385, %v821, 0
      %v881 = vsel %vm385, %v822, 0
      %v884 = vsel %vm385, %v823, 0
      %v887 = vsel %vm385, %v824, 0
      %v890 = vsel %vm385, %v825, 0
      %v893 = vsel %vm385, %v826, 0
      %v896 = vsel %vm385, %v827, 0
      %v899 = vsel %vm385, %v828, 0
      %v902 = vsel %vm385, %v829, 0
      %v905 = vsel %vm385, %v830, 0
      %v908 = vsel %vm385, %v831, 0
      %v911 = vsel %vm385, %v832, 0
      %v914 = vsel %vm385, %v833, 0
      %v917 = vsel %vm385, %v834, 0
      %v920 = vsel %vm385, %v835, 0
      %v923 = vsel %vm385, %v836, 0
      %v926 = vsel %vm385, %v837, 0
      %v929 = vsel %vm385, %v838, 0
      %v932 = vsel %vm385, %v839, 0
      %v935 = vsel %vm385, %v840, 0
      %v938 = vsel %vm385, %v841, 0
      %v941 = vsel %vm385, %v842, 0
      %v944 = vsel %vm482, %v846, 0
      %946 = vmatprep.subr.mxu0 0.0
      %947 = vmatpush1.msra.mxu0 %v844
      %948 = vmatprep.subr.mxu0 0.0
      %949 = vmatpush1.msra.mxu0 %v845
      %950 = vmatprep.subr.mxu0 0.0
      %951 = vmatpush1.msra.mxu0 %v944
      %952 = vmatprep.subr.mxu0 0.0
      %953 = vmatpush1.msra.mxu0 0.0
      %954 = vmatprep.subr.mxu0 0.0
      %955 = vmatpush1.msra.mxu0 0.0
      %956 = vmatprep.subr.mxu0 0.0
      %957 = vmatpush1.msra.mxu0 0.0
      %958 = vmatprep.subr.mxu0 0.0
      %959 = vmatpush1.msra.mxu0 0.0
      %960 = vmatprep.subr.mxu0 0.0
      %961 = vmatpush1.msra.mxu0 0.0
      %962 = vmatprep.subr.mxu0 0.0
      %963 = vmatpush1.msra.mxu0 0.0
      %964 = vmatprep.subr.mxu0 0.0
      %965 = vmatpush1.msra.mxu0 0.0
      %966 = vmatprep.subr.mxu0 0.0
      %967 = vmatpush1.msra.mxu0 0.0
      %968 = vmatprep.subr.mxu0 0.0
      %969 = vmatpush1.msra.mxu0 0.0
      %970 = vmatprep.subr.mxu0 0.0
      %971 = vmatpush1.msra.mxu0 0.0
      %972 = vmatprep.subr.mxu0 0.0
      %973 = vmatpush1.msra.mxu0 0.0
      %974 = vmatprep.subr.mxu0 0.0
      %975 = vmatpush1.msra.mxu0 0.0
      %976 = vmatprep.subr.mxu0 0.0
      %977 = vmatpush1.msra.mxu0 0.0
      %978 = vmatprep.subr.mxu0 0.0
      %979 = vmatpush1.msra.mxu0 0.0
      %980 = vmatprep.subr.mxu0 0.0
      %981 = vmatpush1.msra.mxu0 0.0
      %982 = vmatprep.subr.mxu0 0.0
      %983 = vmatpush1.msra.mxu0 0.0
      %984 = vmatprep.subr.mxu0 0.0
      %985 = vmatpush1.msra.mxu0 0.0
      %986 = vmatprep.subr.mxu0 0.0
      %987 = vmatpush1.msra.mxu0 0.0
      %988 = vmatprep.subr.mxu0 0.0
      %989 = vmatpush1.msra.mxu0 0.0
      %990 = vmatprep.subr.mxu0 0.0
      %991 = vmatpush1.msra.mxu0 0.0
      %992 = vmatprep.subr.mxu0 0.0
      %993 = vmatpush1.msra.mxu0 0.0
      %994 = vmatprep.subr.mxu0 0.0
      %995 = vmatpush1.msra.mxu0 0.0
      %996 = vmatprep.subr.mxu0 0.0
      %997 = vmatpush1.msra.mxu0 0.0
      %998 = vmatprep.subr.mxu0 0.0
      %999 = vmatpush1.msra.mxu0 0.0
      %1000 = vmatprep.subr.mxu0 0.0
      %1001 = vmatpush1.msra.mxu0 0.0
      %1002 = vmatprep.subr.mxu0 0.0
      %1003 = vmatpush1.msra.mxu0 0.0
      %1004 = vmatprep.subr.mxu0 0.0
      %1005 = vmatpush1.msra.mxu0 0.0
      %1006 = vmatprep.subr.mxu0 0.0
      %1007 = vmatpush1.msra.mxu0 0.0
      %1008 = vmatprep.subr.mxu0 0.0
      %1009 = vmatpush1.msra.mxu0 0.0
      %1010 = vmatprep.mubr.f32.mxu0 0.0
      %1011 = vmatmul.mubr.f32.gmra.mrb[0].mxu0 %v848
      %v1012 = vpop.f32.mrb[0].mxu0
      %v1013 = vadd.f32 0.0, %v1012
      %v1014 = vpop.f32.mrb[0].mxu0
      %1015 = vmatprep.mubr.f32.mxu0 0.0
      %1016 = vmatmul.mubr.f32.gmra.mrb[0].mxu0 %v851
      %v1017 = vpop.f32.mrb[0].mxu0
      %v1018 = vadd.f32 0.0, %v1017
      %v1019 = vpop.f32.mrb[0].mxu0
      %1020 = vmatprep.mubr.f32.mxu0 0.0
      %1021 = vmatmul.mubr.f32.gmra.mrb[0].mxu0 %v854
      %v1022 = vpop.f32.mrb[0].mxu0
      %v1023 = vadd.f32 0.0, %v1022
      %v1024 = vpop.f32.mrb[0].mxu0
      %1025 = vmatprep.mubr.f32.mxu0 0.0
      %1026 = vmatmul.mubr.f32.gmra.mrb[0].mxu0 %v857
      %v1027 = vpop.f32.mrb[0].mxu0
      %v1028 = vadd.f32 0.0, %v1027
      %v1029 = vpop.f32.mrb[0].mxu0
      %1030 = vmatprep.mubr.f32.mxu0 0.0
      %1031 = vmatmul.mubr.f32.gmra.mrb[0].mxu0 %v860
      %v1032 = vpop.f32.mrb[0].mxu0
      %v1033 = vadd.f32 0.0, %v1032
      %v1034 = vpop.f32.mrb[0].mxu0
      %1035 = vmatprep.mubr.f32.mxu0 0.0
      %1036 = vmatmul.mubr.f32.gmra.mrb[0].mxu0 %v863
      %v1037 = vpop.f32.mrb[0].mxu0
      %v1038 = vadd.f32 0.0, %v1037
      %v1039 = vpop.f32.mrb[0].mxu0
      %1040 = vmatprep.mubr.f32.mxu0 0.0
      %1041 = vmatmul.mubr.f32.gmra.mrb[0].mxu0 %v866
      %v1042 = vpop.f32.mrb[0].mxu0
      %v1043 = vadd.f32 0.0, %v1042
      %v1044 = vpop.f32.mrb[0].mxu0
      %1045 = vmatprep.mubr.f32.mxu0 0.0
      %1046 = vmatmul.mubr.f32.gmra.mrb[0].mxu0 %v869
      %v1047 = vpop.f32.mrb[0].mxu0
      %v1048 = vadd.f32 0.0, %v1047
      %v1049 = vpop.f32.mrb[0].mxu0
      %1050 = vmatprep.mubr.f32.mxu0 0.0
      %1051 = vmatmul.mubr.f32.gmra.mrb[0].mxu0 %v872
      %v1052 = vpop.f32.mrb[0].mxu0
      %v1053 = vadd.f32 0.0, %v1052
      %v1054 = vpop.f32.mrb[0].mxu0
      %1055 = vmatprep.mubr.f32.mxu0 0.0
      %1056 = vmatmul.mubr.f32.gmra.mrb[0].mxu0 %v875
      %v1057 = vpop.f32.mrb[0].mxu0
      %v1058 = vadd.f32 0.0, %v1057
      %v1059 = vpop.f32.mrb[0].mxu0
      %1060 = vmatprep.mubr.f32.mxu0 0.0
      %1061 = vmatmul.mubr.f32.gmra.mrb[0].mxu0 %v878
      %v1062 = vpop.f32.mrb[0].mxu0
      %v1063 = vadd.f32 0.0, %v1062
      %v1064 = vpop.f32.mrb[0].mxu0
      %1065 = vmatprep.mubr.f32.mxu0 0.0
      %1066 = vmatmul.mubr.f32.gmra.mrb[0].mxu0 %v881
      %v1067 = vpop.f32.mrb[0].mxu0
      %v1068 = vadd.f32 0.0, %v1067
      %v1069 = vpop.f32.mrb[0].mxu0
      %1070 = vmatprep.mubr.f32.mxu0 0.0
      %1071 = vmatmul.mubr.f32.gmra.mrb[0].mxu0 %v884
      %v1072 = vpop.f32.mrb[0].mxu0
      %v1073 = vadd.f32 0.0, %v1072
      %v1074 = vpop.f32.mrb[0].mxu0
      %1075 = vmatprep.mubr.f32.mxu0 0.0
      %1076 = vmatmul.mubr.f32.gmra.mrb[0].mxu0 %v887
      %v1077 = vpop.f32.mrb[0].mxu0
      %v1078 = vadd.f32 0.0, %v1077
      %v1079 = vpop.f32.mrb[0].mxu0
      %1080 = vmatprep.mubr.f32.mxu0 0.0
      %1081 = vmatmul.mubr.f32.gmra.mrb[0].mxu0 %v890
      %v1082 = vpop.f32.mrb[0].mxu0
      %v1083 = vadd.f32 0.0, %v1082
      %v1084 = vpop.f32.mrb[0].mxu0
      %1085 = vmatprep.mubr.f32.mxu0 0.0
      %1086 = vmatmul.mubr.f32.gmra.mrb[0].mxu0 %v893
      %v1087 = vpop.f32.mrb[0].mxu0
      %v1088 = vadd.f32 0.0, %v1087
      %v1089 = vpop.f32.mrb[0].mxu0
      %1090 = vmatprep.mubr.f32.mxu0 0.0
      %1091 = vmatmul.mubr.f32.gmra.mrb[0].mxu0 %v896
      %v1092 = vpop.f32.mrb[0].mxu0
      %v1093 = vadd.f32 0.0, %v1092
      %v1094 = vpop.f32.mrb[0].mxu0
      %1095 = vmatprep.mubr.f32.mxu0 0.0
      %1096 = vmatmul.mubr.f32.gmra.mrb[0].mxu0 %v899
      %v1097 = vpop.f32.mrb[0].mxu0
      %v1098 = vadd.f32 0.0, %v1097
      %v1099 = vpop.f32.mrb[0].mxu0
      %1100 = vmatprep.mubr.f32.mxu0 0.0
      %1101 = vmatmul.mubr.f32.gmra.mrb[0].mxu0 %v902
      %v1102 = vpop.f32.mrb[0].mxu0
      %v1103 = vadd.f32 0.0, %v1102
      %v1104 = vpop.f32.mrb[0].mxu0
      %1105 = vmatprep.mubr.f32.mxu0 0.0
      %1106 = vmatmul.mubr.f32.gmra.mrb[0].mxu0 %v905
      %v1107 = vpop.f32.mrb[0].mxu0
      %v1108 = vadd.f32 0.0, %v1107
      %v1109 = vpop.f32.mrb[0].mxu0
      %1110 = vmatprep.mubr.f32.mxu0 0.0
      %1111 = vmatmul.mubr.f32.gmra.mrb[0].mxu0 %v908
      %v1112 = vpop.f32.mrb[0].mxu0
      %v1113 = vadd.f32 0.0, %v1112
      %v1114 = vpop.f32.mrb[0].mxu0
      %1115 = vmatprep.mubr.f32.mxu0 0.0
      %1116 = vmatmul.mubr.f32.gmra.mrb[0].mxu0 %v911
      %v1117 = vpop.f32.mrb[0].mxu0
      %v1118 = vadd.f32 0.0, %v1117
      %v1119 = vpop.f32.mrb[0].mxu0
      %1120 = vmatprep.mubr.f32.mxu0 0.0
      %1121 = vmatmul.mubr.f32.gmra.mrb[0].mxu0 %v914
      %v1122 = vpop.f32.mrb[0].mxu0
      %v1123 = vadd.f32 0.0, %v1122
      %v1124 = vpop.f32.mrb[0].mxu0
      %1125 = vmatprep.mubr.f32.mxu0 0.0
      %1126 = vmatmul.mubr.f32.gmra.mrb[0].mxu0 %v917
      %v1127 = vpop.f32.mrb[0].mxu0
      %v1128 = vadd.f32 0.0, %v1127
      %v1129 = vpop.f32.mrb[0].mxu0
      %1130 = vmatprep.mubr.f32.mxu0 0.0
      %1131 = vmatmul.mubr.f32.gmra.mrb[0].mxu0 %v920
      %v1132 = vpop.f32.mrb[0].mxu0
      %v1133 = vadd.f32 0.0, %v1132
      %v1134 = vpop.f32.mrb[0].mxu0
      %1135 = vmatprep.mubr.f32.mxu0 0.0
      %1136 = vmatmul.mubr.f32.gmra.mrb[0].mxu0 %v923
      %v1137 = vpop.f32.mrb[0].mxu0
      %v1138 = vadd.f32 0.0, %v1137
      %v1139 = vpop.f32.mrb[0].mxu0
      %1140 = vmatprep.mubr.f32.mxu0 0.0
      %1141 = vmatmul.mubr.f32.gmra.mrb[0].mxu0 %v926
      %v1142 = vpop.f32.mrb[0].mxu0
      %v1143 = vadd.f32 0.0, %v1142
      %v1144 = vpop.f32.mrb[0].mxu0
      %1145 = vmatprep.mubr.f32.mxu0 0.0
      %1146 = vmatmul.mubr.f32.gmra.mrb[0].mxu0 %v929
      %v1147 = vpop.f32.mrb[0].mxu0
      %v1148 = vadd.f32 0.0, %v1147
      %v1149 = vpop.f32.mrb[0].mxu0
      %1150 = vmatprep.mubr.f32.mxu0 0.0
      %1151 = vmatmul.mubr.f32.gmra.mrb[0].mxu0 %v932
      %v1152 = vpop.f32.mrb[0].mxu0
      %v1153 = vadd.f32 0.0, %v1152
      %v1154 = vpop.f32.mrb[0].mxu0
      %1155 = vmatprep.mubr.f32.mxu0 0.0
      %1156 = vmatmul.mubr.f32.gmra.mrb[0].mxu0 %v935
      %v1157 = vpop.f32.mrb[0].mxu0
      %v1158 = vadd.f32 0.0, %v1157
      %v1159 = vpop.f32.mrb[0].mxu0
      %1160 = vmatprep.mubr.f32.mxu0 0.0
      %1161 = vmatmul.mubr.f32.gmra.mrb[0].mxu0 %v938
      %v1162 = vpop.f32.mrb[0].mxu0
      %v1163 = vadd.f32 0.0, %v1162
      %v1164 = vpop.f32.mrb[0].mxu0
      %1165 = vmatprep.mubr.f32.mxu0 0.0
      %1166 = vmatmul.mubr.f32.gmra.mrb[0].mxu0 %v941
      %v1167 = vpop.f32.mrb[0].mxu0
      %v1168 = vadd.f32 0.0, %v1167
      %v1169 = vpop.f32.mrb[0].mxu0
      %1170 = vdwg.mxu0
      %v1171 = vadd.f32 %v778, %v1013
      %v1172 = vadd.f32 %v779, %v1018
      %v1173 = vadd.f32 %v780, %v1023
      %v1174 = vadd.f32 %v781, %v1028
      %v1175 = vadd.f32 %v782, %v1033
      %v1176 = vadd.f32 %v783, %v1038
      %v1177 = vadd.f32 %v784, %v1043
      %v1178 = vadd.f32 %v785, %v1048
      %v1179 = vadd.f32 %v786, %v1053
      %v1180 = vadd.f32 %v787, %v1058
      %v1181 = vadd.f32 %v788, %v1063
      %v1182 = vadd.f32 %v789, %v1068
      %v1183 = vadd.f32 %v790, %v1073
      %v1184 = vadd.f32 %v791, %v1078
      %v1185 = vadd.f32 %v792, %v1083
      %v1186 = vadd.f32 %v793, %v1088
      %v1187 = vadd.f32 %v794, %v1093
      %v1188 = vadd.f32 %v795, %v1098
      %v1189 = vadd.f32 %v796, %v1103
      %v1190 = vadd.f32 %v797, %v1108
      %v1191 = vadd.f32 %v798, %v1113
      %v1192 = vadd.f32 %v799, %v1118
      %v1193 = vadd.f32 %v800, %v1123
      %v1194 = vadd.f32 %v801, %v1128
      %v1195 = vadd.f32 %v802, %v1133
      %v1196 = vadd.f32 %v803, %v1138
      %v1197 = vadd.f32 %v804, %v1143
      %v1198 = vadd.f32 %v805, %v1148
      %v1199 = vadd.f32 %v806, %v1153
      %v1200 = vadd.f32 %v807, %v1158
      %v1201 = vadd.f32 %v808, %v1163
      %v1202 = vadd.f32 %v809, %v1168
      %1203 = vst.msk [vmem:[%s261] sm:$0xff] %vm283, %v1171
      %1204 = vst.msk [vmem:[%s261 + $0x8] sm:$0xff] %vm283, %v1172
      %1205 = vst.msk [vmem:[%s261 + $0x10] sm:$0xff] %vm283, %v1173
      %1206 = vst.msk [vmem:[%s261 + $0x18] sm:$0xff] %vm283, %v1174
      %1207 = vst.msk [vmem:[%s261 + $0x20] sm:$0xff] %vm283, %v1175
      %1208 = vst.msk [vmem:[%s261 + $0x28] sm:$0xff] %vm283, %v1176
      %1209 = vst.msk [vmem:[%s261 + $0x30] sm:$0xff] %vm283, %v1177
      %1210 = vst.msk [vmem:[%s261 + $0x38] sm:$0xff] %vm283, %v1178
      %1211 = vst.msk [vmem:[%s261 + $0x40] sm:$0xff] %vm283, %v1179
      %1212 = vst.msk [vmem:[%s261 + $0x48] sm:$0xff] %vm283, %v1180
      %1213 = vst.msk [vmem:[%s261 + $0x50] sm:$0xff] %vm283, %v1181
      %1214 = vst.msk [vmem:[%s261 + $0x58] sm:$0xff] %vm283, %v1182
      %1215 = vst.msk [vmem:[%s261 + $0x60] sm:$0xff] %vm283, %v1183
      %1216 = vst.msk [vmem:[%s261 + $0x68] sm:$0xff] %vm283, %v1184
      %1217 = vst.msk [vmem:[%s261 + $0x70] sm:$0xff] %vm283, %v1185
      %1218 = vst.msk [vmem:[%s261 + $0x78] sm:$0xff] %vm283, %v1186
      %1219 = vst.msk [vmem:[%s261 + $0x80] sm:$0xff] %vm283, %v1187
      %1220 = vst.msk [vmem:[%s261 + $0x88] sm:$0xff] %vm283, %v1188
      %1221 = vst.msk [vmem:[%s261 + $0x90] sm:$0xff] %vm283, %v1189
      %1222 = vst.msk [vmem:[%s261 + $0x98] sm:$0xff] %vm283, %v1190
      %1223 = vst.msk [vmem:[%s261 + $0xa0] sm:$0xff] %vm283, %v1191
      %1224 = vst.msk [vmem:[%s261 + $0xa8] sm:$0xff] %vm283, %v1192
      %1225 = vst.msk [vmem:[%s261 + $0xb0] sm:$0xff] %vm283, %v1193
      %1226 = vst.msk [vmem:[%s261 + $0xb8] sm:$0xff] %vm283, %v1194
      %1227 = vst.msk [vmem:[%s261 + $0xc0] sm:$0xff] %vm283, %v1195
      %1228 = vst.msk [vmem:[%s261 + $0xc8] sm:$0xff] %vm283, %v1196
      %1229 = vst.msk [vmem:[%s261 + $0xd0] sm:$0xff] %vm283, %v1197
      %1230 = vst.msk [vmem:[%s261 + $0xd8] sm:$0xff] %vm283, %v1198
      %1231 = vst.msk [vmem:[%s261 + $0xe0] sm:$0xff] %vm283, %v1199
      %1232 = vst.msk [vmem:[%s261 + $0xe8] sm:$0xff] %vm283, %v1200
      %1233 = vst.msk [vmem:[%s261 + $0xf0] sm:$0xff] %vm283, %v1201
      %1234 = vst.msk [vmem:[%s261 + $0xf8] sm:$0xff] %vm283, %v1202
      %s1235 = sadd.s32 %s775, 2
      %s1236 = smul.u32 %s1235, 16
      %v1237 = vld [vmem:[%s261] sm:$0xff]
      %v1238 = vld [vmem:[%s261 + $0x8] sm:$0xff]
      %v1239 = vld [vmem:[%s261 + $0x10] sm:$0xff]
      %v1240 = vld [vmem:[%s261 + $0x18] sm:$0xff]
      %v1241 = vld [vmem:[%s261 + $0x20] sm:$0xff]
      %v1242 = vld [vmem:[%s261 + $0x28] sm:$0xff]
      %v1243 = vld [vmem:[%s261 + $0x30] sm:$0xff]
      %v1244 = vld [vmem:[%s261 + $0x38] sm:$0xff]
      %v1245 = vld [vmem:[%s261 + $0x40] sm:$0xff]
      %v1246 = vld [vmem:[%s261 + $0x48] sm:$0xff]
      %v1247 = vld [vmem:[%s261 + $0x50] sm:$0xff]
      %v1248 = vld [vmem:[%s261 + $0x58] sm:$0xff]
      %v1249 = vld [vmem:[%s261 + $0x60] sm:$0xff]
      %v1250 = vld [vmem:[%s261 + $0x68] sm:$0xff]
      %v1251 = vld [vmem:[%s261 + $0x70] sm:$0xff]
      %v1252 = vld [vmem:[%s261 + $0x78] sm:$0xff]
      %v1253 = vld [vmem:[%s261 + $0x80] sm:$0xff]
      %v1254 = vld [vmem:[%s261 + $0x88] sm:$0xff]
      %v1255 = vld [vmem:[%s261 + $0x90] sm:$0xff]
      %v1256 = vld [vmem:[%s261 + $0x98] sm:$0xff]
      %v1257 = vld [vmem:[%s261 + $0xa0] sm:$0xff]
      %v1258 = vld [vmem:[%s261 + $0xa8] sm:$0xff]
      %v1259 = vld [vmem:[%s261 + $0xb0] sm:$0xff]
      %v1260 = vld [vmem:[%s261 + $0xb8] sm:$0xff]
      %v1261 = vld [vmem:[%s261 + $0xc0] sm:$0xff]
      %v1262 = vld [vmem:[%s261 + $0xc8] sm:$0xff]
      %v1263 = vld [vmem:[%s261 + $0xd0] sm:$0xff]
      %v1264 = vld [vmem:[%s261 + $0xd8] sm:$0xff]
      %v1265 = vld [vmem:[%s261 + $0xe0] sm:$0xff]
      %v1266 = vld [vmem:[%s261 + $0xe8] sm:$0xff]
      %v1267 = vld [vmem:[%s261 + $0xf0] sm:$0xff]
      %v1268 = vld [vmem:[%s261 + $0xf8] sm:$0xff]
      %s1269 = scalar_lea.vmem %s254, %s1236
      %v1270 = vld [vmem:[%s1269] sm:$0xff]
      %v1271 = vld [vmem:[%s1269 + $0x8] sm:$0xff]
      %v1272 = vld [vmem:[%s1269 + $0x10] sm:$0xff]
      %v1273 = vld [vmem:[%s1269 + $0x18] sm:$0xff]
      %v1274 = vld [vmem:[%s1269 + $0x20] sm:$0xff]
      %v1275 = vld [vmem:[%s1269 + $0x28] sm:$0xff]
      %v1276 = vld [vmem:[%s1269 + $0x30] sm:$0xff]
      %v1277 = vld [vmem:[%s1269 + $0x38] sm:$0xff]
      %v1278 = vld [vmem:[%s1269 + $0x40] sm:$0xff]
      %v1279 = vld [vmem:[%s1269 + $0x48] sm:$0xff]
      %v1280 = vld [vmem:[%s1269 + $0x50] sm:$0xff]
      %v1281 = vld [vmem:[%s1269 + $0x58] sm:$0xff]
      %v1282 = vld [vmem:[%s1269 + $0x60] sm:$0xff]
      %v1283 = vld [vmem:[%s1269 + $0x68] sm:$0xff]
      %v1284 = vld [vmem:[%s1269 + $0x70] sm:$0xff]
      %v1285 = vld [vmem:[%s1269 + $0x78] sm:$0xff]
      %v1286 = vld [vmem:[%s1269 + $0x80] sm:$0xff]
      %v1287 = vld [vmem:[%s1269 + $0x88] sm:$0xff]
      %v1288 = vld [vmem:[%s1269 + $0x90] sm:$0xff]
      %v1289 = vld [vmem:[%s1269 + $0x98] sm:$0xff]
      %v1290 = vld [vmem:[%s1269 + $0xa0] sm:$0xff]
      %v1291 = vld [vmem:[%s1269 + $0xa8] sm:$0xff]
      %v1292 = vld [vmem:[%s1269 + $0xb0] sm:$0xff]
      %v1293 = vld [vmem:[%s1269 + $0xb8] sm:$0xff]
      %v1294 = vld [vmem:[%s1269 + $0xc0] sm:$0xff]
      %v1295 = vld [vmem:[%s1269 + $0xc8] sm:$0xff]
      %v1296 = vld [vmem:[%s1269 + $0xd0] sm:$0xff]
      %v1297 = vld [vmem:[%s1269 + $0xd8] sm:$0xff]
      %v1298 = vld [vmem:[%s1269 + $0xe0] sm:$0xff]
      %v1299 = vld [vmem:[%s1269 + $0xe8] sm:$0xff]
      %v1300 = vld [vmem:[%s1269 + $0xf0] sm:$0xff]
      %v1301 = vld [vmem:[%s1269 + $0xf8] sm:$0xff]
      %s1302 = scalar_lea.vmem %s1, 48
      %v1303 = vld [vmem:[%s1302] sm:$0xff]
      %v1304 = vld [vmem:[%s1302 + $0x8] sm:$0xff]
      %v1305 = vld [vmem:[%s1302 + $0x10] sm:$0xf]
      %v1307 = vsel %vm385, %v1270, 0
      %v1310 = vsel %vm385, %v1271, 0
      %v1313 = vsel %vm385, %v1272, 0
      %v1316 = vsel %vm385, %v1273, 0
      %v1319 = vsel %vm385, %v1274, 0
      %v1322 = vsel %vm385, %v1275, 0
      %v1325 = vsel %vm385, %v1276, 0
      %v1328 = vsel %vm385, %v1277, 0
      %v1331 = vsel %vm385, %v1278, 0
      %v1334 = vsel %vm385, %v1279, 0
      %v1337 = vsel %vm385, %v1280, 0
      %v1340 = vsel %vm385, %v1281, 0
      %v1343 = vsel %vm385, %v1282, 0
      %v1346 = vsel %vm385, %v1283, 0
      %v1349 = vsel %vm385, %v1284, 0
      %v1352 = vsel %vm385, %v1285, 0
      %v1355 = vsel %vm385, %v1286, 0
      %v1358 = vsel %vm385, %v1287, 0
      %v1361 = vsel %vm385, %v1288, 0
      %v1364 = vsel %vm385, %v1289, 0
      %v1367 = vsel %vm385, %v1290, 0
      %v1370 = vsel %vm385, %v1291, 0
      %v1373 = vsel %vm385, %v1292, 0
      %v1376 = vsel %vm385, %v1293, 0
      %v1379 = vsel %vm385, %v1294, 0
      %v1382 = vsel %vm385, %v1295, 0
      %v1385 = vsel %vm385, %v1296, 0
      %v1388 = vsel %vm385, %v1297, 0
      %v1391 = vsel %vm385, %v1298, 0
      %v1394 = vsel %vm385, %v1299, 0
      %v1397 = vsel %vm385, %v1300, 0
      %v1400 = vsel %vm385, %v1301, 0
      %v1403 = vsel %vm482, %v1305, 0
      %1405 = vmatprep.subr.mxu0 0.0
      %1406 = vmatpush1.msra.mxu0 %v1303
      %1407 = vmatprep.subr.mxu0 0.0
      %1408 = vmatpush1.msra.mxu0 %v1304
      %1409 = vmatprep.subr.mxu0 0.0
      %1410 = vmatpush1.msra.mxu0 %v1403
      %1411 = vmatprep.subr.mxu0 0.0
      %1412 = vmatpush1.msra.mxu0 0.0
      %1413 = vmatprep.subr.mxu0 0.0
      %1414 = vmatpush1.msra.mxu0 0.0
      %1415 = vmatprep.subr.mxu0 0.0
      %1416 = vmatpush1.msra.mxu0 0.0
      %1417 = vmatprep.subr.mxu0 0.0
      %1418 = vmatpush1.msra.mxu0 0.0
      %1419 = vmatprep.subr.mxu0 0.0
      %1420 = vmatpush1.msra.mxu0 0.0
      %1421 = vmatprep.subr.mxu0 0.0
      %1422 = vmatpush1.msra.mxu0 0.0
      %1423 = vmatprep.subr.mxu0 0.0
      %1424 = vmatpush1.msra.mxu0 0.0
      %1425 = vmatprep.subr.mxu0 0.0
      %1426 = vmatpush1.msra.mxu0 0.0
      %1427 = vmatprep.subr.mxu0 0.0
      %1428 = vmatpush1.msra.mxu0 0.0
      %1429 = vmatprep.subr.mxu0 0.0
      %1430 = vmatpush1.msra.mxu0 0.0
      %1431 = vmatprep.subr.mxu0 0.0
      %1432 = vmatpush1.msra.mxu0 0.0
      %1433 = vmatprep.subr.mxu0 0.0
      %1434 = vmatpush1.msra.mxu0 0.0
      %1435 = vmatprep.subr.mxu0 0.0
      %1436 = vmatpush1.msra.mxu0 0.0
      %1437 = vmatprep.subr.mxu0 0.0
      %1438 = vmatpush1.msra.mxu0 0.0
      %1439 = vmatprep.subr.mxu0 0.0
      %1440 = vmatpush1.msra.mxu0 0.0
      %1441 = vmatprep.subr.mxu0 0.0
      %1442 = vmatpush1.msra.mxu0 0.0
      %1443 = vmatprep.subr.mxu0 0.0
      %1444 = vmatpush1.msra.mxu0 0.0
      %1445 = vmatprep.subr.mxu0 0.0
      %1446 = vmatpush1.msra.mxu0 0.0
      %1447 = vmatprep.subr.mxu0 0.0
      %1448 = vmatpush1.msra.mxu0 0.0
      %1449 = vmatprep.subr.mxu0 0.0
      %1450 = vmatpush1.msra.mxu0 0.0
      %1451 = vmatprep.subr.mxu0 0.0
      %1452 = vmatpush1.msra.mxu0 0.0
      %1453 = vmatprep.subr.mxu0 0.0
      %1454 = vmatpush1.msra.mxu0 0.0
      %1455 = vmatprep.subr.mxu0 0.0
      %1456 = vmatpush1.msra.mxu0 0.0
      %1457 = vmatprep.subr.mxu0 0.0
      %1458 = vmatpush1.msra.mxu0 0.0
      %1459 = vmatprep.subr.mxu0 0.0
      %1460 = vmatpush1.msra.mxu0 0.0
      %1461 = vmatprep.subr.mxu0 0.0
      %1462 = vmatpush1.msra.mxu0 0.0
      %1463 = vmatprep.subr.mxu0 0.0
      %1464 = vmatpush1.msra.mxu0 0.0
      %1465 = vmatprep.subr.mxu0 0.0
      %1466 = vmatpush1.msra.mxu0 0.0
      %1467 = vmatprep.subr.mxu0 0.0
      %1468 = vmatpush1.msra.mxu0 0.0
      %1469 = vmatprep.mubr.f32.mxu0 0.0
      %1470 = vmatmul.mubr.f32.gmra.mrb[0].mxu0 %v1307
      %v1471 = vpop.f32.mrb[0].mxu0
      %v1472 = vadd.f32 0.0, %v1471
      %v1473 = vpop.f32.mrb[0].mxu0
      %1474 = vmatprep.mubr.f32.mxu0 0.0
      %1475 = vmatmul.mubr.f32.gmra.mrb[0].mxu0 %v1310
      %v1476 = vpop.f32.mrb[0].mxu0
      %v1477 = vadd.f32 0.0, %v1476
      %v1478 = vpop.f32.mrb[0].mxu0
      %1479 = vmatprep.mubr.f32.mxu0 0.0
      %1480 = vmatmul.mubr.f32.gmra.mrb[0].mxu0 %v1313
      %v1481 = vpop.f32.mrb[0].mxu0
      %v1482 = vadd.f32 0.0, %v1481
      %v1483 = vpop.f32.mrb[0].mxu0
      %1484 = vmatprep.mubr.f32.mxu0 0.0
      %1485 = vmatmul.mubr.f32.gmra.mrb[0].mxu0 %v1316
      %v1486 = vpop.f32.mrb[0].mxu0
      %v1487 = vadd.f32 0.0, %v1486
      %v1488 = vpop.f32.mrb[0].mxu0
      %1489 = vmatprep.mubr.f32.mxu0 0.0
      %1490 = vmatmul.mubr.f32.gmra.mrb[0].mxu0 %v1319
      %v1491 = vpop.f32.mrb[0].mxu0
      %v1492 = vadd.f32 0.0, %v1491
      %v1493 = vpop.f32.mrb[0].mxu0
      %1494 = vmatprep.mubr.f32.mxu0 0.0
      %1495 = vmatmul.mubr.f32.gmra.mrb[0].mxu0 %v1322
      %v1496 = vpop.f32.mrb[0].mxu0
      %v1497 = vadd.f32 0.0, %v1496
      %v1498 = vpop.f32.mrb[0].mxu0
      %1499 = vmatprep.mubr.f32.mxu0 0.0
      %1500 = vmatmul.mubr.f32.gmra.mrb[0].mxu0 %v1325
      %v1501 = vpop.f32.mrb[0].mxu0
      %v1502 = vadd.f32 0.0, %v1501
      %v1503 = vpop.f32.mrb[0].mxu0
      %1504 = vmatprep.mubr.f32.mxu0 0.0
      %1505 = vmatmul.mubr.f32.gmra.mrb[0].mxu0 %v1328
      %v1506 = vpop.f32.mrb[0].mxu0
      %v1507 = vadd.f32 0.0, %v1506
      %v1508 = vpop.f32.mrb[0].mxu0
      %1509 = vmatprep.mubr.f32.mxu0 0.0
      %1510 = vmatmul.mubr.f32.gmra.mrb[0].mxu0 %v1331
      %v1511 = vpop.f32.mrb[0].mxu0
      %v1512 = vadd.f32 0.0, %v1511
      %v1513 = vpop.f32.mrb[0].mxu0
      %1514 = vmatprep.mubr.f32.mxu0 0.0
      %1515 = vmatmul.mubr.f32.gmra.mrb[0].mxu0 %v1334
      %v1516 = vpop.f32.mrb[0].mxu0
      %v1517 = vadd.f32 0.0, %v1516
      %v1518 = vpop.f32.mrb[0].mxu0
      %1519 = vmatprep.mubr.f32.mxu0 0.0
      %1520 = vmatmul.mubr.f32.gmra.mrb[0].mxu0 %v1337
      %v1521 = vpop.f32.mrb[0].mxu0
      %v1522 = vadd.f32 0.0, %v1521
      %v1523 = vpop.f32.mrb[0].mxu0
      %1524 = vmatprep.mubr.f32.mxu0 0.0
      %1525 = vmatmul.mubr.f32.gmra.mrb[0].mxu0 %v1340
      %v1526 = vpop.f32.mrb[0].mxu0
      %v1527 = vadd.f32 0.0, %v1526
      %v1528 = vpop.f32.mrb[0].mxu0
      %1529 = vmatprep.mubr.f32.mxu0 0.0
      %1530 = vmatmul.mubr.f32.gmra.mrb[0].mxu0 %v1343
      %v1531 = vpop.f32.mrb[0].mxu0
      %v1532 = vadd.f32 0.0, %v1531
      %v1533 = vpop.f32.mrb[0].mxu0
      %1534 = vmatprep.mubr.f32.mxu0 0.0
      %1535 = vmatmul.mubr.f32.gmra.mrb[0].mxu0 %v1346
      %v1536 = vpop.f32.mrb[0].mxu0
      %v1537 = vadd.f32 0.0, %v1536
      %v1538 = vpop.f32.mrb[0].mxu0
      %1539 = vmatprep.mubr.f32.mxu0 0.0
      %1540 = vmatmul.mubr.f32.gmra.mrb[0].mxu0 %v1349
      %v1541 = vpop.f32.mrb[0].mxu0
      %v1542 = vadd.f32 0.0, %v1541
      %v1543 = vpop.f32.mrb[0].mxu0
      %1544 = vmatprep.mubr.f32.mxu0 0.0
      %1545 = vmatmul.mubr.f32.gmra.mrb[0].mxu0 %v1352
      %v1546 = vpop.f32.mrb[0].mxu0
      %v1547 = vadd.f32 0.0, %v1546
      %v1548 = vpop.f32.mrb[0].mxu0
      %1549 = vmatprep.mubr.f32.mxu0 0.0
      %1550 = vmatmul.mubr.f32.gmra.mrb[0].mxu0 %v1355
      %v1551 = vpop.f32.mrb[0].mxu0
      %v1552 = vadd.f32 0.0, %v1551
      %v1553 = vpop.f32.mrb[0].mxu0
      %1554 = vmatprep.mubr.f32.mxu0 0.0
      %1555 = vmatmul.mubr.f32.gmra.mrb[0].mxu0 %v1358
      %v1556 = vpop.f32.mrb[0].mxu0
      %v1557 = vadd.f32 0.0, %v1556
      %v1558 = vpop.f32.mrb[0].mxu0
      %1559 = vmatprep.mubr.f32.mxu0 0.0
      %1560 = vmatmul.mubr.f32.gmra.mrb[0].mxu0 %v1361
      %v1561 = vpop.f32.mrb[0].mxu0
      %v1562 = vadd.f32 0.0, %v1561
      %v1563 = vpop.f32.mrb[0].mxu0
      %1564 = vmatprep.mubr.f32.mxu0 0.0
      %1565 = vmatmul.mubr.f32.gmra.mrb[0].mxu0 %v1364
      %v1566 = vpop.f32.mrb[0].mxu0
      %v1567 = vadd.f32 0.0, %v1566
      %v1568 = vpop.f32.mrb[0].mxu0
      %1569 = vmatprep.mubr.f32.mxu0 0.0
      %1570 = vmatmul.mubr.f32.gmra.mrb[0].mxu0 %v1367
      %v1571 = vpop.f32.mrb[0].mxu0
      %v1572 = vadd.f32 0.0, %v1571
      %v1573 = vpop.f32.mrb[0].mxu0
      %1574 = vmatprep.mubr.f32.mxu0 0.0
      %1575 = vmatmul.mubr.f32.gmra.mrb[0].mxu0 %v1370
      %v1576 = vpop.f32.mrb[0].mxu0
      %v1577 = vadd.f32 0.0, %v1576
      %v1578 = vpop.f32.mrb[0].mxu0
      %1579 = vmatprep.mubr.f32.mxu0 0.0
      %1580 = vmatmul.mubr.f32.gmra.mrb[0].mxu0 %v1373
      %v1581 = vpop.f32.mrb[0].mxu0
      %v1582 = vadd.f32 0.0, %v1581
      %v1583 = vpop.f32.mrb[0].mxu0
      %1584 = vmatprep.mubr.f32.mxu0 0.0
      %1585 = vmatmul.mubr.f32.gmra.mrb[0].mxu0 %v1376
      %v1586 = vpop.f32.mrb[0].mxu0
      %v1587 = vadd.f32 0.0, %v1586
      %v1588 = vpop.f32.mrb[0].mxu0
      %1589 = vmatprep.mubr.f32.mxu0 0.0
      %1590 = vmatmul.mubr.f32.gmra.mrb[0].mxu0 %v1379
      %v1591 = vpop.f32.mrb[0].mxu0
      %v1592 = vadd.f32 0.0, %v1591
      %v1593 = vpop.f32.mrb[0].mxu0
      %1594 = vmatprep.mubr.f32.mxu0 0.0
      %1595 = vmatmul.mubr.f32.gmra.mrb[0].mxu0 %v1382
      %v1596 = vpop.f32.mrb[0].mxu0
      %v1597 = vadd.f32 0.0, %v1596
      %v1598 = vpop.f32.mrb[0].mxu0
      %1599 = vmatprep.mubr.f32.mxu0 0.0
      %1600 = vmatmul.mubr.f32.gmra.mrb[0].mxu0 %v1385
      %v1601 = vpop.f32.mrb[0].mxu0
      %v1602 = vadd.f32 0.0, %v1601
      %v1603 = vpop.f32.mrb[0].mxu0
      %1604 = vmatprep.mubr.f32.mxu0 0.0
      %1605 = vmatmul.mubr.f32.gmra.mrb[0].mxu0 %v1388
      %v1606 = vpop.f32.mrb[0].mxu0
      %v1607 = vadd.f32 0.0, %v1606
      %v1608 = vpop.f32.mrb[0].mxu0
      %1609 = vmatprep.mubr.f32.mxu0 0.0
      %1610 = vmatmul.mubr.f32.gmra.mrb[0].mxu0 %v1391
      %v1611 = vpop.f32.mrb[0].mxu0
      %v1612 = vadd.f32 0.0, %v1611
      %v1613 = vpop.f32.mrb[0].mxu0
      %1614 = vmatprep.mubr.f32.mxu0 0.0
      %1615 = vmatmul.mubr.f32.gmra.mrb[0].mxu0 %v1394
      %v1616 = vpop.f32.mrb[0].mxu0
      %v1617 = vadd.f32 0.0, %v1616
      %v1618 = vpop.f32.mrb[0].mxu0
      %1619 = vmatprep.mubr.f32.mxu0 0.0
      %1620 = vmatmul.mubr.f32.gmra.mrb[0].mxu0 %v1397
      %v1621 = vpop.f32.mrb[0].mxu0
      %v1622 = vadd.f32 0.0, %v1621
      %v1623 = vpop.f32.mrb[0].mxu0
      %1624 = vmatprep.mubr.f32.mxu0 0.0
      %1625 = vmatmul.mubr.f32.gmra.mrb[0].mxu0 %v1400
      %v1626 = vpop.f32.mrb[0].mxu0
      %v1627 = vadd.f32 0.0, %v1626
      %v1628 = vpop.f32.mrb[0].mxu0
      %1629 = vdwg.mxu0
      %v1630 = vadd.f32 %v1237, %v1472
      %v1631 = vadd.f32 %v1238, %v1477
      %v1632 = vadd.f32 %v1239, %v1482
      %v1633 = vadd.f32 %v1240, %v1487
      %v1634 = vadd.f32 %v1241, %v1492
      %v1635 = vadd.f32 %v1242, %v1497
      %v1636 = vadd.f32 %v1243, %v1502
      %v1637 = vadd.f32 %v1244, %v1507
      %v1638 = vadd.f32 %v1245, %v1512
      %v1639 = vadd.f32 %v1246, %v1517
      %v1640 = vadd.f32 %v1247, %v1522
      %v1641 = vadd.f32 %v1248, %v1527
      %v1642 = vadd.f32 %v1249, %v1532
      %v1643 = vadd.f32 %v1250, %v1537
      %v1644 = vadd.f32 %v1251, %v1542
      %v1645 = vadd.f32 %v1252, %v1547
      %v1646 = vadd.f32 %v1253, %v1552
      %v1647 = vadd.f32 %v1254, %v1557
      %v1648 = vadd.f32 %v1255, %v1562
      %v1649 = vadd.f32 %v1256, %v1567
      %v1650 = vadd.f32 %v1257, %v1572
      %v1651 = vadd.f32 %v1258, %v1577
      %v1652 = vadd.f32 %v1259, %v1582
      %v1653 = vadd.f32 %v1260, %v1587
      %v1654 = vadd.f32 %v1261, %v1592
      %v1655 = vadd.f32 %v1262, %v1597
      %v1656 = vadd.f32 %v1263, %v1602
      %v1657 = vadd.f32 %v1264, %v1607
      %v1658 = vadd.f32 %v1265, %v1612
      %v1659 = vadd.f32 %v1266, %v1617
      %v1660 = vadd.f32 %v1267, %v1622
      %v1661 = vadd.f32 %v1268, %v1627
      %1662 = vst.msk [vmem:[%s261] sm:$0xff] %vm283, %v1630
      %1663 = vst.msk [vmem:[%s261 + $0x8] sm:$0xff] %vm283, %v1631
      %1664 = vst.msk [vmem:[%s261 + $0x10] sm:$0xff] %vm283, %v1632
      %1665 = vst.msk [vmem:[%s261 + $0x18] sm:$0xff] %vm283, %v1633
      %1666 = vst.msk [vmem:[%s261 + $0x20] sm:$0xff] %vm283, %v1634
      %1667 = vst.msk [vmem:[%s261 + $0x28] sm:$0xff] %vm283, %v1635
      %1668 = vst.msk [vmem:[%s261 + $0x30] sm:$0xff] %vm283, %v1636
      %1669 = vst.msk [vmem:[%s261 + $0x38] sm:$0xff] %vm283, %v1637
      %1670 = vst.msk [vmem:[%s261 + $0x40] sm:$0xff] %vm283, %v1638
      %1671 = vst.msk [vmem:[%s261 + $0x48] sm:$0xff] %vm283, %v1639
      %1672 = vst.msk [vmem:[%s261 + $0x50] sm:$0xff] %vm283, %v1640
      %1673 = vst.msk [vmem:[%s261 + $0x58] sm:$0xff] %vm283, %v1641
      %1674 = vst.msk [vmem:[%s261 + $0x60] sm:$0xff] %vm283, %v1642
      %1675 = vst.msk [vmem:[%s261 + $0x68] sm:$0xff] %vm283, %v1643
      %1676 = vst.msk [vmem:[%s261 + $0x70] sm:$0xff] %vm283, %v1644
      %1677 = vst.msk [vmem:[%s261 + $0x78] sm:$0xff] %vm283, %v1645
      %1678 = vst.msk [vmem:[%s261 + $0x80] sm:$0xff] %vm283, %v1646
      %1679 = vst.msk [vmem:[%s261 + $0x88] sm:$0xff] %vm283, %v1647
      %1680 = vst.msk [vmem:[%s261 + $0x90] sm:$0xff] %vm283, %v1648
      %1681 = vst.msk [vmem:[%s261 + $0x98] sm:$0xff] %vm283, %v1649
      %1682 = vst.msk [vmem:[%s261 + $0xa0] sm:$0xff] %vm283, %v1650
      %1683 = vst.msk [vmem:[%s261 + $0xa8] sm:$0xff] %vm283, %v1651
      %1684 = vst.msk [vmem:[%s261 + $0xb0] sm:$0xff] %vm283, %v1652
      %1685 = vst.msk [vmem:[%s261 + $0xb8] sm:$0xff] %vm283, %v1653
      %1686 = vst.msk [vmem:[%s261 + $0xc0] sm:$0xff] %vm283, %v1654
      %1687 = vst.msk [vmem:[%s261 + $0xc8] sm:$0xff] %vm283, %v1655
      %1688 = vst.msk [vmem:[%s261 + $0xd0] sm:$0xff] %vm283, %v1656
      %1689 = vst.msk [vmem:[%s261 + $0xd8] sm:$0xff] %vm283, %v1657
      %1690 = vst.msk [vmem:[%s261 + $0xe0] sm:$0xff] %vm283, %v1658
      %1691 = vst.msk [vmem:[%s261 + $0xe8] sm:$0xff] %vm283, %v1659
      %1692 = vst.msk [vmem:[%s261 + $0xf0] sm:$0xff] %vm283, %v1660
      %1693 = vst.msk [vmem:[%s261 + $0xf8] sm:$0xff] %vm283, %v1661
      %s1694 = sadd.s32 %s775, 3
      %s1695 = smul.u32 %s1694, 16
      %v1696 = vld [vmem:[%s261] sm:$0xff]
      %v1697 = vld [vmem:[%s261 + $0x8] sm:$0xff]
      %v1698 = vld [vmem:[%s261 + $0x10] sm:$0xff]
      %v1699 = vld [vmem:[%s261 + $0x18] sm:$0xff]
      %v1700 = vld [vmem:[%s261 + $0x20] sm:$0xff]
      %v1701 = vld [vmem:[%s261 + $0x28] sm:$0xff]
      %v1702 = vld [vmem:[%s261 + $0x30] sm:$0xff]
      %v1703 = vld [vmem:[%s261 + $0x38] sm:$0xff]
      %v1704 = vld [vmem:[%s261 + $0x40] sm:$0xff]
      %v1705 = vld [vmem:[%s261 + $0x48] sm:$0xff]
      %v1706 = vld [vmem:[%s261 + $0x50] sm:$0xff]
      %v1707 = vld [vmem:[%s261 + $0x58] sm:$0xff]
      %v1708 = vld [vmem:[%s261 + $0x60] sm:$0xff]
      %v1709 = vld [vmem:[%s261 + $0x68] sm:$0xff]
      %v1710 = vld [vmem:[%s261 + $0x70] sm:$0xff]
      %v1711 = vld [vmem:[%s261 + $0x78] sm:$0xff]
      %v1712 = vld [vmem:[%s261 + $0x80] sm:$0xff]
      %v1713 = vld [vmem:[%s261 + $0x88] sm:$0xff]
      %v1714 = vld [vmem:[%s261 + $0x90] sm:$0xff]
      %v1715 = vld [vmem:[%s261 + $0x98] sm:$0xff]
      %v1716 = vld [vmem:[%s261 + $0xa0] sm:$0xff]
      %v1717 = vld [vmem:[%s261 + $0xa8] sm:$0xff]
      %v1718 = vld [vmem:[%s261 + $0xb0] sm:$0xff]
      %v1719 = vld [vmem:[%s261 + $0xb8] sm:$0xff]
      %v1720 = vld [vmem:[%s261 + $0xc0] sm:$0xff]
      %v1721 = vld [vmem:[%s261 + $0xc8] sm:$0xff]
      %v1722 = vld [vmem:[%s261 + $0xd0] sm:$0xff]
      %v1723 = vld [vmem:[%s261 + $0xd8] sm:$0xff]
      %v1724 = vld [vmem:[%s261 + $0xe0] sm:$0xff]
      %v1725 = vld [vmem:[%s261 + $0xe8] sm:$0xff]
      %v1726 = vld [vmem:[%s261 + $0xf0] sm:$0xff]
      %v1727 = vld [vmem:[%s261 + $0xf8] sm:$0xff]
      %s1728 = scalar_lea.vmem %s254, %s1695
      %v1729 = vld [vmem:[%s1728] sm:$0xff]
      %v1730 = vld [vmem:[%s1728 + $0x8] sm:$0xff]
      %v1731 = vld [vmem:[%s1728 + $0x10] sm:$0xff]
      %v1732 = vld [vmem:[%s1728 + $0x18] sm:$0xff]
      %v1733 = vld [vmem:[%s1728 + $0x20] sm:$0xff]
      %v1734 = vld [vmem:[%s1728 + $0x28] sm:$0xff]
      %v1735 = vld [vmem:[%s1728 + $0x30] sm:$0xff]
      %v1736 = vld [vmem:[%s1728 + $0x38] sm:$0xff]
      %v1737 = vld [vmem:[%s1728 + $0x40] sm:$0xff]
      %v1738 = vld [vmem:[%s1728 + $0x48] sm:$0xff]
      %v1739 = vld [vmem:[%s1728 + $0x50] sm:$0xff]
      %v1740 = vld [vmem:[%s1728 + $0x58] sm:$0xff]
      %v1741 = vld [vmem:[%s1728 + $0x60] sm:$0xff]
      %v1742 = vld [vmem:[%s1728 + $0x68] sm:$0xff]
      %v1743 = vld [vmem:[%s1728 + $0x70] sm:$0xff]
      %v1744 = vld [vmem:[%s1728 + $0x78] sm:$0xff]
      %v1745 = vld [vmem:[%s1728 + $0x80] sm:$0xff]
      %v1746 = vld [vmem:[%s1728 + $0x88] sm:$0xff]
      %v1747 = vld [vmem:[%s1728 + $0x90] sm:$0xff]
      %v1748 = vld [vmem:[%s1728 + $0x98] sm:$0xff]
      %v1749 = vld [vmem:[%s1728 + $0xa0] sm:$0xff]
      %v1750 = vld [vmem:[%s1728 + $0xa8] sm:$0xff]
      %v1751 = vld [vmem:[%s1728 + $0xb0] sm:$0xff]
      %v1752 = vld [vmem:[%s1728 + $0xb8] sm:$0xff]
      %v1753 = vld [vmem:[%s1728 + $0xc0] sm:$0xff]
      %v1754 = vld [vmem:[%s1728 + $0xc8] sm:$0xff]
      %v1755 = vld [vmem:[%s1728 + $0xd0] sm:$0xff]
      %v1756 = vld [vmem:[%s1728 + $0xd8] sm:$0xff]
      %v1757 = vld [vmem:[%s1728 + $0xe0] sm:$0xff]
      %v1758 = vld [vmem:[%s1728 + $0xe8] sm:$0xff]
      %v1759 = vld [vmem:[%s1728 + $0xf0] sm:$0xff]
      %v1760 = vld [vmem:[%s1728 + $0xf8] sm:$0xff]
      %s1761 = scalar_lea.vmem %s1, 72
      %v1762 = vld [vmem:[%s1761] sm:$0xff]
      %v1763 = vld [vmem:[%s1761 + $0x8] sm:$0xff]
      %v1764 = vld [vmem:[%s1761 + $0x10] sm:$0xf]
      %v1766 = vsel %vm385, %v1729, 0
      %v1769 = vsel %vm385, %v1730, 0
      %v1772 = vsel %vm385, %v1731, 0
      %v1775 = vsel %vm385, %v1732, 0
      %v1778 = vsel %vm385, %v1733, 0
      %v1781 = vsel %vm385, %v1734, 0
      %v1784 = vsel %vm385, %v1735, 0
      %v1787 = vsel %vm385, %v1736, 0
      %v1790 = vsel %vm385, %v1737, 0
      %v1793 = vsel %vm385, %v1738, 0
      %v1796 = vsel %vm385, %v1739, 0
      %v1799 = vsel %vm385, %v1740, 0
      %v1802 = vsel %vm385, %v1741, 0
      %v1805 = vsel %vm385, %v1742, 0
      %v1808 = vsel %vm385, %v1743, 0
      %v1811 = vsel %vm385, %v1744, 0
      %v1814 = vsel %vm385, %v1745, 0
      %v1817 = vsel %vm385, %v1746, 0
      %v1820 = vsel %vm385, %v1747, 0
      %v1823 = vsel %vm385, %v1748, 0
      %v1826 = vsel %vm385, %v1749, 0
      %v1829 = vsel %vm385, %v1750, 0
      %v1832 = vsel %vm385, %v1751, 0
      %v1835 = vsel %vm385, %v1752, 0
      %v1838 = vsel %vm385, %v1753, 0
      %v1841 = vsel %vm385, %v1754, 0
      %v1844 = vsel %vm385, %v1755, 0
      %v1847 = vsel %vm385, %v1756, 0
      %v1850 = vsel %vm385, %v1757, 0
      %v1853 = vsel %vm385, %v1758, 0
      %v1856 = vsel %vm385, %v1759, 0
      %v1859 = vsel %vm385, %v1760, 0
      %v1862 = vsel %vm482, %v1764, 0
      %1864 = vmatprep.subr.mxu0 0.0
      %1865 = vmatpush1.msra.mxu0 %v1762
      %1866 = vmatprep.subr.mxu0 0.0
      %1867 = vmatpush1.msra.mxu0 %v1763
      %1868 = vmatprep.subr.mxu0 0.0
      %1869 = vmatpush1.msra.mxu0 %v1862
      %1870 = vmatprep.subr.mxu0 0.0
      %1871 = vmatpush1.msra.mxu0 0.0
      %1872 = vmatprep.subr.mxu0 0.0
      %1873 = vmatpush1.msra.mxu0 0.0
      %1874 = vmatprep.subr.mxu0 0.0
      %1875 = vmatpush1.msra.mxu0 0.0
      %1876 = vmatprep.subr.mxu0 0.0
      %1877 = vmatpush1.msra.mxu0 0.0
      %1878 = vmatprep.subr.mxu0 0.0
      %1879 = vmatpush1.msra.mxu0 0.0
      %1880 = vmatprep.subr.mxu0 0.0
      %1881 = vmatpush1.msra.mxu0 0.0
      %1882 = vmatprep.subr.mxu0 0.0
      %1883 = vmatpush1.msra.mxu0 0.0
      %1884 = vmatprep.subr.mxu0 0.0
      %1885 = vmatpush1.msra.mxu0 0.0
      %1886 = vmatprep.subr.mxu0 0.0
      %1887 = vmatpush1.msra.mxu0 0.0
      %1888 = vmatprep.subr.mxu0 0.0
      %1889 = vmatpush1.msra.mxu0 0.0
      %1890 = vmatprep.subr.mxu0 0.0
      %1891 = vmatpush1.msra.mxu0 0.0
      %1892 = vmatprep.subr.mxu0 0.0
      %1893 = vmatpush1.msra.mxu0 0.0
      %1894 = vmatprep.subr.mxu0 0.0
      %1895 = vmatpush1.msra.mxu0 0.0
      %1896 = vmatprep.subr.mxu0 0.0
      %1897 = vmatpush1.msra.mxu0 0.0
      %1898 = vmatprep.subr.mxu0 0.0
      %1899 = vmatpush1.msra.mxu0 0.0
      %1900 = vmatprep.subr.mxu0 0.0
      %1901 = vmatpush1.msra.mxu0 0.0
      %1902 = vmatprep.subr.mxu0 0.0
      %1903 = vmatpush1.msra.mxu0 0.0
      %1904 = vmatprep.subr.mxu0 0.0
      %1905 = vmatpush1.msra.mxu0 0.0
      %1906 = vmatprep.subr.mxu0 0.0
      %1907 = vmatpush1.msra.mxu0 0.0
      %1908 = vmatprep.subr.mxu0 0.0
      %1909 = vmatpush1.msra.mxu0 0.0
      %1910 = vmatprep.subr.mxu0 0.0
      %1911 = vmatpush1.msra.mxu0 0.0
      %1912 = vmatprep.subr.mxu0 0.0
      %1913 = vmatpush1.msra.mxu0 0.0
      %1914 = vmatprep.subr.mxu0 0.0
      %1915 = vmatpush1.msra.mxu0 0.0
      %1916 = vmatprep.subr.mxu0 0.0
      %1917 = vmatpush1.msra.mxu0 0.0
      %1918 = vmatprep.subr.mxu0 0.0
      %1919 = vmatpush1.msra.mxu0 0.0
      %1920 = vmatprep.subr.mxu0 0.0
      %1921 = vmatpush1.msra.mxu0 0.0
      %1922 = vmatprep.subr.mxu0 0.0
      %1923 = vmatpush1.msra.mxu0 0.0
      %1924 = vmatprep.subr.mxu0 0.0
      %1925 = vmatpush1.msra.mxu0 0.0
      %1926 = vmatprep.subr.mxu0 0.0
      %1927 = vmatpush1.msra.mxu0 0.0
      %1928 = vmatprep.mubr.f32.mxu0 0.0
      %1929 = vmatmul.mubr.f32.gmra.mrb[0].mxu0 %v1766
      %v1930 = vpop.f32.mrb[0].mxu0
      %v1931 = vadd.f32 0.0, %v1930
      %v1932 = vpop.f32.mrb[0].mxu0
      %1933 = vmatprep.mubr.f32.mxu0 0.0
      %1934 = vmatmul.mubr.f32.gmra.mrb[0].mxu0 %v1769
      %v1935 = vpop.f32.mrb[0].mxu0
      %v1936 = vadd.f32 0.0, %v1935
      %v1937 = vpop.f32.mrb[0].mxu0
      %1938 = vmatprep.mubr.f32.mxu0 0.0
      %1939 = vmatmul.mubr.f32.gmra.mrb[0].mxu0 %v1772
      %v1940 = vpop.f32.mrb[0].mxu0
      %v1941 = vadd.f32 0.0, %v1940
      %v1942 = vpop.f32.mrb[0].mxu0
      %1943 = vmatprep.mubr.f32.mxu0 0.0
      %1944 = vmatmul.mubr.f32.gmra.mrb[0].mxu0 %v1775
      %v1945 = vpop.f32.mrb[0].mxu0
      %v1946 = vadd.f32 0.0, %v1945
      %v1947 = vpop.f32.mrb[0].mxu0
      %1948 = vmatprep.mubr.f32.mxu0 0.0
      %1949 = vmatmul.mubr.f32.gmra.mrb[0].mxu0 %v1778
      %v1950 = vpop.f32.mrb[0].mxu0
      %v1951 = vadd.f32 0.0, %v1950
      %v1952 = vpop.f32.mrb[0].mxu0
      %1953 = vmatprep.mubr.f32.mxu0 0.0
      %1954 = vmatmul.mubr.f32.gmra.mrb[0].mxu0 %v1781
      %v1955 = vpop.f32.mrb[0].mxu0
      %v1956 = vadd.f32 0.0, %v1955
      %v1957 = vpop.f32.mrb[0].mxu0
      %1958 = vmatprep.mubr.f32.mxu0 0.0
      %1959 = vmatmul.mubr.f32.gmra.mrb[0].mxu0 %v1784
      %v1960 = vpop.f32.mrb[0].mxu0
      %v1961 = vadd.f32 0.0, %v1960
      %v1962 = vpop.f32.mrb[0].mxu0
      %1963 = vmatprep.mubr.f32.mxu0 0.0
      %1964 = vmatmul.mubr.f32.gmra.mrb[0].mxu0 %v1787
      %v1965 = vpop.f32.mrb[0].mxu0
      %v1966 = vadd.f32 0.0, %v1965
      %v1967 = vpop.f32.mrb[0].mxu0
      %1968 = vmatprep.mubr.f32.mxu0 0.0
      %1969 = vmatmul.mubr.f32.gmra.mrb[0].mxu0 %v1790
      %v1970 = vpop.f32.mrb[0].mxu0
      %v1971 = vadd.f32 0.0, %v1970
      %v1972 = vpop.f32.mrb[0].mxu0
      %1973 = vmatprep.mubr.f32.mxu0 0.0
      %1974 = vmatmul.mubr.f32.gmra.mrb[0].mxu0 %v1793
      %v1975 = vpop.f32.mrb[0].mxu0
      %v1976 = vadd.f32 0.0, %v1975
      %v1977 = vpop.f32.mrb[0].mxu0
      %1978 = vmatprep.mubr.f32.mxu0 0.0
      %1979 = vmatmul.mubr.f32.gmra.mrb[0].mxu0 %v1796
      %v1980 = vpop.f32.mrb[0].mxu0
      %v1981 = vadd.f32 0.0, %v1980
      %v1982 = vpop.f32.mrb[0].mxu0
      %1983 = vmatprep.mubr.f32.mxu0 0.0
      %1984 = vmatmul.mubr.f32.gmra.mrb[0].mxu0 %v1799
      %v1985 = vpop.f32.mrb[0].mxu0
      %v1986 = vadd.f32 0.0, %v1985
      %v1987 = vpop.f32.mrb[0].mxu0
      %1988 = vmatprep.mubr.f32.mxu0 0.0
      %1989 = vmatmul.mubr.f32.gmra.mrb[0].mxu0 %v1802
      %v1990 = vpop.f32.mrb[0].mxu0
      %v1991 = vadd.f32 0.0, %v1990
      %v1992 = vpop.f32.mrb[0].mxu0
      %1993 = vmatprep.mubr.f32.mxu0 0.0
      %1994 = vmatmul.mubr.f32.gmra.mrb[0].mxu0 %v1805
      %v1995 = vpop.f32.mrb[0].mxu0
      %v1996 = vadd.f32 0.0, %v1995
      %v1997 = vpop.f32.mrb[0].mxu0
      %1998 = vmatprep.mubr.f32.mxu0 0.0
      %1999 = vmatmul.mubr.f32.gmra.mrb[0].mxu0 %v1808
      %v2000 = vpop.f32.mrb[0].mxu0
      %v2001 = vadd.f32 0.0, %v2000
      %v2002 = vpop.f32.mrb[0].mxu0
      %2003 = vmatprep.mubr.f32.mxu0 0.0
      %2004 = vmatmul.mubr.f32.gmra.mrb[0].mxu0 %v1811
      %v2005 = vpop.f32.mrb[0].mxu0
      %v2006 = vadd.f32 0.0, %v2005
      %v2007 = vpop.f32.mrb[0].mxu0
      %2008 = vmatprep.mubr.f32.mxu0 0.0
      %2009 = vmatmul.mubr.f32.gmra.mrb[0].mxu0 %v1814
      %v2010 = vpop.f32.mrb[0].mxu0
      %v2011 = vadd.f32 0.0, %v2010
      %v2012 = vpop.f32.mrb[0].mxu0
      %2013 = vmatprep.mubr.f32.mxu0 0.0
      %2014 = vmatmul.mubr.f32.gmra.mrb[0].mxu0 %v1817
      %v2015 = vpop.f32.mrb[0].mxu0
      %v2016 = vadd.f32 0.0, %v2015
      %v2017 = vpop.f32.mrb[0].mxu0
      %2018 = vmatprep.mubr.f32.mxu0 0.0
      %2019 = vmatmul.mubr.f32.gmra.mrb[0].mxu0 %v1820
      %v2020 = vpop.f32.mrb[0].mxu0
      %v2021 = vadd.f32 0.0, %v2020
      %v2022 = vpop.f32.mrb[0].mxu0
      %2023 = vmatprep.mubr.f32.mxu0 0.0
      %2024 = vmatmul.mubr.f32.gmra.mrb[0].mxu0 %v1823
      %v2025 = vpop.f32.mrb[0].mxu0
      %v2026 = vadd.f32 0.0, %v2025
      %v2027 = vpop.f32.mrb[0].mxu0
      %2028 = vmatprep.mubr.f32.mxu0 0.0
      %2029 = vmatmul.mubr.f32.gmra.mrb[0].mxu0 %v1826
      %v2030 = vpop.f32.mrb[0].mxu0
      %v2031 = vadd.f32 0.0, %v2030
      %v2032 = vpop.f32.mrb[0].mxu0
      %2033 = vmatprep.mubr.f32.mxu0 0.0
      %2034 = vmatmul.mubr.f32.gmra.mrb[0].mxu0 %v1829
      %v2035 = vpop.f32.mrb[0].mxu0
      %v2036 = vadd.f32 0.0, %v2035
      %v2037 = vpop.f32.mrb[0].mxu0
      %2038 = vmatprep.mubr.f32.mxu0 0.0
      %2039 = vmatmul.mubr.f32.gmra.mrb[0].mxu0 %v1832
      %v2040 = vpop.f32.mrb[0].mxu0
      %v2041 = vadd.f32 0.0, %v2040
      %v2042 = vpop.f32.mrb[0].mxu0
      %2043 = vmatprep.mubr.f32.mxu0 0.0
      %2044 = vmatmul.mubr.f32.gmra.mrb[0].mxu0 %v1835
      %v2045 = vpop.f32.mrb[0].mxu0
      %v2046 = vadd.f32 0.0, %v2045
      %v2047 = vpop.f32.mrb[0].mxu0
      %2048 = vmatprep.mubr.f32.mxu0 0.0
      %2049 = vmatmul.mubr.f32.gmra.mrb[0].mxu0 %v1838
      %v2050 = vpop.f32.mrb[0].mxu0
      %v2051 = vadd.f32 0.0, %v2050
      %v2052 = vpop.f32.mrb[0].mxu0
      %2053 = vmatprep.mubr.f32.mxu0 0.0
      %2054 = vmatmul.mubr.f32.gmra.mrb[0].mxu0 %v1841
      %v2055 = vpop.f32.mrb[0].mxu0
      %v2056 = vadd.f32 0.0, %v2055
      %v2057 = vpop.f32.mrb[0].mxu0
      %2058 = vmatprep.mubr.f32.mxu0 0.0
      %2059 = vmatmul.mubr.f32.gmra.mrb[0].mxu0 %v1844
      %v2060 = vpop.f32.mrb[0].mxu0
      %v2061 = vadd.f32 0.0, %v2060
      %v2062 = vpop.f32.mrb[0].mxu0
      %2063 = vmatprep.mubr.f32.mxu0 0.0
      %2064 = vmatmul.mubr.f32.gmra.mrb[0].mxu0 %v1847
      %v2065 = vpop.f32.mrb[0].mxu0
      %v2066 = vadd.f32 0.0, %v2065
      %v2067 = vpop.f32.mrb[0].mxu0
      %2068 = vmatprep.mubr.f32.mxu0 0.0
      %2069 = vmatmul.mubr.f32.gmra.mrb[0].mxu0 %v1850
      %v2070 = vpop.f32.mrb[0].mxu0
      %v2071 = vadd.f32 0.0, %v2070
      %v2072 = vpop.f32.mrb[0].mxu0
      %2073 = vmatprep.mubr.f32.mxu0 0.0
      %2074 = vmatmul.mubr.f32.gmra.mrb[0].mxu0 %v1853
      %v2075 = vpop.f32.mrb[0].mxu0
      %v2076 = vadd.f32 0.0, %v2075
      %v2077 = vpop.f32.mrb[0].mxu0
      %2078 = vmatprep.mubr.f32.mxu0 0.0
      %2079 = vmatmul.mubr.f32.gmra.mrb[0].mxu0 %v1856
      %v2080 = vpop.f32.mrb[0].mxu0
      %v2081 = vadd.f32 0.0, %v2080
      %v2082 = vpop.f32.mrb[0].mxu0
      %2083 = vmatprep.mubr.f32.mxu0 0.0
      %2084 = vmatmul.mubr.f32.gmra.mrb[0].mxu0 %v1859
      %v2085 = vpop.f32.mrb[0].mxu0
      %v2086 = vadd.f32 0.0, %v2085
      %v2087 = vpop.f32.mrb[0].mxu0
      %2088 = vdwg.mxu0
      %v2089 = vadd.f32 %v1696, %v1931
      %v2090 = vadd.f32 %v1697, %v1936
      %v2091 = vadd.f32 %v1698, %v1941
      %v2092 = vadd.f32 %v1699, %v1946
      %v2093 = vadd.f32 %v1700, %v1951
      %v2094 = vadd.f32 %v1701, %v1956
      %v2095 = vadd.f32 %v1702, %v1961
      %v2096 = vadd.f32 %v1703, %v1966
      %v2097 = vadd.f32 %v1704, %v1971
      %v2098 = vadd.f32 %v1705, %v1976
      %v2099 = vadd.f32 %v1706, %v1981
      %v2100 = vadd.f32 %v1707, %v1986
      %v2101 = vadd.f32 %v1708, %v1991
      %v2102 = vadd.f32 %v1709, %v1996
      %v2103 = vadd.f32 %v1710, %v2001
      %v2104 = vadd.f32 %v1711, %v2006
      %v2105 = vadd.f32 %v1712, %v2011
      %v2106 = vadd.f32 %v1713, %v2016
      %v2107 = vadd.f32 %v1714, %v2021
      %v2108 = vadd.f32 %v1715, %v2026
      %v2109 = vadd.f32 %v1716, %v2031
      %v2110 = vadd.f32 %v1717, %v2036
      %v2111 = vadd.f32 %v1718, %v2041
      %v2112 = vadd.f32 %v1719, %v2046
      %v2113 = vadd.f32 %v1720, %v2051
      %v2114 = vadd.f32 %v1721, %v2056
      %v2115 = vadd.f32 %v1722, %v2061
      %v2116 = vadd.f32 %v1723, %v2066
      %v2117 = vadd.f32 %v1724, %v2071
      %v2118 = vadd.f32 %v1725, %v2076
      %v2119 = vadd.f32 %v1726, %v2081
      %v2120 = vadd.f32 %v1727, %v2086
      %2121 = vst.msk [vmem:[%s261] sm:$0xff] %vm283, %v2089
      %2122 = vst.msk [vmem:[%s261 + $0x8] sm:$0xff] %vm283, %v2090
      %2123 = vst.msk [vmem:[%s261 + $0x10] sm:$0xff] %vm283, %v2091
      %2124 = vst.msk [vmem:[%s261 + $0x18] sm:$0xff] %vm283, %v2092
      %2125 = vst.msk [vmem:[%s261 + $0x20] sm:$0xff] %vm283, %v2093
      %2126 = vst.msk [vmem:[%s261 + $0x28] sm:$0xff] %vm283, %v2094
      %2127 = vst.msk [vmem:[%s261 + $0x30] sm:$0xff] %vm283, %v2095
      %2128 = vst.msk [vmem:[%s261 + $0x38] sm:$0xff] %vm283, %v2096
      %2129 = vst.msk [vmem:[%s261 + $0x40] sm:$0xff] %vm283, %v2097
      %2130 = vst.msk [vmem:[%s261 + $0x48] sm:$0xff] %vm283, %v2098
      %2131 = vst.msk [vmem:[%s261 + $0x50] sm:$0xff] %vm283, %v2099
      %2132 = vst.msk [vmem:[%s261 + $0x58] sm:$0xff] %vm283, %v2100
      %2133 = vst.msk [vmem:[%s261 + $0x60] sm:$0xff] %vm283, %v2101
      %2134 = vst.msk [vmem:[%s261 + $0x68] sm:$0xff] %vm283, %v2102
      %2135 = vst.msk [vmem:[%s261 + $0x70] sm:$0xff] %vm283, %v2103
      %2136 = vst.msk [vmem:[%s261 + $0x78] sm:$0xff] %vm283, %v2104
      %2137 = vst.msk [vmem:[%s261 + $0x80] sm:$0xff] %vm283, %v2105
      %2138 = vst.msk [vmem:[%s261 + $0x88] sm:$0xff] %vm283, %v2106
      %2139 = vst.msk [vmem:[%s261 + $0x90] sm:$0xff] %vm283, %v2107
      %2140 = vst.msk [vmem:[%s261 + $0x98] sm:$0xff] %vm283, %v2108
      %2141 = vst.msk [vmem:[%s261 + $0xa0] sm:$0xff] %vm283, %v2109
      %2142 = vst.msk [vmem:[%s261 + $0xa8] sm:$0xff] %vm283, %v2110
      %2143 = vst.msk [vmem:[%s261 + $0xb0] sm:$0xff] %vm283, %v2111
      %2144 = vst.msk [vmem:[%s261 + $0xb8] sm:$0xff] %vm283, %v2112
      %2145 = vst.msk [vmem:[%s261 + $0xc0] sm:$0xff] %vm283, %v2113
      %2146 = vst.msk [vmem:[%s261 + $0xc8] sm:$0xff] %vm283, %v2114
      %2147 = vst.msk [vmem:[%s261 + $0xd0] sm:$0xff] %vm283, %v2115
      %2148 = vst.msk [vmem:[%s261 + $0xd8] sm:$0xff] %vm283, %v2116
      %2149 = vst.msk [vmem:[%s261 + $0xe0] sm:$0xff] %vm283, %v2117
      %2150 = vst.msk [vmem:[%s261 + $0xe8] sm:$0xff] %vm283, %v2118
      %2151 = vst.msk [vmem:[%s261 + $0xf0] sm:$0xff] %vm283, %v2119
      %2152 = vst.msk [vmem:[%s261 + $0xf8] sm:$0xff] %vm283, %v2120
      %s2153 = sadd.s32 %s775, 4
      %s2154 = smul.u32 %s2153, 16
      %v2155 = vld [vmem:[%s261] sm:$0xff]
      %v2156 = vld [vmem:[%s261 + $0x8] sm:$0xff]
      %v2157 = vld [vmem:[%s261 + $0x10] sm:$0xff]
      %v2158 = vld [vmem:[%s261 + $0x18] sm:$0xff]
      %v2159 = vld [vmem:[%s261 + $0x20] sm:$0xff]
      %v2160 = vld [vmem:[%s261 + $0x28] sm:$0xff]
      %v2161 = vld [vmem:[%s261 + $0x30] sm:$0xff]
      %v2162 = vld [vmem:[%s261 + $0x38] sm:$0xff]
      %v2163 = vld [vmem:[%s261 + $0x40] sm:$0xff]
      %v2164 = vld [vmem:[%s261 + $0x48] sm:$0xff]
      %v2165 = vld [vmem:[%s261 + $0x50] sm:$0xff]
      %v2166 = vld [vmem:[%s261 + $0x58] sm:$0xff]
      %v2167 = vld [vmem:[%s261 + $0x60] sm:$0xff]
      %v2168 = vld [vmem:[%s261 + $0x68] sm:$0xff]
      %v2169 = vld [vmem:[%s261 + $0x70] sm:$0xff]
      %v2170 = vld [vmem:[%s261 + $0x78] sm:$0xff]
      %v2171 = vld [vmem:[%s261 + $0x80] sm:$0xff]
      %v2172 = vld [vmem:[%s261 + $0x88] sm:$0xff]
      %v2173 = vld [vmem:[%s261 + $0x90] sm:$0xff]
      %v2174 = vld [vmem:[%s261 + $0x98] sm:$0xff]
      %v2175 = vld [vmem:[%s261 + $0xa0] sm:$0xff]
      %v2176 = vld [vmem:[%s261 + $0xa8] sm:$0xff]
      %v2177 = vld [vmem:[%s261 + $0xb0] sm:$0xff]
      %v2178 = vld [vmem:[%s261 + $0xb8] sm:$0xff]
      %v2179 = vld [vmem:[%s261 + $0xc0] sm:$0xff]
      %v2180 = vld [vmem:[%s261 + $0xc8] sm:$0xff]
      %v2181 = vld [vmem:[%s261 + $0xd0] sm:$0xff]
      %v2182 = vld [vmem:[%s261 + $0xd8] sm:$0xff]
      %v2183 = vld [vmem:[%s261 + $0xe0] sm:$0xff]
      %v2184 = vld [vmem:[%s261 + $0xe8] sm:$0xff]
      %v2185 = vld [vmem:[%s261 + $0xf0] sm:$0xff]
      %v2186 = vld [vmem:[%s261 + $0xf8] sm:$0xff]
      %s2187 = scalar_lea.vmem %s254, %s2154
      %v2188 = vld [vmem:[%s2187] sm:$0xff]
      %v2189 = vld [vmem:[%s2187 + $0x8] sm:$0xff]
      %v2190 = vld [vmem:[%s2187 + $0x10] sm:$0xff]
      %v2191 = vld [vmem:[%s2187 + $0x18] sm:$0xff]
      %v2192 = vld [vmem:[%s2187 + $0x20] sm:$0xff]
      %v2193 = vld [vmem:[%s2187 + $0x28] sm:$0xff]
      %v2194 = vld [vmem:[%s2187 + $0x30] sm:$0xff]
      %v2195 = vld [vmem:[%s2187 + $0x38] sm:$0xff]
      %v2196 = vld [vmem:[%s2187 + $0x40] sm:$0xff]
      %v2197 = vld [vmem:[%s2187 + $0x48] sm:$0xff]
      %v2198 = vld [vmem:[%s2187 + $0x50] sm:$0xff]
      %v2199 = vld [vmem:[%s2187 + $0x58] sm:$0xff]
      %v2200 = vld [vmem:[%s2187 + $0x60] sm:$0xff]
      %v2201 = vld [vmem:[%s2187 + $0x68] sm:$0xff]
      %v2202 = vld [vmem:[%s2187 + $0x70] sm:$0xff]
      %v2203 = vld [vmem:[%s2187 + $0x78] sm:$0xff]
      %v2204 = vld [vmem:[%s2187 + $0x80] sm:$0xff]
      %v2205 = vld [vmem:[%s2187 + $0x88] sm:$0xff]
      %v2206 = vld [vmem:[%s2187 + $0x90] sm:$0xff]
      %v2207 = vld [vmem:[%s2187 + $0x98] sm:$0xff]
      %v2208 = vld [vmem:[%s2187 + $0xa0] sm:$0xff]
      %v2209 = vld [vmem:[%s2187 + $0xa8] sm:$0xff]
      %v2210 = vld [vmem:[%s2187 + $0xb0] sm:$0xff]
      %v2211 = vld [vmem:[%s2187 + $0xb8] sm:$0xff]
      %v2212 = vld [vmem:[%s2187 + $0xc0] sm:$0xff]
      %v2213 = vld [vmem:[%s2187 + $0xc8] sm:$0xff]
      %v2214 = vld [vmem:[%s2187 + $0xd0] sm:$0xff]
      %v2215 = vld [vmem:[%s2187 + $0xd8] sm:$0xff]
      %v2216 = vld [vmem:[%s2187 + $0xe0] sm:$0xff]
      %v2217 = vld [vmem:[%s2187 + $0xe8] sm:$0xff]
      %v2218 = vld [vmem:[%s2187 + $0xf0] sm:$0xff]
      %v2219 = vld [vmem:[%s2187 + $0xf8] sm:$0xff]
      %s2220 = scalar_lea.vmem %s1, 96
      %v2221 = vld [vmem:[%s2220] sm:$0xff]
      %v2222 = vld [vmem:[%s2220 + $0x8] sm:$0xff]
      %v2223 = vld [vmem:[%s2220 + $0x10] sm:$0xf]
      %v2225 = vsel %vm385, %v2188, 0
      %v2228 = vsel %vm385, %v2189, 0
      %v2231 = vsel %vm385, %v2190, 0
      %v2234 = vsel %vm385, %v2191, 0
      %v2237 = vsel %vm385, %v2192, 0
      %v2240 = vsel %vm385, %v2193, 0
      %v2243 = vsel %vm385, %v2194, 0
      %v2246 = vsel %vm385, %v2195, 0
      %v2249 = vsel %vm385, %v2196, 0
      %v2252 = vsel %vm385, %v2197, 0
      %v2255 = vsel %vm385, %v2198, 0
      %v2258 = vsel %vm385, %v2199, 0
      %v2261 = vsel %vm385, %v2200, 0
      %v2264 = vsel %vm385, %v2201, 0
      %v2267 = vsel %vm385, %v2202, 0
      %v2270 = vsel %vm385, %v2203, 0
      %v2273 = vsel %vm385, %v2204, 0
      %v2276 = vsel %vm385, %v2205, 0
      %v2279 = vsel %vm385, %v2206, 0
      %v2282 = vsel %vm385, %v2207, 0
      %v2285 = vsel %vm385, %v2208, 0
      %v2288 = vsel %vm385, %v2209, 0
      %v2291 = vsel %vm385, %v2210, 0
      %v2294 = vsel %vm385, %v2211, 0
      %v2297 = vsel %vm385, %v2212, 0
      %v2300 = vsel %vm385, %v2213, 0
      %v2303 = vsel %vm385, %v2214, 0
      %v2306 = vsel %vm385, %v2215, 0
      %v2309 = vsel %vm385, %v2216, 0
      %v2312 = vsel %vm385, %v2217, 0
      %v2315 = vsel %vm385, %v2218, 0
      %v2318 = vsel %vm385, %v2219, 0
      %v2321 = vsel %vm482, %v2223, 0
      %2323 = vmatprep.subr.mxu0 0.0
      %2324 = vmatpush1.msra.mxu0 %v2221
      %2325 = vmatprep.subr.mxu0 0.0
      %2326 = vmatpush1.msra.mxu0 %v2222
      %2327 = vmatprep.subr.mxu0 0.0
      %2328 = vmatpush1.msra.mxu0 %v2321
      %2329 = vmatprep.subr.mxu0 0.0
      %2330 = vmatpush1.msra.mxu0 0.0
      %2331 = vmatprep.subr.mxu0 0.0
      %2332 = vmatpush1.msra.mxu0 0.0
      %2333 = vmatprep.subr.mxu0 0.0
      %2334 = vmatpush1.msra.mxu0 0.0
      %2335 = vmatprep.subr.mxu0 0.0
      %2336 = vmatpush1.msra.mxu0 0.0
      %2337 = vmatprep.subr.mxu0 0.0
      %2338 = vmatpush1.msra.mxu0 0.0
      %2339 = vmatprep.subr.mxu0 0.0
      %2340 = vmatpush1.msra.mxu0 0.0
      %2341 = vmatprep.subr.mxu0 0.0
      %2342 = vmatpush1.msra.mxu0 0.0
      %2343 = vmatprep.subr.mxu0 0.0
      %2344 = vmatpush1.msra.mxu0 0.0
      %2345 = vmatprep.subr.mxu0 0.0
      %2346 = vmatpush1.msra.mxu0 0.0
      %2347 = vmatprep.subr.mxu0 0.0
      %2348 = vmatpush1.msra.mxu0 0.0
      %2349 = vmatprep.subr.mxu0 0.0
      %2350 = vmatpush1.msra.mxu0 0.0
      %2351 = vmatprep.subr.mxu0 0.0
      %2352 = vmatpush1.msra.mxu0 0.0
      %2353 = vmatprep.subr.mxu0 0.0
      %2354 = vmatpush1.msra.mxu0 0.0
      %2355 = vmatprep.subr.mxu0 0.0
      %2356 = vmatpush1.msra.mxu0 0.0
      %2357 = vmatprep.subr.mxu0 0.0
      %2358 = vmatpush1.msra.mxu0 0.0
      %2359 = vmatprep.subr.mxu0 0.0
      %2360 = vmatpush1.msra.mxu0 0.0
      %2361 = vmatprep.subr.mxu0 0.0
      %2362 = vmatpush1.msra.mxu0 0.0
      %2363 = vmatprep.subr.mxu0 0.0
      %2364 = vmatpush1.msra.mxu0 0.0
      %2365 = vmatprep.subr.mxu0 0.0
      %2366 = vmatpush1.msra.mxu0 0.0
      %2367 = vmatprep.subr.mxu0 0.0
      %2368 = vmatpush1.msra.mxu0 0.0
      %2369 = vmatprep.subr.mxu0 0.0
      %2370 = vmatpush1.msra.mxu0 0.0
      %2371 = vmatprep.subr.mxu0 0.0
      %2372 = vmatpush1.msra.mxu0 0.0
      %2373 = vmatprep.subr.mxu0 0.0
      %2374 = vmatpush1.msra.mxu0 0.0
      %2375 = vmatprep.subr.mxu0 0.0
      %2376 = vmatpush1.msra.mxu0 0.0
      %2377 = vmatprep.subr.mxu0 0.0
      %2378 = vmatpush1.msra.mxu0 0.0
      %2379 = vmatprep.subr.mxu0 0.0
      %2380 = vmatpush1.msra.mxu0 0.0
      %2381 = vmatprep.subr.mxu0 0.0
      %2382 = vmatpush1.msra.mxu0 0.0
      %2383 = vmatprep.subr.mxu0 0.0
      %2384 = vmatpush1.msra.mxu0 0.0
      %2385 = vmatprep.subr.mxu0 0.0
      %2386 = vmatpush1.msra.mxu0 0.0
      %2387 = vmatprep.mubr.f32.mxu0 0.0
      %2388 = vmatmul.mubr.f32.gmra.mrb[0].mxu0 %v2225
      %v2389 = vpop.f32.mrb[0].mxu0
      %v2390 = vadd.f32 0.0, %v2389
      %v2391 = vpop.f32.mrb[0].mxu0
      %2392 = vmatprep.mubr.f32.mxu0 0.0
      %2393 = vmatmul.mubr.f32.gmra.mrb[0].mxu0 %v2228
      %v2394 = vpop.f32.mrb[0].mxu0
      %v2395 = vadd.f32 0.0, %v2394
      %v2396 = vpop.f32.mrb[0].mxu0
      %2397 = vmatprep.mubr.f32.mxu0 0.0
      %2398 = vmatmul.mubr.f32.gmra.mrb[0].mxu0 %v2231
      %v2399 = vpop.f32.mrb[0].mxu0
      %v2400 = vadd.f32 0.0, %v2399
      %v2401 = vpop.f32.mrb[0].mxu0
      %2402 = vmatprep.mubr.f32.mxu0 0.0
      %2403 = vmatmul.mubr.f32.gmra.mrb[0].mxu0 %v2234
      %v2404 = vpop.f32.mrb[0].mxu0
      %v2405 = vadd.f32 0.0, %v2404
      %v2406 = vpop.f32.mrb[0].mxu0
      %2407 = vmatprep.mubr.f32.mxu0 0.0
      %2408 = vmatmul.mubr.f32.gmra.mrb[0].mxu0 %v2237
      %v2409 = vpop.f32.mrb[0].mxu0
      %v2410 = vadd.f32 0.0, %v2409
      %v2411 = vpop.f32.mrb[0].mxu0
      %2412 = vmatprep.mubr.f32.mxu0 0.0
      %2413 = vmatmul.mubr.f32.gmra.mrb[0].mxu0 %v2240
      %v2414 = vpop.f32.mrb[0].mxu0
      %v2415 = vadd.f32 0.0, %v2414
      %v2416 = vpop.f32.mrb[0].mxu0
      %2417 = vmatprep.mubr.f32.mxu0 0.0
      %2418 = vmatmul.mubr.f32.gmra.mrb[0].mxu0 %v2243
      %v2419 = vpop.f32.mrb[0].mxu0
      %v2420 = vadd.f32 0.0, %v2419
      %v2421 = vpop.f32.mrb[0].mxu0
      %2422 = vmatprep.mubr.f32.mxu0 0.0
      %2423 = vmatmul.mubr.f32.gmra.mrb[0].mxu0 %v2246
      %v2424 = vpop.f32.mrb[0].mxu0
      %v2425 = vadd.f32 0.0, %v2424
      %v2426 = vpop.f32.mrb[0].mxu0
      %2427 = vmatprep.mubr.f32.mxu0 0.0
      %2428 = vmatmul.mubr.f32.gmra.mrb[0].mxu0 %v2249
      %v2429 = vpop.f32.mrb[0].mxu0
      %v2430 = vadd.f32 0.0, %v2429
      %v2431 = vpop.f32.mrb[0].mxu0
      %2432 = vmatprep.mubr.f32.mxu0 0.0
      %2433 = vmatmul.mubr.f32.gmra.mrb[0].mxu0 %v2252
      %v2434 = vpop.f32.mrb[0].mxu0
      %v2435 = vadd.f32 0.0, %v2434
      %v2436 = vpop.f32.mrb[0].mxu0
      %2437 = vmatprep.mubr.f32.mxu0 0.0
      %2438 = vmatmul.mubr.f32.gmra.mrb[0].mxu0 %v2255
      %v2439 = vpop.f32.mrb[0].mxu0
      %v2440 = vadd.f32 0.0, %v2439
      %v2441 = vpop.f32.mrb[0].mxu0
      %2442 = vmatprep.mubr.f32.mxu0 0.0
      %2443 = vmatmul.mubr.f32.gmra.mrb[0].mxu0 %v2258
      %v2444 = vpop.f32.mrb[0].mxu0
      %v2445 = vadd.f32 0.0, %v2444
      %v2446 = vpop.f32.mrb[0].mxu0
      %2447 = vmatprep.mubr.f32.mxu0 0.0
      %2448 = vmatmul.mubr.f32.gmra.mrb[0].mxu0 %v2261
      %v2449 = vpop.f32.mrb[0].mxu0
      %v2450 = vadd.f32 0.0, %v2449
      %v2451 = vpop.f32.mrb[0].mxu0
      %2452 = vmatprep.mubr.f32.mxu0 0.0
      %2453 = vmatmul.mubr.f32.gmra.mrb[0].mxu0 %v2264
      %v2454 = vpop.f32.mrb[0].mxu0
      %v2455 = vadd.f32 0.0, %v2454
      %v2456 = vpop.f32.mrb[0].mxu0
      %2457 = vmatprep.mubr.f32.mxu0 0.0
      %2458 = vmatmul.mubr.f32.gmra.mrb[0].mxu0 %v2267
      %v2459 = vpop.f32.mrb[0].mxu0
      %v2460 = vadd.f32 0.0, %v2459
      %v2461 = vpop.f32.mrb[0].mxu0
      %2462 = vmatprep.mubr.f32.mxu0 0.0
      %2463 = vmatmul.mubr.f32.gmra.mrb[0].mxu0 %v2270
      %v2464 = vpop.f32.mrb[0].mxu0
      %v2465 = vadd.f32 0.0, %v2464
      %v2466 = vpop.f32.mrb[0].mxu0
      %2467 = vmatprep.mubr.f32.mxu0 0.0
      %2468 = vmatmul.mubr.f32.gmra.mrb[0].mxu0 %v2273
      %v2469 = vpop.f32.mrb[0].mxu0
      %v2470 = vadd.f32 0.0, %v2469
      %v2471 = vpop.f32.mrb[0].mxu0
      %2472 = vmatprep.mubr.f32.mxu0 0.0
      %2473 = vmatmul.mubr.f32.gmra.mrb[0].mxu0 %v2276
      %v2474 = vpop.f32.mrb[0].mxu0
      %v2475 = vadd.f32 0.0, %v2474
      %v2476 = vpop.f32.mrb[0].mxu0
      %2477 = vmatprep.mubr.f32.mxu0 0.0
      %2478 = vmatmul.mubr.f32.gmra.mrb[0].mxu0 %v2279
      %v2479 = vpop.f32.mrb[0].mxu0
      %v2480 = vadd.f32 0.0, %v2479
      %v2481 = vpop.f32.mrb[0].mxu0
      %2482 = vmatprep.mubr.f32.mxu0 0.0
      %2483 = vmatmul.mubr.f32.gmra.mrb[0].mxu0 %v2282
      %v2484 = vpop.f32.mrb[0].mxu0
      %v2485 = vadd.f32 0.0, %v2484
      %v2486 = vpop.f32.mrb[0].mxu0
      %2487 = vmatprep.mubr.f32.mxu0 0.0
      %2488 = vmatmul.mubr.f32.gmra.mrb[0].mxu0 %v2285
      %v2489 = vpop.f32.mrb[0].mxu0
      %v2490 = vadd.f32 0.0, %v2489
      %v2491 = vpop.f32.mrb[0].mxu0
      %2492 = vmatprep.mubr.f32.mxu0 0.0
      %2493 = vmatmul.mubr.f32.gmra.mrb[0].mxu0 %v2288
      %v2494 = vpop.f32.mrb[0].mxu0
      %v2495 = vadd.f32 0.0, %v2494
      %v2496 = vpop.f32.mrb[0].mxu0
      %2497 = vmatprep.mubr.f32.mxu0 0.0
      %2498 = vmatmul.mubr.f32.gmra.mrb[0].mxu0 %v2291
      %v2499 = vpop.f32.mrb[0].mxu0
      %v2500 = vadd.f32 0.0, %v2499
      %v2501 = vpop.f32.mrb[0].mxu0
      %2502 = vmatprep.mubr.f32.mxu0 0.0
      %2503 = vmatmul.mubr.f32.gmra.mrb[0].mxu0 %v2294
      %v2504 = vpop.f32.mrb[0].mxu0
      %v2505 = vadd.f32 0.0, %v2504
      %v2506 = vpop.f32.mrb[0].mxu0
      %2507 = vmatprep.mubr.f32.mxu0 0.0
      %2508 = vmatmul.mubr.f32.gmra.mrb[0].mxu0 %v2297
      %v2509 = vpop.f32.mrb[0].mxu0
      %v2510 = vadd.f32 0.0, %v2509
      %v2511 = vpop.f32.mrb[0].mxu0
      %2512 = vmatprep.mubr.f32.mxu0 0.0
      %2513 = vmatmul.mubr.f32.gmra.mrb[0].mxu0 %v2300
      %v2514 = vpop.f32.mrb[0].mxu0
      %v2515 = vadd.f32 0.0, %v2514
      %v2516 = vpop.f32.mrb[0].mxu0
      %2517 = vmatprep.mubr.f32.mxu0 0.0
      %2518 = vmatmul.mubr.f32.gmra.mrb[0].mxu0 %v2303
      %v2519 = vpop.f32.mrb[0].mxu0
      %v2520 = vadd.f32 0.0, %v2519
      %v2521 = vpop.f32.mrb[0].mxu0
      %2522 = vmatprep.mubr.f32.mxu0 0.0
      %2523 = vmatmul.mubr.f32.gmra.mrb[0].mxu0 %v2306
      %v2524 = vpop.f32.mrb[0].mxu0
      %v2525 = vadd.f32 0.0, %v2524
      %v2526 = vpop.f32.mrb[0].mxu0
      %2527 = vmatprep.mubr.f32.mxu0 0.0
      %2528 = vmatmul.mubr.f32.gmra.mrb[0].mxu0 %v2309
      %v2529 = vpop.f32.mrb[0].mxu0
      %v2530 = vadd.f32 0.0, %v2529
      %v2531 = vpop.f32.mrb[0].mxu0
      %2532 = vmatprep.mubr.f32.mxu0 0.0
      %2533 = vmatmul.mubr.f32.gmra.mrb[0].mxu0 %v2312
      %v2534 = vpop.f32.mrb[0].mxu0
      %v2535 = vadd.f32 0.0, %v2534
      %v2536 = vpop.f32.mrb[0].mxu0
      %2537 = vmatprep.mubr.f32.mxu0 0.0
      %2538 = vmatmul.mubr.f32.gmra.mrb[0].mxu0 %v2315
      %v2539 = vpop.f32.mrb[0].mxu0
      %v2540 = vadd.f32 0.0, %v2539
      %v2541 = vpop.f32.mrb[0].mxu0
      %2542 = vmatprep.mubr.f32.mxu0 0.0
      %2543 = vmatmul.mubr.f32.gmra.mrb[0].mxu0 %v2318
      %v2544 = vpop.f32.mrb[0].mxu0
      %v2545 = vadd.f32 0.0, %v2544
      %v2546 = vpop.f32.mrb[0].mxu0
      %2547 = vdwg.mxu0
      %v2548 = vadd.f32 %v2155, %v2390
      %v2549 = vadd.f32 %v2156, %v2395
      %v2550 = vadd.f32 %v2157, %v2400
      %v2551 = vadd.f32 %v2158, %v2405
      %v2552 = vadd.f32 %v2159, %v2410
      %v2553 = vadd.f32 %v2160, %v2415
      %v2554 = vadd.f32 %v2161, %v2420
      %v2555 = vadd.f32 %v2162, %v2425
      %v2556 = vadd.f32 %v2163, %v2430
      %v2557 = vadd.f32 %v2164, %v2435
      %v2558 = vadd.f32 %v2165, %v2440
      %v2559 = vadd.f32 %v2166, %v2445
      %v2560 = vadd.f32 %v2167, %v2450
      %v2561 = vadd.f32 %v2168, %v2455
      %v2562 = vadd.f32 %v2169, %v2460
      %v2563 = vadd.f32 %v2170, %v2465
      %v2564 = vadd.f32 %v2171, %v2470
      %v2565 = vadd.f32 %v2172, %v2475
      %v2566 = vadd.f32 %v2173, %v2480
      %v2567 = vadd.f32 %v2174, %v2485
      %v2568 = vadd.f32 %v2175, %v2490
      %v2569 = vadd.f32 %v2176, %v2495
      %v2570 = vadd.f32 %v2177, %v2500
      %v2571 = vadd.f32 %v2178, %v2505
      %v2572 = vadd.f32 %v2179, %v2510
      %v2573 = vadd.f32 %v2180, %v2515
      %v2574 = vadd.f32 %v2181, %v2520
      %v2575 = vadd.f32 %v2182, %v2525
      %v2576 = vadd.f32 %v2183, %v2530
      %v2577 = vadd.f32 %v2184, %v2535
      %v2578 = vadd.f32 %v2185, %v2540
      %v2579 = vadd.f32 %v2186, %v2545
      %2580 = vst.msk [vmem:[%s261] sm:$0xff] %vm283, %v2548
      %2581 = vst.msk [vmem:[%s261 + $0x8] sm:$0xff] %vm283, %v2549
      %2582 = vst.msk [vmem:[%s261 + $0x10] sm:$0xff] %vm283, %v2550
      %2583 = vst.msk [vmem:[%s261 + $0x18] sm:$0xff] %vm283, %v2551
      %2584 = vst.msk [vmem:[%s261 + $0x20] sm:$0xff] %vm283, %v2552
      %2585 = vst.msk [vmem:[%s261 + $0x28] sm:$0xff] %vm283, %v2553
      %2586 = vst.msk [vmem:[%s261 + $0x30] sm:$0xff] %vm283, %v2554
      %2587 = vst.msk [vmem:[%s261 + $0x38] sm:$0xff] %vm283, %v2555
      %2588 = vst.msk [vmem:[%s261 + $0x40] sm:$0xff] %vm283, %v2556
      %2589 = vst.msk [vmem:[%s261 + $0x48] sm:$0xff] %vm283, %v2557
      %2590 = vst.msk [vmem:[%s261 + $0x50] sm:$0xff] %vm283, %v2558
      %2591 = vst.msk [vmem:[%s261 + $0x58] sm:$0xff] %vm283, %v2559
      %2592 = vst.msk [vmem:[%s261 + $0x60] sm:$0xff] %vm283, %v2560
      %2593 = vst.msk [vmem:[%s261 + $0x68] sm:$0xff] %vm283, %v2561
      %2594 = vst.msk [vmem:[%s261 + $0x70] sm:$0xff] %vm283, %v2562
      %2595 = vst.msk [vmem:[%s261 + $0x78] sm:$0xff] %vm283, %v2563
      %2596 = vst.msk [vmem:[%s261 + $0x80] sm:$0xff] %vm283, %v2564
      %2597 = vst.msk [vmem:[%s261 + $0x88] sm:$0xff] %vm283, %v2565
      %2598 = vst.msk [vmem:[%s261 + $0x90] sm:$0xff] %vm283, %v2566
      %2599 = vst.msk [vmem:[%s261 + $0x98] sm:$0xff] %vm283, %v2567
      %2600 = vst.msk [vmem:[%s261 + $0xa0] sm:$0xff] %vm283, %v2568
      %2601 = vst.msk [vmem:[%s261 + $0xa8] sm:$0xff] %vm283, %v2569
      %2602 = vst.msk [vmem:[%s261 + $0xb0] sm:$0xff] %vm283, %v2570
      %2603 = vst.msk [vmem:[%s261 + $0xb8] sm:$0xff] %vm283, %v2571
      %2604 = vst.msk [vmem:[%s261 + $0xc0] sm:$0xff] %vm283, %v2572
      %2605 = vst.msk [vmem:[%s261 + $0xc8] sm:$0xff] %vm283, %v2573
      %2606 = vst.msk [vmem:[%s261 + $0xd0] sm:$0xff] %vm283, %v2574
      %2607 = vst.msk [vmem:[%s261 + $0xd8] sm:$0xff] %vm283, %v2575
      %2608 = vst.msk [vmem:[%s261 + $0xe0] sm:$0xff] %vm283, %v2576
      %2609 = vst.msk [vmem:[%s261 + $0xe8] sm:$0xff] %vm283, %v2577
      %2610 = vst.msk [vmem:[%s261 + $0xf0] sm:$0xff] %vm283, %v2578
      %2611 = vst.msk [vmem:[%s261 + $0xf8] sm:$0xff] %vm283, %v2579
      %v2612 = vld [vmem:[%s261] sm:$0xff]
      %v2613 = vld [vmem:[%s261 + $0x8] sm:$0xff]
      %v2614 = vld [vmem:[%s261 + $0x10] sm:$0xff]
      %v2615 = vld [vmem:[%s261 + $0x18] sm:$0xff]
      %v2616 = vld [vmem:[%s261 + $0x20] sm:$0xff]
      %v2617 = vld [vmem:[%s261 + $0x28] sm:$0xff]
      %v2618 = vld [vmem:[%s261 + $0x30] sm:$0xff]
      %v2619 = vld [vmem:[%s261 + $0x38] sm:$0xff]
      %v2620 = vld [vmem:[%s261 + $0x40] sm:$0xff]
      %v2621 = vld [vmem:[%s261 + $0x48] sm:$0xff]
      %v2622 = vld [vmem:[%s261 + $0x50] sm:$0xff]
      %v2623 = vld [vmem:[%s261 + $0x58] sm:$0xff]
      %v2624 = vld [vmem:[%s261 + $0x60] sm:$0xff]
      %v2625 = vld [vmem:[%s261 + $0x68] sm:$0xff]
      %v2626 = vld [vmem:[%s261 + $0x70] sm:$0xff]
      %v2627 = vld [vmem:[%s261 + $0x78] sm:$0xff]
      %v2628 = vld [vmem:[%s261 + $0x80] sm:$0xff]
      %v2629 = vld [vmem:[%s261 + $0x88] sm:$0xff]
      %v2630 = vld [vmem:[%s261 + $0x90] sm:$0xff]
      %v2631 = vld [vmem:[%s261 + $0x98] sm:$0xff]
      %v2632 = vld [vmem:[%s261 + $0xa0] sm:$0xff]
      %v2633 = vld [vmem:[%s261 + $0xa8] sm:$0xff]
      %v2634 = vld [vmem:[%s261 + $0xb0] sm:$0xff]
      %v2635 = vld [vmem:[%s261 + $0xb8] sm:$0xff]
      %v2636 = vld [vmem:[%s261 + $0xc0] sm:$0xff]
      %v2637 = vld [vmem:[%s261 + $0xc8] sm:$0xff]
      %v2638 = vld [vmem:[%s261 + $0xd0] sm:$0xff]
      %v2639 = vld [vmem:[%s261 + $0xd8] sm:$0xff]
      %v2640 = vld [vmem:[%s261 + $0xe0] sm:$0xff]
      %v2641 = vld [vmem:[%s261 + $0xe8] sm:$0xff]
      %v2642 = vld [vmem:[%s261 + $0xf0] sm:$0xff]
      %v2643 = vld [vmem:[%s261 + $0xf8] sm:$0xff]
      %v2644 = vsel %vm283, %v2612, 0.0
      %v2645 = vsel %vm283, %v2613, 0.0
      %v2646 = vadd.f32 %v2644, %v2645
      %v2647 = vsel %vm283, %v2614, 0.0
      %v2648 = vadd.f32 %v2646, %v2647
      %v2649 = vsel %vm283, %v2615, 0.0
      %v2650 = vadd.f32 %v2648, %v2649
      %v2651 = vsel %vm283, %v2616, 0.0
      %v2652 = vadd.f32 %v2650, %v2651
      %v2653 = vsel %vm283, %v2617, 0.0
      %v2654 = vadd.f32 %v2652, %v2653
      %v2655 = vsel %vm283, %v2618, 0.0
      %v2656 = vadd.f32 %v2654, %v2655
      %v2657 = vsel %vm283, %v2619, 0.0
      %v2658 = vadd.f32 %v2656, %v2657
      %v2659 = vsel %vm283, %v2620, 0.0
      %v2660 = vadd.f32 %v2658, %v2659
      %v2661 = vsel %vm283, %v2621, 0.0
      %v2662 = vadd.f32 %v2660, %v2661
      %v2663 = vsel %vm283, %v2622, 0.0
      %v2664 = vadd.f32 %v2662, %v2663
      %v2665 = vsel %vm283, %v2623, 0.0
      %v2666 = vadd.f32 %v2664, %v2665
      %v2667 = vsel %vm283, %v2624, 0.0
      %v2668 = vadd.f32 %v2666, %v2667
      %v2669 = vsel %vm283, %v2625, 0.0
      %v2670 = vadd.f32 %v2668, %v2669
      %v2671 = vsel %vm283, %v2626, 0.0
      %v2672 = vadd.f32 %v2670, %v2671
      %v2673 = vsel %vm283, %v2627, 0.0
      %v2674 = vadd.f32 %v2672, %v2673
      %v2675 = vsel %vm283, %v2628, 0.0
      %v2676 = vadd.f32 %v2674, %v2675
      %v2677 = vsel %vm283, %v2629, 0.0
      %v2678 = vadd.f32 %v2676, %v2677
      %v2679 = vsel %vm283, %v2630, 0.0
      %v2680 = vadd.f32 %v2678, %v2679
      %v2681 = vsel %vm283, %v2631, 0.0
      %v2682 = vadd.f32 %v2680, %v2681
      %v2683 = vsel %vm283, %v2632, 0.0
      %v2684 = vadd.f32 %v2682, %v2683
      %v2685 = vsel %vm283, %v2633, 0.0
      %v2686 = vadd.f32 %v2684, %v2685
      %v2687 = vsel %vm283, %v2634, 0.0
      %v2688 = vadd.f32 %v2686, %v2687
      %v2689 = vsel %vm283, %v2635, 0.0
      %v2690 = vadd.f32 %v2688, %v2689
      %v2691 = vsel %vm283, %v2636, 0.0
      %v2692 = vadd.f32 %v2690, %v2691
      %v2693 = vsel %vm283, %v2637, 0.0
      %v2694 = vadd.f32 %v2692, %v2693
      %v2695 = vsel %vm283, %v2638, 0.0
      %v2696 = vadd.f32 %v2694, %v2695
      %v2697 = vsel %vm283, %v2639, 0.0
      %v2698 = vadd.f32 %v2696, %v2697
      %v2699 = vsel %vm283, %v2640, 0.0
      %v2700 = vadd.f32 %v2698, %v2699
      %v2701 = vsel %vm283, %v2641, 0.0
      %v2702 = vadd.f32 %v2700, %v2701
      %v2703 = vsel %vm283, %v2642, 0.0
      %v2704 = vadd.f32 %v2702, %v2703
      %v2705 = vsel %vm283, %v2643, 0.0
      %v2706 = vadd.f32 %v2704, %v2705
      %v2707 = vrot.slane %v2706, 4
      %v2708 = vadd.f32 %v2706, %v2707
      %v2709 = vrot.slane %v2708, 2
      %v2710 = vadd.f32 %v2708, %v2709
      %v2711 = vrot.slane %v2710, 1
      %v2712 = vadd.f32 %v2710, %v2711
      %2713 = vst.msk [vmem:[%s268] sm:$0xff] %vm283, %v2712
      %v2714 = vmul.f32 %v2612, %v2612
      %v2715 = vmul.f32 %v2613, %v2613
      %v2716 = vmul.f32 %v2614, %v2614
      %v2717 = vmul.f32 %v2615, %v2615
      %v2718 = vmul.f32 %v2616, %v2616
      %v2719 = vmul.f32 %v2617, %v2617
      %v2720 = vmul.f32 %v2618, %v2618
      %v2721 = vmul.f32 %v2619, %v2619
      %v2722 = vmul.f32 %v2620, %v2620
      %v2723 = vmul.f32 %v2621, %v2621
      %v2724 = vmul.f32 %v2622, %v2622
      %v2725 = vmul.f32 %v2623, %v2623
      %v2726 = vmul.f32 %v2624, %v2624
      %v2727 = vmul.f32 %v2625, %v2625
      %v2728 = vmul.f32 %v2626, %v2626
      %v2729 = vmul.f32 %v2627, %v2627
      %v2730 = vmul.f32 %v2628, %v2628
      %v2731 = vmul.f32 %v2629, %v2629
      %v2732 = vmul.f32 %v2630, %v2630
      %v2733 = vmul.f32 %v2631, %v2631
      %v2734 = vmul.f32 %v2632, %v2632
      %v2735 = vmul.f32 %v2633, %v2633
      %v2736 = vmul.f32 %v2634, %v2634
      %v2737 = vmul.f32 %v2635, %v2635
      %v2738 = vmul.f32 %v2636, %v2636
      %v2739 = vmul.f32 %v2637, %v2637
      %v2740 = vmul.f32 %v2638, %v2638
      %v2741 = vmul.f32 %v2639, %v2639
      %v2742 = vmul.f32 %v2640, %v2640
      %v2743 = vmul.f32 %v2641, %v2641
      %v2744 = vmul.f32 %v2642, %v2642
      %v2745 = vmul.f32 %v2643, %v2643
      %v2746 = vsel %vm283, %v2714, 0.0
      %v2747 = vsel %vm283, %v2715, 0.0
      %v2748 = vadd.f32 %v2746, %v2747
      %v2749 = vsel %vm283, %v2716, 0.0
      %v2750 = vadd.f32 %v2748, %v2749
      %v2751 = vsel %vm283, %v2717, 0.0
      %v2752 = vadd.f32 %v2750, %v2751
      %v2753 = vsel %vm283, %v2718, 0.0
      %v2754 = vadd.f32 %v2752, %v2753
      %v2755 = vsel %vm283, %v2719, 0.0
      %v2756 = vadd.f32 %v2754, %v2755
      %v2757 = vsel %vm283, %v2720, 0.0
      %v2758 = vadd.f32 %v2756, %v2757
      %v2759 = vsel %vm283, %v2721, 0.0
      %v2760 = vadd.f32 %v2758, %v2759
      %v2761 = vsel %vm283, %v2722, 0.0
      %v2762 = vadd.f32 %v2760, %v2761
      %v2763 = vsel %vm283, %v2723, 0.0
      %v2764 = vadd.f32 %v2762, %v2763
      %v2765 = vsel %vm283, %v2724, 0.0
      %v2766 = vadd.f32 %v2764, %v2765
      %v2767 = vsel %vm283, %v2725, 0.0
      %v2768 = vadd.f32 %v2766, %v2767
      %v2769 = vsel %vm283, %v2726, 0.0
      %v2770 = vadd.f32 %v2768, %v2769
      %v2771 = vsel %vm283, %v2727, 0.0
      %v2772 = vadd.f32 %v2770, %v2771
      %v2773 = vsel %vm283, %v2728, 0.0
      %v2774 = vadd.f32 %v2772, %v2773
      %v2775 = vsel %vm283, %v2729, 0.0
      %v2776 = vadd.f32 %v2774, %v2775
      %v2777 = vsel %vm283, %v2730, 0.0
      %v2778 = vadd.f32 %v2776, %v2777
      %v2779 = vsel %vm283, %v2731, 0.0
      %v2780 = vadd.f32 %v2778, %v2779
      %v2781 = vsel %vm283, %v2732, 0.0
      %v2782 = vadd.f32 %v2780, %v2781
      %v2783 = vsel %vm283, %v2733, 0.0
      %v2784 = vadd.f32 %v2782, %v2783
      %v2785 = vsel %vm283, %v2734, 0.0
      %v2786 = vadd.f32 %v2784, %v2785
      %v2787 = vsel %vm283, %v2735, 0.0
      %v2788 = vadd.f32 %v2786, %v2787
      %v2789 = vsel %vm283, %v2736, 0.0
      %v2790 = vadd.f32 %v2788, %v2789
      %v2791 = vsel %vm283, %v2737, 0.0
      %v2792 = vadd.f32 %v2790, %v2791
      %v2793 = vsel %vm283, %v2738, 0.0
      %v2794 = vadd.f32 %v2792, %v2793
      %v2795 = vsel %vm283, %v2739, 0.0
      %v2796 = vadd.f32 %v2794, %v2795
      %v2797 = vsel %vm283, %v2740, 0.0
      %v2798 = vadd.f32 %v2796, %v2797
      %v2799 = vsel %vm283, %v2741, 0.0
      %v2800 = vadd.f32 %v2798, %v2799
      %v2801 = vsel %vm283, %v2742, 0.0
      %v2802 = vadd.f32 %v2800, %v2801
      %v2803 = vsel %vm283, %v2743, 0.0
      %v2804 = vadd.f32 %v2802, %v2803
      %v2805 = vsel %vm283, %v2744, 0.0
      %v2806 = vadd.f32 %v2804, %v2805
      %v2807 = vsel %vm283, %v2745, 0.0
      %v2808 = vadd.f32 %v2806, %v2807
      %v2809 = vrot.slane %v2808, 4
      %v2810 = vadd.f32 %v2808, %v2809
      %v2811 = vrot.slane %v2810, 2
      %v2812 = vadd.f32 %v2810, %v2811
      %v2813 = vrot.slane %v2812, 1
      %v2814 = vadd.f32 %v2812, %v2813
      %2815 = vst.msk [vmem:[%s274] sm:$0xff] %vm283, %v2814
      %s2816 = sadd.s32 %s21, %s22
      %s2817 = smul.u32 32, %s2816
      %p2818 = scmp.lt.s32.totalorder %s2817, 63
      %s2819 = scalar_select %p2818, %s2817, 63
      %s2820 = smul.addr %s2819, 8
      %s2821 = scalar_lea.vmem %s3, %s2820
      %s2822 = sadd.s32 %s21, %s22
      %p2823 = scmp.lt.s32.totalorder %s2822, 1
      %s2824 = scalar_select %p2823, %s2822, 1
      %s2825 = smul.addr %s2824, 8
      %s2826 = scalar_lea.vmem %s4, %s2825
      %s2827 = sadd.s32 %s21, %s22
      %p2828 = scmp.lt.s32.totalorder %s2827, 1
      %s2829 = scalar_select %p2828, %s2827, 1
      %s2830 = smul.addr %s2829, 8
      %s2831 = scalar_lea.vmem %s5, %s2830
      // Predicated region
      $region33: #{layer0_forward.2} parent=31 // pred_check
        %p2832 = pneg %p117
      $region34: #{layer0_forward.2} parent=31 // pred_check_branch
        %2834 = sbr.rel (%p2832) target = $region36
      $region35: #{layer0_forward.2} parent=31 // pred_region
        %s2835 = sadd.s32 %s21, %s22
        %s2836 = smul.u32 32, %s2835
      $region36: #{layer0_forward.2} parent=31 // pred_fallthru
        _
      // Predicated region
      $region37: #{layer0_forward.2} parent=31 // pred_check
        %p2837 = pneg %p145
      $region38: #{layer0_forward.2} parent=31 // pred_check_branch
        %2839 = sbr.rel (%p2837) target = $region40
      $region39: #{layer0_forward.2} parent=31 // pred_region
        %s2840 = sadd.s32 %s21, %s22
      $region40: #{layer0_forward.2} parent=31 // pred_fallthru
        _
      // Predicated region
      $region41: #{layer0_forward.2} parent=31 // pred_check
        %p2841 = pneg %p173
      $region42: #{layer0_forward.2} parent=31 // pred_check_branch
        %2843 = sbr.rel (%p2841) target = $region44
      $region43: #{layer0_forward.2} parent=31 // pred_region
        %s2844 = sadd.s32 %s21, %s22
      $region44: #{layer0_forward.2} parent=31 // pred_fallthru
        _
    $region32: #{layer0_forward.2} parent=5 // pred_fallthru
      _
    %p2845 = scmp.le.s32.totalorder 2, %s12
    // Predicated region
    $region45: #{layer0_forward.2} parent=5 // pred_check
      %p2846 = pneg %p2845
    $region46: #{layer0_forward.2} parent=5 // pred_check_branch
      %2848 = sbr.rel (%p2846) target = $region48
    $region47: #{layer0_forward.2} parent=5 // pred_region
      %s2849 = ssub.s32 %s12, 2
      // Predicated region
      $region49: #{layer0_forward.2} parent=47 // pred_check
        %p2850 = pneg %p123
      $region50: #{layer0_forward.2} parent=47 // pred_check_branch
        %2852 = sbr.rel (%p2850) target = $region52
      $region51: #{layer0_forward.2} parent=47 // pred_region
        %s2853 = sadd.s32 %s23, %s24
        %s2854 = smul.u32 32, %s2853
        %p2855 = scmp.lt.s32.totalorder %s2854, 63
        %s2856 = scalar_select %p2855, %s2854, 63
        %s2857 = smul.addr %s2856, 8
        %s2858 = scalar_lea.vmem %s3, %s2857
      $region52: #{layer0_forward.2} parent=47 // pred_fallthru
        _
      // Predicated region
      $region53: #{layer0_forward.2} parent=47 // pred_check
        %p2859 = pneg %p151
      $region54: #{layer0_forward.2} parent=47 // pred_check_branch
        %2861 = sbr.rel (%p2859) target = $region56
      $region55: #{layer0_forward.2} parent=47 // pred_region
        %s2862 = sadd.s32 %s23, %s24
        %p2863 = scmp.lt.s32.totalorder %s2862, 1
        %s2864 = scalar_select %p2863, %s2862, 1
        %s2865 = smul.addr %s2864, 8
        %s2866 = scalar_lea.vmem %s4, %s2865
      $region56: #{layer0_forward.2} parent=47 // pred_fallthru
        _
      // Predicated region
      $region57: #{layer0_forward.2} parent=47 // pred_check
        %p2867 = pneg %p179
      $region58: #{layer0_forward.2} parent=47 // pred_check_branch
        %2869 = sbr.rel (%p2867) target = $region60
      $region59: #{layer0_forward.2} parent=47 // pred_region
        %s2870 = sadd.s32 %s23, %s24
        %p2871 = scmp.lt.s32.totalorder %s2870, 1
        %s2872 = scalar_select %p2871, %s2870, 1
        %s2873 = smul.addr %s2872, 8
        %s2874 = scalar_lea.vmem %s5, %s2873
      $region60: #{layer0_forward.2} parent=47 // pred_fallthru
        _
    $region48: #{layer0_forward.2} parent=5 // pred_fallthru
      _
  $region6: #{layer0_forward.2} parent=0 // loop_footer
    %s16 = sadd.s32 1, %s12
  $region7: #{layer0_forward.2} parent=0 // loop_footer_branch
    %11 = sbr.rel target = $region3
  $region8: #{layer0_forward.2} parent=0 // loop_exit
    _

</llo_original>
